<compile_context>
chip_gen: v6e
topology: v6e:2x2x1
jax: 0.10.0
libtpu: 0.0.40
codegen_flags: <defaults>
</compile_context>

<pallas_src>
import functools

import jax
import jax.numpy as jnp
from jax.experimental import pallas as pl
from jax.experimental.pallas import tpu as pltpu

EPS = 1e-5
LANE = 128
_VMEM_LIMIT = 64 * 1024 * 1024


def _round_up(x, m):
    return (x + m - 1) // m * m


def _pick_row_tile(m):
    for t in (512, 256, 128, 64, 32, 16, 8):
        if m % t == 0:
            return t
    return m


# ------------------------------ Pallas kernels ------------------------------ #

def _conv1_stats_kernel(xe_ref, wc_ref, z_ref, stats_ref, *, Ho, Wo, Ap, Cin):
    """conv1(3x3,s=2) + folded 1x1 downsample; accumulate per-channel stats."""
    @pl.when(pl.program_id(0) == 0)
    def _():
        stats_ref[...] = jnp.zeros_like(stats_ref)

    z = jnp.zeros_like(z_ref)
    for dy in range(3):
        for dx in range(3):
            tap = dy * 3 + dx
            blk = (dy % 2) * 2 + (dx % 2)          # parity plane of this tap
            r0 = blk * Ap + dy // 2
            c0 = dx // 2
            t = xe_ref[r0:r0 + Ho, c0:c0 + Wo, :].reshape(Ho * Wo, Cin)
            z = z + jnp.dot(t, wc_ref[tap], preferred_element_type=jnp.float32)

    z_ref[...] = z
    stats_ref[0:1, :] += jnp.sum(z, axis=0, keepdims=True)
    stats_ref[1:2, :] += jnp.sum(z * z, axis=0, keepdims=True)


def _conv2_stats_kernel(z_ref, w2_ref, bn_ref, s1_ref, z2_ref, stats_ref,
                        ypad_ref, *, Ho, Wo, Cp, inv_m):
    """BN1+ReLU (from global sums) + conv2; y1 never leaves VMEM."""
    @pl.when(pl.program_id(0) == 0)
    def _():
        stats_ref[...] = jnp.zeros_like(stats_ref)

    # BN1 with batch statistics (sum / sumsq accumulated in pass 1) + ReLU.
    # NOTE: f32 sums; var clamped >= 0 to guard the E[z^2]-E[z]^2 finalize.
    z1 = z_ref[:, 0:Cp]                                     # (Ho*Wo, Cp)
    mean = s1_ref[0:1, 0:Cp] * inv_m
    var = jnp.maximum(s1_ref[1:2, 0:Cp] * inv_m - mean * mean, 0.0)
    scale = jax.lax.rsqrt(var + EPS) * bn_ref[0:1, :]
    y1 = jnp.maximum((z1 - mean) * scale + bn_ref[1:2, :], 0.0)

    # Zero-padded copy of y1 in VMEM; 3x3/stride-1 patches are shifted slices.
    ypad_ref[...] = jnp.zeros_like(ypad_ref)
    ypad_ref[1:1 + Ho, 1:1 + Wo, :] = y1.reshape(Ho, Wo, Cp)

    z2 = jnp.zeros_like(z2_ref)
    for dy in range(3):
        for dx in range(3):
            t = ypad_ref[dy:dy + Ho, dx:dx + Wo, :].reshape(Ho * Wo, Cp)
            z2 = z2 + jnp.dot(t, w2_ref[dy * 3 + dx],
                              preferred_element_type=jnp.float32)

    z2_ref[...] = z2
    stats_ref[0:1, :] += jnp.sum(z2, axis=0, keepdims=True)
    stats_ref[1:2, :] += jnp.sum(z2 * z2, axis=0, keepdims=True)


def _finalize_kernel(z2_ref, z_ref, s1_ref, s2_ref, bn_ref, o_ref, *, Cp, inv_m):
    """BN2 + BNd (from global sums) + residual add + ReLU, lane-dense output."""
    m2 = s2_ref[0:1, :] * inv_m
    v2 = jnp.maximum(s2_ref[1:2, :] * inv_m - m2 * m2, 0.0)
    y2 = ((z2_ref[...] - m2) * (jax.lax.rsqrt(v2 + EPS) * bn_ref[2:3, :])
          + bn_ref[3:4, :])

    zd = z_ref[:, Cp:2 * Cp]
    md = s1_ref[0:1, Cp:2 * Cp] * inv_m
    vd = jnp.maximum(s1_ref[1:2, Cp:2 * Cp] * inv_m - md * md, 0.0)
    yd = ((zd - md) * (jax.lax.rsqrt(vd + EPS) * bn_ref[4:5, :])
          + bn_ref[5:6, :])

    o_ref[...] = jnp.maximum(y2 + yd, 0.0)


# --------------------------------- wrapper ---------------------------------- #

def _compute_block_impl(x_nchw, params):
    w1, g1, b1, w2, g2, b2, wd, gd, bd = params
    N, Cin, H, W = x_nchw.shape
    Cout = w1.shape[-1]
    assert H % 2 == 0 and W % 2 == 0, "stride-2 block assumes even spatial dims"
    Ho, Wo = H // 2, W // 2
    Ap = Ho + 1                        # parity-plane extent (covers the halo)
    M = N * Ho * Wo
    Cp = _round_up(Cout, LANE)         # lane-dense channel padding
    inv_m = 1.0 / M

    x = jnp.transpose(x_nchw, (0, 2, 3, 1)).astype(jnp.float32)       # NHWC

    # -- glue: spatial pad + parity split (space-to-depth); same bytes as x --
    xp = jnp.pad(x, ((0, 0), (1, 1), (1, 1), (0, 0)))
    planes = [xp[:, pi::2, pj::2, :][:, :Ap, :Ap, :]
              for pi in (0, 1) for pj in (0, 1)]
    xe = jnp.concatenate(planes, axis=1)               # (N, 4*Ap, Ap, Cin)

    # -- glue: pack weights (tap-major) and BN scale/shift (single (8,Cp)) --
    # The 1x1 stride-2 downsample shares the conv1 patch: it is exactly the
    # centre tap (dy=dx=1), folded in as output channels [Cp : Cp+Cout].
    wc = jnp.zeros((9, Cin, 2 * Cp), jnp.float32)
    wc = wc.at[:, :, :Cout].set(w1.reshape(9, Cin, Cout))
    wc = wc.at[4, :, Cp:Cp + Cout].set(wd.reshape(Cin, Cout))
    w2p = jnp.zeros((9, Cp, Cp), jnp.float32)
    w2p = w2p.at[:, :Cout, :Cout].set(w2.reshape(9, Cout, Cout))

    def _pad_c(v, fill):
        return jnp.full((Cp,), fill, jnp.float32).at[:Cout].set(v)

    bn = jnp.stack([_pad_c(g1, 1.0), _pad_c(b1, 0.0),
                    _pad_c(g2, 1.0), _pad_c(b2, 0.0),
                    _pad_c(gd, 1.0), _pad_c(bd, 0.0),
                    jnp.zeros((Cp,), jnp.float32),
                    jnp.zeros((Cp,), jnp.float32)])    # (8, Cp)

    seq = pltpu.CompilerParams(dimension_semantics=("arbitrary",),
                               vmem_limit_bytes=_VMEM_LIMIT)
    par = pltpu.CompilerParams(dimension_semantics=("parallel",),
                               vmem_limit_bytes=_VMEM_LIMIT)

    # ---- pass 1: conv1 + folded downsample, per-channel sum / sumsq ----
    z, s1 = pl.pallas_call(
        functools.partial(_conv1_stats_kernel, Ho=Ho, Wo=Wo, Ap=Ap, Cin=Cin),
        grid=(N,),
        in_specs=[
            pl.BlockSpec((None, 4 * Ap, Ap, Cin), lambda n: (n, 0, 0, 0)),
            pl.BlockSpec((9, Cin, 2 * Cp), lambda n: (0, 0, 0)),
        ],
        out_specs=[
            pl.BlockSpec((None, Ho * Wo, 2 * Cp), lambda n: (n, 0, 0)),
            pl.BlockSpec((8, 2 * Cp), lambda n: (0, 0)),
        ],
        out_shape=[
            jax.ShapeDtypeStruct((N, Ho * Wo, 2 * Cp), jnp.float32),
            jax.ShapeDtypeStruct((8, 2 * Cp), jnp.float32),
        ],
        compiler_params=seq,
    )(xe, wc)

    # ---- pass 2: BN1 + ReLU + conv2 (y1 stays in VMEM), sum / sumsq of z2 ----
    z2, s2 = pl.pallas_call(
        functools.partial(_conv2_stats_kernel, Ho=Ho, Wo=Wo, Cp=Cp, inv_m=inv_m),
        grid=(N,),
        in_specs=[
            pl.BlockSpec((None, Ho * Wo, 2 * Cp), lambda n: (n, 0, 0)),
            pl.BlockSpec((9, Cp, Cp), lambda n: (0, 0, 0)),
            pl.BlockSpec((8, Cp), lambda n: (0, 0)),
            pl.BlockSpec((8, 2 * Cp), lambda n: (0, 0)),
        ],
        out_specs=[
            pl.BlockSpec((None, Ho * Wo, Cp), lambda n: (n, 0, 0)),
            pl.BlockSpec((8, Cp), lambda n: (0, 0)),
        ],
        out_shape=[
            jax.ShapeDtypeStruct((N, Ho * Wo, Cp), jnp.float32),
            jax.ShapeDtypeStruct((8, Cp), jnp.float32),
        ],
        scratch_shapes=[pltpu.VMEM((Ho + 2, Wo + 2, Cp), jnp.float32)],
        compiler_params=seq,
    )(z, w2p, bn, s1)

    # ---- pass 3: BN2 + BNd + residual + ReLU, row-tiled, megacore-parallel ----
    tm = _pick_row_tile(M)
    out_flat = pl.pallas_call(
        functools.partial(_finalize_kernel, Cp=Cp, inv_m=inv_m),
        grid=(M // tm,),
        in_specs=[
            pl.BlockSpec((tm, Cp), lambda i: (i, 0)),
            pl.BlockSpec((tm, 2 * Cp), lambda i: (i, 0)),
            pl.BlockSpec((8, 2 * Cp), lambda i: (0, 0)),
            pl.BlockSpec((8, Cp), lambda i: (0, 0)),
            pl.BlockSpec((8, Cp), lambda i: (0, 0)),
        ],
        out_specs=pl.BlockSpec((tm, Cp), lambda i: (i, 0)),
        out_shape=jax.ShapeDtypeStruct((M, Cp), jnp.float32),
        compiler_params=par,
    )(z2.reshape(M, Cp), z.reshape(M, 2 * Cp), s1, s2, bn)

    out = out_flat[:, :Cout].reshape(N, Ho, Wo, Cout).transpose(0, 3, 1, 2)
    return out


_compute_block_jit = jax.jit(_compute_block_impl)


def compute_block(x_nchw, params, stride):
    # The PyTorch module hard-codes a stride-2 1x1 downsample whenever
    # inchannels != outchannels, so shapes only line up for stride == 2.
    assert stride == 2
    return _compute_block_jit(x_nchw, params)


# ----------------------------- pure-JAX reference --------------------------- #

def reference(x, w1, g1, b1, w2, g2, b2, wd, gd, bd, stride):
    def conv(x, w_hwio, s, p):
        return jax.lax.conv_general_dilated(
            x, w_hwio, (s, s), [(p, p), (p, p)],
            dimension_numbers=("NCHW", "HWIO", "NCHW"))

    def bn(x, g, b):
        m = x.mean(axis=(0, 2, 3), keepdims=True)
        v = ((x - m) ** 2).mean(axis=(0, 2, 3), keepdims=True)
        return ((x - m) * jax.lax.rsqrt(v + EPS) * g.reshape(1, -1, 1, 1)
                + b.reshape(1, -1, 1, 1))

    y = jnp.maximum(bn(conv(x, w1, stride, 1), g1, b1), 0.0)
    y = bn(conv(y, w2, 1, 1), g2, b2)
    sk = bn(conv(x, wd, 2, 0), gd, bd)
    return jnp.maximum(y + sk, 0.0)


# ------------------------------------ main ---------------------------------- #

if __name__ == "__main__":
    N, Cin, Cout, H, W, stride = 2, 4, 8, 16, 16, 2

    key = jax.random.PRNGKey(0)
    k1, k2, k3, kx = jax.random.split(key, 4)
    # Kaiming-normal (fan_out, relu) scale, deterministic.
    w1 = jax.random.normal(k1, (3, 3, Cin, Cout), jnp.float32) * (2.0 / (Cout * 9)) ** 0.5
    w2 = jax.random.normal(k2, (3, 3, Cout, Cout), jnp.float32) * (2.0 / (Cout * 9)) ** 0.5
    wd = jax.random.normal(k3, (1, 1, Cin, Cout), jnp.float32) * (2.0 / (Cout * 1)) ** 0.5
    g1 = jnp.ones((Cout,), jnp.float32); b1 = jnp.zeros((Cout,), jnp.float32)
    g2 = jnp.ones((Cout,), jnp.float32); b2 = jnp.zeros((Cout,), jnp.float32)
    gd = jnp.ones((Cout,), jnp.float32); bd = jnp.zeros((Cout,), jnp.float32)
    params = (w1, g1, b1, w2, g2, b2, wd, gd, bd)

    x = jax.random.normal(kx, (N, Cin, H, W), jnp.float32)

    out = compute_block(x, params, stride)
    out = jax.block_until_ready(out)
    assert out.shape == (N, Cout, H // stride, W // stride)

    ref = jax.block_until_ready(
        reference(x, w1, g1, b1, w2, g2, b2, wd, gd, bd, stride))
    max_err = float(jnp.max(jnp.abs(out - ref)))
    if max_err > 1e-3:
        raise AssertionError(f"mismatch vs reference: max abs err = {max_err}")

    print("KERNEL_OK")
</pallas_src>

<mosaic_0001>
module attributes {stable_mosaic.version = 11 : i64} {
  func.func @_conv1_stats_kernel(%arg0: i32, %arg1: memref<1x36x9x4xf32, #tpu.memory_space<vmem>>, %arg2: memref<9x4x256xf32, #tpu.memory_space<vmem>>, %arg3: memref<1x64x256xf32, #tpu.memory_space<vmem>>, %arg4: memref<8x256xf32, #tpu.memory_space<vmem>>) attributes {dimension_semantics = [#tpu.dimension_semantics<arbitrary>], iteration_bounds = array<i64: 2>, scalar_prefetch = 0 : i64, scratch_operands = 0 : i64, tpu.core_type = #tpu.core_type<tc>, window_params = [{transform_indices = @transform_0, window_bounds = array<i64: 1, 36, 9, 4>}, {pipeline_mode = #tpu.pipeline_mode<synchronous>, transform_indices = @transform_1, window_bounds = array<i64: 9, 4, 256>}, {transform_indices = @transform_2, window_bounds = array<i64: 1, 64, 256>}, {pipeline_mode = #tpu.pipeline_mode<synchronous>, transform_indices = @transform_3, window_bounds = array<i64: 8, 256>}]} {
    %c0_i32 = arith.constant 0 : i32
    %0 = arith.cmpi eq, %arg0, %c0_i32 : i32
    %1 = arith.extui %0 : i1 to i32
    %c0_i32_0 = arith.constant 0 : i32
    %2 = arith.cmpi ne, %1, %c0_i32_0 : i32
    scf.if %2 {
      %cst_73 = arith.constant 0.000000e+00 : f32
      %81 = vector.broadcast %cst_73 : f32 to vector<8x256xf32>
      %c0_74 = arith.constant 0 : index
      %c0_75 = arith.constant 0 : index
      %82 = vector.load %arg4[%c0_74, %c0_75] : memref<8x256xf32, #tpu.memory_space<vmem>>, vector<8x256xf32>
      tpu.vector_store %arg4[%c0_74, %c0_75], %81 {strides = array<i32>} : memref<8x256xf32, #tpu.memory_space<vmem>>, vector<8x256xf32>,
    } else {
    }
    %cst = arith.constant 0.000000e+00 : f32
    %3 = vector.broadcast %cst : f32 to vector<64x256xf32>
    %c0 = arith.constant 0 : index
    %c0_1 = arith.constant 0 : index
    %c0_2 = arith.constant 0 : index
    %c0_3 = arith.constant 0 : index
    %4 = vector.load %arg1[%c0, %c0_1, %c0_2, %c0_3] : memref<1x36x9x4xf32, #tpu.memory_space<vmem>>, vector<1x8x8x4xf32>
    %5 = vector.shape_cast %4 : vector<1x8x8x4xf32> to vector<8x8x4xf32>
    %6 = vector.shape_cast %5 : vector<8x8x4xf32> to vector<64x4xf32>
    %c0_4 = arith.constant 0 : index
    %c0_5 = arith.constant 0 : index
    %c0_6 = arith.constant 0 : index
    %7 = vector.load %arg2[%c0_4, %c0_5, %c0_6] : memref<9x4x256xf32, #tpu.memory_space<vmem>>, vector<1x4x256xf32>
    %8 = vector.shape_cast %7 : vector<1x4x256xf32> to vector<4x256xf32>
    %cst_7 = arith.constant dense<0.000000e+00> : vector<64x256xf32>
    %9 = tpu.matmul %6, %8, %cst_7 {dimension_numbers = #tpu.dot_dimension_numbers<[1], [0], [0], [1], [0, 0, 1, 1], [], []>} : vector<64x4xf32>, vector<4x256xf32>, vector<64x256xf32> -> vector<64x256xf32>
    %10 = arith.addf %3, %9 : vector<64x256xf32>
    %c0_8 = arith.constant 0 : index
    %c9 = arith.constant 9 : index
    %c0_9 = arith.constant 0 : index
    %c0_10 = arith.constant 0 : index
    %11 = vector.load %arg1[%c0_8, %c9, %c0_9, %c0_10] : memref<1x36x9x4xf32, #tpu.memory_space<vmem>>, vector<1x8x8x4xf32>
    %12 = vector.shape_cast %11 : vector<1x8x8x4xf32> to vector<8x8x4xf32>
    %13 = vector.shape_cast %12 : vector<8x8x4xf32> to vector<64x4xf32>
    %c1 = arith.constant 1 : index
    %c0_11 = arith.constant 0 : index
    %c0_12 = arith.constant 0 : index
    %14 = vector.load %arg2[%c1, %c0_11, %c0_12] : memref<9x4x256xf32, #tpu.memory_space<vmem>>, vector<1x4x256xf32>
    %15 = vector.shape_cast %14 : vector<1x4x256xf32> to vector<4x256xf32>
    %cst_13 = arith.constant dense<0.000000e+00> : vector<64x256xf32>
    %16 = tpu.matmul %13, %15, %cst_13 {dimension_numbers = #tpu.dot_dimension_numbers<[1], [0], [0], [1], [0, 0, 1, 1], [], []>} : vector<64x4xf32>, vector<4x256xf32>, vector<64x256xf32> -> vector<64x256xf32>
    %17 = arith.addf %10, %16 : vector<64x256xf32>
    %c0_14 = arith.constant 0 : index
    %c0_15 = arith.constant 0 : index
    %c1_16 = arith.constant 1 : index
    %c0_17 = arith.constant 0 : index
    %18 = vector.load %arg1[%c0_14, %c0_15, %c1_16, %c0_17] : memref<1x36x9x4xf32, #tpu.memory_space<vmem>>, vector<1x8x8x4xf32>
    %19 = vector.shape_cast %18 : vector<1x8x8x4xf32> to vector<8x8x4xf32>
    %20 = vector.shape_cast %19 : vector<8x8x4xf32> to vector<64x4xf32>
    %c2 = arith.constant 2 : index
    %c0_18 = arith.constant 0 : index
    %c0_19 = arith.constant 0 : index
    %21 = vector.load %arg2[%c2, %c0_18, %c0_19] : memref<9x4x256xf32, #tpu.memory_space<vmem>>, vector<1x4x256xf32>
    %22 = vector.shape_cast %21 : vector<1x4x256xf32> to vector<4x256xf32>
    %cst_20 = arith.constant dense<0.000000e+00> : vector<64x256xf32>
    %23 = tpu.matmul %20, %22, %cst_20 {dimension_numbers = #tpu.dot_dimension_numbers<[1], [0], [0], [1], [0, 0, 1, 1], [], []>} : vector<64x4xf32>, vector<4x256xf32>, vector<64x256xf32> -> vector<64x256xf32>
    %24 = arith.addf %17, %23 : vector<64x256xf32>
    %c0_21 = arith.constant 0 : index
    %c18 = arith.constant 18 : index
    %c0_22 = arith.constant 0 : index
    %c0_23 = arith.constant 0 : index
    %25 = vector.load %arg1[%c0_21, %c18, %c0_22, %c0_23] : memref<1x36x9x4xf32, #tpu.memory_space<vmem>>, vector<1x8x8x4xf32>
    %26 = vector.shape_cast %25 : vector<1x8x8x4xf32> to vector<8x8x4xf32>
    %27 = vector.shape_cast %26 : vector<8x8x4xf32> to vector<64x4xf32>
    %c3 = arith.constant 3 : index
    %c0_24 = arith.constant 0 : index
    %c0_25 = arith.constant 0 : index
    %28 = vector.load %arg2[%c3, %c0_24, %c0_25] : memref<9x4x256xf32, #tpu.memory_space<vmem>>, vector<1x4x256xf32>
    %29 = vector.shape_cast %28 : vector<1x4x256xf32> to vector<4x256xf32>
    %cst_26 = arith.constant dense<0.000000e+00> : vector<64x256xf32>
    %30 = tpu.matmul %27, %29, %cst_26 {dimension_numbers = #tpu.dot_dimension_numbers<[1], [0], [0], [1], [0, 0, 1, 1], [], []>} : vector<64x4xf32>, vector<4x256xf32>, vector<64x256xf32> -> vector<64x256xf32>
    %31 = arith.addf %24, %30 : vector<64x256xf32>
    %c0_27 = arith.constant 0 : index
    %c27 = arith.constant 27 : index
    %c0_28 = arith.constant 0 : index
    %c0_29 = arith.constant 0 : index
    %32 = vector.load %arg1[%c0_27, %c27, %c0_28, %c0_29] : memref<1x36x9x4xf32, #tpu.memory_space<vmem>>, vector<1x8x8x4xf32>
    %33 = vector.shape_cast %32 : vector<1x8x8x4xf32> to vector<8x8x4xf32>
    %34 = vector.shape_cast %33 : vector<8x8x4xf32> to vector<64x4xf32>
    %c4 = arith.constant 4 : index
    %c0_30 = arith.constant 0 : index
    %c0_31 = arith.constant 0 : index
    %35 = vector.load %arg2[%c4, %c0_30, %c0_31] : memref<9x4x256xf32, #tpu.memory_space<vmem>>, vector<1x4x256xf32>
    %36 = vector.shape_cast %35 : vector<1x4x256xf32> to vector<4x256xf32>
    %cst_32 = arith.constant dense<0.000000e+00> : vector<64x256xf32>
    %37 = tpu.matmul %34, %36, %cst_32 {dimension_numbers = #tpu.dot_dimension_numbers<[1], [0], [0], [1], [0, 0, 1, 1], [], []>} : vector<64x4xf32>, vector<4x256xf32>, vector<64x256xf32> -> vector<64x256xf32>
    %38 = arith.addf %31, %37 : vector<64x256xf32>
    %c0_33 = arith.constant 0 : index
    %c18_34 = arith.constant 18 : index
    %c1_35 = arith.constant 1 : index
    %c0_36 = arith.constant 0 : index
    %39 = vector.load %arg1[%c0_33, %c18_34, %c1_35, %c0_36] : memref<1x36x9x4xf32, #tpu.memory_space<vmem>>, vector<1x8x8x4xf32>
    %40 = vector.shape_cast %39 : vector<1x8x8x4xf32> to vector<8x8x4xf32>
    %41 = vector.shape_cast %40 : vector<8x8x4xf32> to vector<64x4xf32>
    %c5 = arith.constant 5 : index
    %c0_37 = arith.constant 0 : index
    %c0_38 = arith.constant 0 : index
    %42 = vector.load %arg2[%c5, %c0_37, %c0_38] : memref<9x4x256xf32, #tpu.memory_space<vmem>>, vector<1x4x256xf32>
    %43 = vector.shape_cast %42 : vector<1x4x256xf32> to vector<4x256xf32>
    %cst_39 = arith.constant dense<0.000000e+00> : vector<64x256xf32>
    %44 = tpu.matmul %41, %43, %cst_39 {dimension_numbers = #tpu.dot_dimension_numbers<[1], [0], [0], [1], [0, 0, 1, 1], [], []>} : vector<64x4xf32>, vector<4x256xf32>, vector<64x256xf32> -> vector<64x256xf32>
    %45 = arith.addf %38, %44 : vector<64x256xf32>
    %c0_40 = arith.constant 0 : index
    %c1_41 = arith.constant 1 : index
    %c0_42 = arith.constant 0 : index
    %c0_43 = arith.constant 0 : index
    %46 = vector.load %arg1[%c0_40, %c1_41, %c0_42, %c0_43] : memref<1x36x9x4xf32, #tpu.memory_space<vmem>>, vector<1x8x8x4xf32>
    %47 = vector.shape_cast %46 : vector<1x8x8x4xf32> to vector<8x8x4xf32>
    %48 = vector.shape_cast %47 : vector<8x8x4xf32> to vector<64x4xf32>
    %c6 = arith.constant 6 : index
    %c0_44 = arith.constant 0 : index
    %c0_45 = arith.constant 0 : index
    %49 = vector.load %arg2[%c6, %c0_44, %c0_45] : memref<9x4x256xf32, #tpu.memory_space<vmem>>, vector<1x4x256xf32>
    %50 = vector.shape_cast %49 : vector<1x4x256xf32> to vector<4x256xf32>
    %cst_46 = arith.constant dense<0.000000e+00> : vector<64x256xf32>
    %51 = tpu.matmul %48, %50, %cst_46 {dimension_numbers = #tpu.dot_dimension_numbers<[1], [0], [0], [1], [0, 0, 1, 1], [], []>} : vector<64x4xf32>, vector<4x256xf32>, vector<64x256xf32> -> vector<64x256xf32>
    %52 = arith.addf %45, %51 : vector<64x256xf32>
    %c0_47 = arith.constant 0 : index
    %c10 = arith.constant 10 : index
    %c0_48 = arith.constant 0 : index
    %c0_49 = arith.constant 0 : index
    %53 = vector.load %arg1[%c0_47, %c10, %c0_48, %c0_49] : memref<1x36x9x4xf32, #tpu.memory_space<vmem>>, vector<1x8x8x4xf32>
    %54 = vector.shape_cast %53 : vector<1x8x8x4xf32> to vector<8x8x4xf32>
    %55 = vector.shape_cast %54 : vector<8x8x4xf32> to vector<64x4xf32>
    %c7 = arith.constant 7 : index
    %c0_50 = arith.constant 0 : index
    %c0_51 = arith.constant 0 : index
    %56 = vector.load %arg2[%c7, %c0_50, %c0_51] : memref<9x4x256xf32, #tpu.memory_space<vmem>>, vector<1x4x256xf32>
    %57 = vector.shape_cast %56 : vector<1x4x256xf32> to vector<4x256xf32>
    %cst_52 = arith.constant dense<0.000000e+00> : vector<64x256xf32>
    %58 = tpu.matmul %55, %57, %cst_52 {dimension_numbers = #tpu.dot_dimension_numbers<[1], [0], [0], [1], [0, 0, 1, 1], [], []>} : vector<64x4xf32>, vector<4x256xf32>, vector<64x256xf32> -> vector<64x256xf32>
    %59 = arith.addf %52, %58 : vector<64x256xf32>
    %c0_53 = arith.constant 0 : index
    %c1_54 = arith.constant 1 : index
    %c1_55 = arith.constant 1 : index
    %c0_56 = arith.constant 0 : index
    %60 = vector.load %arg1[%c0_53, %c1_54, %c1_55, %c0_56] : memref<1x36x9x4xf32, #tpu.memory_space<vmem>>, vector<1x8x8x4xf32>
    %61 = vector.shape_cast %60 : vector<1x8x8x4xf32> to vector<8x8x4xf32>
    %62 = vector.shape_cast %61 : vector<8x8x4xf32> to vector<64x4xf32>
    %c8 = arith.constant 8 : index
    %c0_57 = arith.constant 0 : index
    %c0_58 = arith.constant 0 : index
    %63 = vector.load %arg2[%c8, %c0_57, %c0_58] : memref<9x4x256xf32, #tpu.memory_space<vmem>>, vector<1x4x256xf32>
    %64 = vector.shape_cast %63 : vector<1x4x256xf32> to vector<4x256xf32>
    %cst_59 = arith.constant dense<0.000000e+00> : vector<64x256xf32>
    %65 = tpu.matmul %62, %64, %cst_59 {dimension_numbers = #tpu.dot_dimension_numbers<[1], [0], [0], [1], [0, 0, 1, 1], [], []>} : vector<64x4xf32>, vector<4x256xf32>, vector<64x256xf32> -> vector<64x256xf32>
    %66 = arith.addf %59, %65 : vector<64x256xf32>
    %c0_60 = arith.constant 0 : index
    %c0_61 = arith.constant 0 : index
    %c0_62 = arith.constant 0 : index
    %67 = vector.load %arg3[%c0_60, %c0_61, %c0_62] : memref<1x64x256xf32, #tpu.memory_space<vmem>>, vector<1x64x256xf32>
    %68 = vector.shape_cast %67 : vector<1x64x256xf32> to vector<64x256xf32>
    %69 = vector.shape_cast %66 : vector<64x256xf32> to vector<1x64x256xf32>
    tpu.vector_store %arg3[%c0_60, %c0_61, %c0_62], %69 {strides = array<i32>} : memref<1x64x256xf32, #tpu.memory_space<vmem>>, vector<1x64x256xf32>,
    %c0_63 = arith.constant 0 : index
    %c0_64 = arith.constant 0 : index
    %70 = vector.load %arg4[%c0_63, %c0_64] : memref<8x256xf32, #tpu.memory_space<vmem>>, vector<1x256xf32>
    %cst_65 = arith.constant dense<0.000000e+00> : vector<256xf32>
    %71 = vector.multi_reduction <add>, %66, %cst_65 [0] : vector<64x256xf32> to vector<256xf32>
    %72 = vector.shape_cast %71 : vector<256xf32> to vector<1x256xf32>
    %73 = arith.addf %70, %72 : vector<1x256xf32>
    %c0_66 = arith.constant 0 : index
    %c0_67 = arith.constant 0 : index
    %74 = vector.load %arg4[%c0_66, %c0_67] : memref<8x256xf32, #tpu.memory_space<vmem>>, vector<1x256xf32>
    tpu.vector_store %arg4[%c0_66, %c0_67], %73 {strides = array<i32>} : memref<8x256xf32, #tpu.memory_space<vmem>>, vector<1x256xf32>,
    %c1_68 = arith.constant 1 : index
    %c0_69 = arith.constant 0 : index
    %75 = vector.load %arg4[%c1_68, %c0_69] : memref<8x256xf32, #tpu.memory_space<vmem>>, vector<1x256xf32>
    %76 = arith.mulf %66, %66 : vector<64x256xf32>
    %cst_70 = arith.constant dense<0.000000e+00> : vector<256xf32>
    %77 = vector.multi_reduction <add>, %76, %cst_70 [0] : vector<64x256xf32> to vector<256xf32>
    %78 = vector.shape_cast %77 : vector<256xf32> to vector<1x256xf32>
    %79 = arith.addf %75, %78 : vector<1x256xf32>
    %c1_71 = arith.constant 1 : index
    %c0_72 = arith.constant 0 : index
    %80 = vector.load %arg4[%c1_71, %c0_72] : memref<8x256xf32, #tpu.memory_space<vmem>>, vector<1x256xf32>
    tpu.vector_store %arg4[%c1_71, %c0_72], %79 {strides = array<i32>} : memref<8x256xf32, #tpu.memory_space<vmem>>, vector<1x256xf32>,
    return
  }
  func.func @transform_0(%arg0: i32) -> (i32, i32, i32, i32) {
    %c0_i32 = arith.constant 0 : i32
    %c0_i32_0 = arith.constant 0 : i32
    %c0_i32_1 = arith.constant 0 : i32
    %c0_i32_2 = arith.constant 0 : i32
    return %arg0, %c0_i32, %c0_i32_0, %c0_i32_1 : i32, i32, i32, i32
  }
  func.func @transform_1(%arg0: i32) -> (i32, i32, i32) {
    %c0_i32 = arith.constant 0 : i32
    %c0_i32_0 = arith.constant 0 : i32
    %c0_i32_1 = arith.constant 0 : i32
    %c0_i32_2 = arith.constant 0 : i32
    return %c0_i32, %c0_i32_0, %c0_i32_1 : i32, i32, i32
  }
  func.func @transform_2(%arg0: i32) -> (i32, i32, i32) {
    %c0_i32 = arith.constant 0 : i32
    %c0_i32_0 = arith.constant 0 : i32
    %c0_i32_1 = arith.constant 0 : i32
    return %arg0, %c0_i32, %c0_i32_0 : i32, i32, i32
  }
  func.func @transform_3(%arg0: i32) -> (i32, i32) {
    %c0_i32 = arith.constant 0 : i32
    %c0_i32_0 = arith.constant 0 : i32
    %c0_i32_1 = arith.constant 0 : i32
    return %c0_i32, %c0_i32_0 : i32, i32
  }
}

module attributes {stable_mosaic.version = 11 : i64} {
  func.func @_finalize_kernel(%arg0: i32, %arg1: memref<128x128xf32, #tpu.memory_space<vmem>>, %arg2: memref<128x256xf32, #tpu.memory_space<vmem>>, %arg3: memref<8x256xf32, #tpu.memory_space<vmem>>, %arg4: memref<8x128xf32, #tpu.memory_space<vmem>>, %arg5: memref<8x128xf32, #tpu.memory_space<vmem>>, %arg6: memref<128x128xf32, #tpu.memory_space<vmem>>) attributes {dimension_semantics = [#tpu.dimension_semantics<parallel>], iteration_bounds = array<i64: 1>, scalar_prefetch = 0 : i64, scratch_operands = 0 : i64, tpu.core_type = #tpu.core_type<tc>, window_params = [{transform_indices = @transform_0, window_bounds = array<i64: 128, 128>}, {transform_indices = @transform_1, window_bounds = array<i64: 128, 256>}, {pipeline_mode = #tpu.pipeline_mode<synchronous>, transform_indices = @transform_2, window_bounds = array<i64: 8, 256>}, {pipeline_mode = #tpu.pipeline_mode<synchronous>, transform_indices = @transform_3, window_bounds = array<i64: 8, 128>}, {pipeline_mode = #tpu.pipeline_mode<synchronous>, transform_indices = @transform_4, window_bounds = array<i64: 8, 128>}, {transform_indices = @transform_5, window_bounds = array<i64: 128, 128>}]} {
    %c0 = arith.constant 0 : index
    %c0_0 = arith.constant 0 : index
    %0 = vector.load %arg4[%c0, %c0_0] : memref<8x128xf32, #tpu.memory_space<vmem>>, vector<1x128xf32>
    %cst = arith.constant 7.812500e-03 : f32
    %1 = vector.broadcast %cst : f32 to vector<1x128xf32>
    %2 = arith.mulf %0, %1 : vector<1x128xf32>
    %c1 = arith.constant 1 : index
    %c0_1 = arith.constant 0 : index
    %3 = vector.load %arg4[%c1, %c0_1] : memref<8x128xf32, #tpu.memory_space<vmem>>, vector<1x128xf32>
    %cst_2 = arith.constant 7.812500e-03 : f32
    %4 = vector.broadcast %cst_2 : f32 to vector<1x128xf32>
    %5 = arith.mulf %3, %4 : vector<1x128xf32>
    %6 = arith.mulf %2, %2 : vector<1x128xf32>
    %7 = arith.subf %5, %6 : vector<1x128xf32>
    %cst_3 = arith.constant 0.000000e+00 : f32
    %8 = vector.broadcast %cst_3 : f32 to vector<1x128xf32>
    %9 = arith.maximumf %7, %8 : vector<1x128xf32>
    %c0_4 = arith.constant 0 : index
    %c0_5 = arith.constant 0 : index
    %10 = vector.load %arg1[%c0_4, %c0_5] : memref<128x128xf32, #tpu.memory_space<vmem>>, vector<128x128xf32>
    %11 = vector.broadcast %2 : vector<1x128xf32> to vector<128x128xf32>
    %12 = arith.subf %10, %11 : vector<128x128xf32>
    %cst_6 = arith.constant 9.99999974E-6 : f32
    %13 = vector.broadcast %cst_6 : f32 to vector<1x128xf32>
    %14 = arith.addf %9, %13 : vector<1x128xf32>
    %15 = math.rsqrt %14 : vector<1x128xf32>
    %c2 = arith.constant 2 : index
    %c0_7 = arith.constant 0 : index
    %16 = vector.load %arg5[%c2, %c0_7] : memref<8x128xf32, #tpu.memory_space<vmem>>, vector<1x128xf32>
    %17 = arith.mulf %15, %16 : vector<1x128xf32>
    %18 = vector.broadcast %17 : vector<1x128xf32> to vector<128x128xf32>
    %19 = arith.mulf %12, %18 : vector<128x128xf32>
    %c3 = arith.constant 3 : index
    %c0_8 = arith.constant 0 : index
    %20 = vector.load %arg5[%c3, %c0_8] : memref<8x128xf32, #tpu.memory_space<vmem>>, vector<1x128xf32>
    %21 = vector.broadcast %20 : vector<1x128xf32> to vector<128x128xf32>
    %22 = arith.addf %19, %21 : vector<128x128xf32>
    %c0_9 = arith.constant 0 : index
    %c128 = arith.constant 128 : index
    %23 = vector.load %arg2[%c0_9, %c128] : memref<128x256xf32, #tpu.memory_space<vmem>>, vector<128x128xf32>
    %c0_10 = arith.constant 0 : index
    %c128_11 = arith.constant 128 : index
    %24 = vector.load %arg3[%c0_10, %c128_11] : memref<8x256xf32, #tpu.memory_space<vmem>>, vector<1x128xf32>
    %cst_12 = arith.constant 7.812500e-03 : f32
    %25 = vector.broadcast %cst_12 : f32 to vector<1x128xf32>
    %26 = arith.mulf %24, %25 : vector<1x128xf32>
    %c1_13 = arith.constant 1 : index
    %c128_14 = arith.constant 128 : index
    %27 = vector.load %arg3[%c1_13, %c128_14] : memref<8x256xf32, #tpu.memory_space<vmem>>, vector<1x128xf32>
    %cst_15 = arith.constant 7.812500e-03 : f32
    %28 = vector.broadcast %cst_15 : f32 to vector<1x128xf32>
    %29 = arith.mulf %27, %28 : vector<1x128xf32>
    %30 = arith.mulf %26, %26 : vector<1x128xf32>
    %31 = arith.subf %29, %30 : vector<1x128xf32>
    %cst_16 = arith.constant 0.000000e+00 : f32
    %32 = vector.broadcast %cst_16 : f32 to vector<1x128xf32>
    %33 = arith.maximumf %31, %32 : vector<1x128xf32>
    %34 = vector.broadcast %26 : vector<1x128xf32> to vector<128x128xf32>
    %35 = arith.subf %23, %34 : vector<128x128xf32>
    %cst_17 = arith.constant 9.99999974E-6 : f32
    %36 = vector.broadcast %cst_17 : f32 to vector<1x128xf32>
    %37 = arith.addf %33, %36 : vector<1x128xf32>
    %38 = math.rsqrt %37 : vector<1x128xf32>
    %c4 = arith.constant 4 : index
    %c0_18 = arith.constant 0 : index
    %39 = vector.load %arg5[%c4, %c0_18] : memref<8x128xf32, #tpu.memory_space<vmem>>, vector<1x128xf32>
    %40 = arith.mulf %38, %39 : vector<1x128xf32>
    %41 = vector.broadcast %40 : vector<1x128xf32> to vector<128x128xf32>
    %42 = arith.mulf %35, %41 : vector<128x128xf32>
    %c5 = arith.constant 5 : index
    %c0_19 = arith.constant 0 : index
    %43 = vector.load %arg5[%c5, %c0_19] : memref<8x128xf32, #tpu.memory_space<vmem>>, vector<1x128xf32>
    %44 = vector.broadcast %43 : vector<1x128xf32> to vector<128x128xf32>
    %45 = arith.addf %42, %44 : vector<128x128xf32>
    %46 = arith.addf %22, %45 : vector<128x128xf32>
    %cst_20 = arith.constant 0.000000e+00 : f32
    %47 = vector.broadcast %cst_20 : f32 to vector<128x128xf32>
    %48 = arith.maximumf %46, %47 : vector<128x128xf32>
    %c0_21 = arith.constant 0 : index
    %c0_22 = arith.constant 0 : index
    %49 = vector.load %arg6[%c0_21, %c0_22] : memref<128x128xf32, #tpu.memory_space<vmem>>, vector<128x128xf32>
    tpu.vector_store %arg6[%c0_21, %c0_22], %48 {strides = array<i32>} : memref<128x128xf32, #tpu.memory_space<vmem>>, vector<128x128xf32>,
    return
  }
  func.func @transform_0(%arg0: i32) -> (i32, i32) {
    %c0_i32 = arith.constant 0 : i32
    %c0_i32_0 = arith.constant 0 : i32
    return %arg0, %c0_i32 : i32, i32
  }
  func.func @transform_1(%arg0: i32) -> (i32, i32) {
    %c0_i32 = arith.constant 0 : i32
    %c0_i32_0 = arith.constant 0 : i32
    return %arg0, %c0_i32 : i32, i32
  }
  func.func @transform_2(%arg0: i32) -> (i32, i32) {
    %c0_i32 = arith.constant 0 : i32
    %c0_i32_0 = arith.constant 0 : i32
    %c0_i32_1 = arith.constant 0 : i32
    return %c0_i32, %c0_i32_0 : i32, i32
  }
  func.func @transform_3(%arg0: i32) -> (i32, i32) {
    %c0_i32 = arith.constant 0 : i32
    %c0_i32_0 = arith.constant 0 : i32
    %c0_i32_1 = arith.constant 0 : i32
    return %c0_i32, %c0_i32_0 : i32, i32
  }
  func.func @transform_4(%arg0: i32) -> (i32, i32) {
    %c0_i32 = arith.constant 0 : i32
    %c0_i32_0 = arith.constant 0 : i32
    %c0_i32_1 = arith.constant 0 : i32
    return %c0_i32, %c0_i32_0 : i32, i32
  }
  func.func @transform_5(%arg0: i32) -> (i32, i32) {
    %c0_i32 = arith.constant 0 : i32
    %c0_i32_0 = arith.constant 0 : i32
    return %arg0, %c0_i32 : i32, i32
  }
}

module attributes {stable_mosaic.version = 11 : i64} {
  func.func @_conv2_stats_kernel(%arg0: i32, %arg1: memref<1x64x256xf32, #tpu.memory_space<vmem>>, %arg2: memref<9x128x128xf32, #tpu.memory_space<vmem>>, %arg3: memref<8x128xf32, #tpu.memory_space<vmem>>, %arg4: memref<8x256xf32, #tpu.memory_space<vmem>>, %arg5: memref<1x64x128xf32, #tpu.memory_space<vmem>>, %arg6: memref<8x128xf32, #tpu.memory_space<vmem>>, %arg7: memref<10x10x128xf32, #tpu.memory_space<vmem>>) attributes {dimension_semantics = [#tpu.dimension_semantics<arbitrary>], iteration_bounds = array<i64: 2>, scalar_prefetch = 0 : i64, scratch_operands = 1 : i64, tpu.core_type = #tpu.core_type<tc>, window_params = [{transform_indices = @transform_0, window_bounds = array<i64: 1, 64, 256>}, {pipeline_mode = #tpu.pipeline_mode<synchronous>, transform_indices = @transform_1, window_bounds = array<i64: 9, 128, 128>}, {pipeline_mode = #tpu.pipeline_mode<synchronous>, transform_indices = @transform_2, window_bounds = array<i64: 8, 128>}, {pipeline_mode = #tpu.pipeline_mode<synchronous>, transform_indices = @transform_3, window_bounds = array<i64: 8, 256>}, {transform_indices = @transform_4, window_bounds = array<i64: 1, 64, 128>}, {pipeline_mode = #tpu.pipeline_mode<synchronous>, transform_indices = @transform_5, window_bounds = array<i64: 8, 128>}]} {
    %c0_i32 = arith.constant 0 : i32
    %0 = arith.cmpi eq, %arg0, %c0_i32 : i32
    %1 = arith.extui %0 : i1 to i32
    %c0_i32_0 = arith.constant 0 : i32
    %2 = arith.cmpi ne, %1, %c0_i32_0 : i32
    scf.if %2 {
      %cst_91 = arith.constant 0.000000e+00 : f32
      %102 = vector.broadcast %cst_91 : f32 to vector<8x128xf32>
      %c0_92 = arith.constant 0 : index
      %c0_93 = arith.constant 0 : index
      %103 = vector.load %arg6[%c0_92, %c0_93] : memref<8x128xf32, #tpu.memory_space<vmem>>, vector<8x128xf32>
      tpu.vector_store %arg6[%c0_92, %c0_93], %102 {strides = array<i32>} : memref<8x128xf32, #tpu.memory_space<vmem>>, vector<8x128xf32>,
    } else {
    }
    %c0 = arith.constant 0 : index
    %c0_1 = arith.constant 0 : index
    %c0_2 = arith.constant 0 : index
    %3 = vector.load %arg1[%c0, %c0_1, %c0_2] : memref<1x64x256xf32, #tpu.memory_space<vmem>>, vector<1x64x128xf32>
    %4 = vector.shape_cast %3 : vector<1x64x128xf32> to vector<64x128xf32>
    %c0_3 = arith.constant 0 : index
    %c0_4 = arith.constant 0 : index
    %5 = vector.load %arg4[%c0_3, %c0_4] : memref<8x256xf32, #tpu.memory_space<vmem>>, vector<1x128xf32>
    %cst = arith.constant 7.812500e-03 : f32
    %6 = vector.broadcast %cst : f32 to vector<1x128xf32>
    %7 = arith.mulf %5, %6 : vector<1x128xf32>
    %c1 = arith.constant 1 : index
    %c0_5 = arith.constant 0 : index
    %8 = vector.load %arg4[%c1, %c0_5] : memref<8x256xf32, #tpu.memory_space<vmem>>, vector<1x128xf32>
    %cst_6 = arith.constant 7.812500e-03 : f32
    %9 = vector.broadcast %cst_6 : f32 to vector<1x128xf32>
    %10 = arith.mulf %8, %9 : vector<1x128xf32>
    %11 = arith.mulf %7, %7 : vector<1x128xf32>
    %12 = arith.subf %10, %11 : vector<1x128xf32>
    %cst_7 = arith.constant 0.000000e+00 : f32
    %13 = vector.broadcast %cst_7 : f32 to vector<1x128xf32>
    %14 = arith.maximumf %12, %13 : vector<1x128xf32>
    %cst_8 = arith.constant 9.99999974E-6 : f32
    %15 = vector.broadcast %cst_8 : f32 to vector<1x128xf32>
    %16 = arith.addf %14, %15 : vector<1x128xf32>
    %17 = math.rsqrt %16 : vector<1x128xf32>
    %c0_9 = arith.constant 0 : index
    %c0_10 = arith.constant 0 : index
    %18 = vector.load %arg3[%c0_9, %c0_10] : memref<8x128xf32, #tpu.memory_space<vmem>>, vector<1x128xf32>
    %19 = arith.mulf %17, %18 : vector<1x128xf32>
    %20 = vector.broadcast %7 : vector<1x128xf32> to vector<64x128xf32>
    %21 = arith.subf %4, %20 : vector<64x128xf32>
    %22 = vector.broadcast %19 : vector<1x128xf32> to vector<64x128xf32>
    %23 = arith.mulf %21, %22 : vector<64x128xf32>
    %c1_11 = arith.constant 1 : index
    %c0_12 = arith.constant 0 : index
    %24 = vector.load %arg3[%c1_11, %c0_12] : memref<8x128xf32, #tpu.memory_space<vmem>>, vector<1x128xf32>
    %25 = vector.broadcast %24 : vector<1x128xf32> to vector<64x128xf32>
    %26 = arith.addf %23, %25 : vector<64x128xf32>
    %cst_13 = arith.constant 0.000000e+00 : f32
    %27 = vector.broadcast %cst_13 : f32 to vector<64x128xf32>
    %28 = arith.maximumf %26, %27 : vector<64x128xf32>
    %cst_14 = arith.constant 0.000000e+00 : f32
    %29 = vector.broadcast %cst_14 : f32 to vector<10x10x128xf32>
    %c0_15 = arith.constant 0 : index
    %c0_16 = arith.constant 0 : index
    %c0_17 = arith.constant 0 : index
    %30 = vector.load %arg7[%c0_15, %c0_16, %c0_17] : memref<10x10x128xf32, #tpu.memory_space<vmem>>, vector<10x10x128xf32>
    tpu.vector_store %arg7[%c0_15, %c0_16, %c0_17], %29 {strides = array<i32>} : memref<10x10x128xf32, #tpu.memory_space<vmem>>, vector<10x10x128xf32>,
    %31 = vector.shape_cast %28 : vector<64x128xf32> to vector<8x8x128xf32>
    %c1_18 = arith.constant 1 : index
    %c1_19 = arith.constant 1 : index
    %c0_20 = arith.constant 0 : index
    %32 = vector.load %arg7[%c1_18, %c1_19, %c0_20] : memref<10x10x128xf32, #tpu.memory_space<vmem>>, vector<8x8x128xf32>
    tpu.vector_store %arg7[%c1_18, %c1_19, %c0_20], %31 {strides = array<i32>} : memref<10x10x128xf32, #tpu.memory_space<vmem>>, vector<8x8x128xf32>,
    %cst_21 = arith.constant 0.000000e+00 : f32
    %33 = vector.broadcast %cst_21 : f32 to vector<64x128xf32>
    %c0_22 = arith.constant 0 : index
    %c0_23 = arith.constant 0 : index
    %c0_24 = arith.constant 0 : index
    %34 = vector.load %arg7[%c0_22, %c0_23, %c0_24] : memref<10x10x128xf32, #tpu.memory_space<vmem>>, vector<8x8x128xf32>
    %35 = vector.shape_cast %34 : vector<8x8x128xf32> to vector<64x128xf32>
    %c0_25 = arith.constant 0 : index
    %c0_26 = arith.constant 0 : index
    %c0_27 = arith.constant 0 : index
    %36 = vector.load %arg2[%c0_25, %c0_26, %c0_27] : memref<9x128x128xf32, #tpu.memory_space<vmem>>, vector<1x128x128xf32>
    %37 = vector.shape_cast %36 : vector<1x128x128xf32> to vector<128x128xf32>
    %cst_28 = arith.constant dense<0.000000e+00> : vector<64x128xf32>
    %38 = tpu.matmul %35, %37, %cst_28 {dimension_numbers = #tpu.dot_dimension_numbers<[1], [0], [0], [1], [0, 0, 1, 1], [], []>} : vector<64x128xf32>, vector<128x128xf32>, vector<64x128xf32> -> vector<64x128xf32>
    %39 = arith.addf %33, %38 : vector<64x128xf32>
    %c0_29 = arith.constant 0 : index
    %c1_30 = arith.constant 1 : index
    %c0_31 = arith.constant 0 : index
    %40 = vector.load %arg7[%c0_29, %c1_30, %c0_31] : memref<10x10x128xf32, #tpu.memory_space<vmem>>, vector<8x8x128xf32>
    %41 = vector.shape_cast %40 : vector<8x8x128xf32> to vector<64x128xf32>
    %c1_32 = arith.constant 1 : index
    %c0_33 = arith.constant 0 : index
    %c0_34 = arith.constant 0 : index
    %42 = vector.load %arg2[%c1_32, %c0_33, %c0_34] : memref<9x128x128xf32, #tpu.memory_space<vmem>>, vector<1x128x128xf32>
    %43 = vector.shape_cast %42 : vector<1x128x128xf32> to vector<128x128xf32>
    %cst_35 = arith.constant dense<0.000000e+00> : vector<64x128xf32>
    %44 = tpu.matmul %41, %43, %cst_35 {dimension_numbers = #tpu.dot_dimension_numbers<[1], [0], [0], [1], [0, 0, 1, 1], [], []>} : vector<64x128xf32>, vector<128x128xf32>, vector<64x128xf32> -> vector<64x128xf32>
    %45 = arith.addf %39, %44 : vector<64x128xf32>
    %c0_36 = arith.constant 0 : index
    %c2 = arith.constant 2 : index
    %c0_37 = arith.constant 0 : index
    %46 = vector.load %arg7[%c0_36, %c2, %c0_37] : memref<10x10x128xf32, #tpu.memory_space<vmem>>, vector<8x8x128xf32>
    %47 = vector.shape_cast %46 : vector<8x8x128xf32> to vector<64x128xf32>
    %c2_38 = arith.constant 2 : index
    %c0_39 = arith.constant 0 : index
    %c0_40 = arith.constant 0 : index
    %48 = vector.load %arg2[%c2_38, %c0_39, %c0_40] : memref<9x128x128xf32, #tpu.memory_space<vmem>>, vector<1x128x128xf32>
    %49 = vector.shape_cast %48 : vector<1x128x128xf32> to vector<128x128xf32>
    %cst_41 = arith.constant dense<0.000000e+00> : vector<64x128xf32>
    %50 = tpu.matmul %47, %49, %cst_41 {dimension_numbers = #tpu.dot_dimension_numbers<[1], [0], [0], [1], [0, 0, 1, 1], [], []>} : vector<64x128xf32>, vector<128x128xf32>, vector<64x128xf32> -> vector<64x128xf32>
    %51 = arith.addf %45, %50 : vector<64x128xf32>
    %c1_42 = arith.constant 1 : index
    %c0_43 = arith.constant 0 : index
    %c0_44 = arith.constant 0 : index
    %52 = vector.load %arg7[%c1_42, %c0_43, %c0_44] : memref<10x10x128xf32, #tpu.memory_space<vmem>>, vector<8x8x128xf32>
    %53 = vector.shape_cast %52 : vector<8x8x128xf32> to vector<64x128xf32>
    %c3 = arith.constant 3 : index
    %c0_45 = arith.constant 0 : index
    %c0_46 = arith.constant 0 : index
    %54 = vector.load %arg2[%c3, %c0_45, %c0_46] : memref<9x128x128xf32, #tpu.memory_space<vmem>>, vector<1x128x128xf32>
    %55 = vector.shape_cast %54 : vector<1x128x128xf32> to vector<128x128xf32>
    %cst_47 = arith.constant dense<0.000000e+00> : vector<64x128xf32>
    %56 = tpu.matmul %53, %55, %cst_47 {dimension_numbers = #tpu.dot_dimension_numbers<[1], [0], [0], [1], [0, 0, 1, 1], [], []>} : vector<64x128xf32>, vector<128x128xf32>, vector<64x128xf32> -> vector<64x128xf32>
    %57 = arith.addf %51, %56 : vector<64x128xf32>
    %c1_48 = arith.constant 1 : index
    %c1_49 = arith.constant 1 : index
    %c0_50 = arith.constant 0 : index
    %58 = vector.load %arg7[%c1_48, %c1_49, %c0_50] : memref<10x10x128xf32, #tpu.memory_space<vmem>>, vector<8x8x128xf32>
    %59 = vector.shape_cast %58 : vector<8x8x128xf32> to vector<64x128xf32>
    %c4 = arith.constant 4 : index
    %c0_51 = arith.constant 0 : index
    %c0_52 = arith.constant 0 : index
    %60 = vector.load %arg2[%c4, %c0_51, %c0_52] : memref<9x128x128xf32, #tpu.memory_space<vmem>>, vector<1x128x128xf32>
    %61 = vector.shape_cast %60 : vector<1x128x128xf32> to vector<128x128xf32>
    %cst_53 = arith.constant dense<0.000000e+00> : vector<64x128xf32>
    %62 = tpu.matmul %59, %61, %cst_53 {dimension_numbers = #tpu.dot_dimension_numbers<[1], [0], [0], [1], [0, 0, 1, 1], [], []>} : vector<64x128xf32>, vector<128x128xf32>, vector<64x128xf32> -> vector<64x128xf32>
    %63 = arith.addf %57, %62 : vector<64x128xf32>
    %c1_54 = arith.constant 1 : index
    %c2_55 = arith.constant 2 : index
    %c0_56 = arith.constant 0 : index
    %64 = vector.load %arg7[%c1_54, %c2_55, %c0_56] : memref<10x10x128xf32, #tpu.memory_space<vmem>>, vector<8x8x128xf32>
    %65 = vector.shape_cast %64 : vector<8x8x128xf32> to vector<64x128xf32>
    %c5 = arith.constant 5 : index
    %c0_57 = arith.constant 0 : index
    %c0_58 = arith.constant 0 : index
    %66 = vector.load %arg2[%c5, %c0_57, %c0_58] : memref<9x128x128xf32, #tpu.memory_space<vmem>>, vector<1x128x128xf32>
    %67 = vector.shape_cast %66 : vector<1x128x128xf32> to vector<128x128xf32>
    %cst_59 = arith.constant dense<0.000000e+00> : vector<64x128xf32>
    %68 = tpu.matmul %65, %67, %cst_59 {dimension_numbers = #tpu.dot_dimension_numbers<[1], [0], [0], [1], [0, 0, 1, 1], [], []>} : vector<64x128xf32>, vector<128x128xf32>, vector<64x128xf32> -> vector<64x128xf32>
    %69 = arith.addf %63, %68 : vector<64x128xf32>
    %c2_60 = arith.constant 2 : index
    %c0_61 = arith.constant 0 : index
    %c0_62 = arith.constant 0 : index
    %70 = vector.load %arg7[%c2_60, %c0_61, %c0_62] : memref<10x10x128xf32, #tpu.memory_space<vmem>>, vector<8x8x128xf32>
    %71 = vector.shape_cast %70 : vector<8x8x128xf32> to vector<64x128xf32>
    %c6 = arith.constant 6 : index
    %c0_63 = arith.constant 0 : index
    %c0_64 = arith.constant 0 : index
    %72 = vector.load %arg2[%c6, %c0_63, %c0_64] : memref<9x128x128xf32, #tpu.memory_space<vmem>>, vector<1x128x128xf32>
    %73 = vector.shape_cast %72 : vector<1x128x128xf32> to vector<128x128xf32>
    %cst_65 = arith.constant dense<0.000000e+00> : vector<64x128xf32>
    %74 = tpu.matmul %71, %73, %cst_65 {dimension_numbers = #tpu.dot_dimension_numbers<[1], [0], [0], [1], [0, 0, 1, 1], [], []>} : vector<64x128xf32>, vector<128x128xf32>, vector<64x128xf32> -> vector<64x128xf32>
    %75 = arith.addf %69, %74 : vector<64x128xf32>
    %c2_66 = arith.constant 2 : index
    %c1_67 = arith.constant 1 : index
    %c0_68 = arith.constant 0 : index
    %76 = vector.load %arg7[%c2_66, %c1_67, %c0_68] : memref<10x10x128xf32, #tpu.memory_space<vmem>>, vector<8x8x128xf32>
    %77 = vector.shape_cast %76 : vector<8x8x128xf32> to vector<64x128xf32>
    %c7 = arith.constant 7 : index
    %c0_69 = arith.constant 0 : index
    %c0_70 = arith.constant 0 : index
    %78 = vector.load %arg2[%c7, %c0_69, %c0_70] : memref<9x128x128xf32, #tpu.memory_space<vmem>>, vector<1x128x128xf32>
    %79 = vector.shape_cast %78 : vector<1x128x128xf32> to vector<128x128xf32>
    %cst_71 = arith.constant dense<0.000000e+00> : vector<64x128xf32>
    %80 = tpu.matmul %77, %79, %cst_71 {dimension_numbers = #tpu.dot_dimension_numbers<[1], [0], [0], [1], [0, 0, 1, 1], [], []>} : vector<64x128xf32>, vector<128x128xf32>, vector<64x128xf32> -> vector<64x128xf32>
    %81 = arith.addf %75, %80 : vector<64x128xf32>
    %c2_72 = arith.constant 2 : index
    %c2_73 = arith.constant 2 : index
    %c0_74 = arith.constant 0 : index
    %82 = vector.load %arg7[%c2_72, %c2_73, %c0_74] : memref<10x10x128xf32, #tpu.memory_space<vmem>>, vector<8x8x128xf32>
    %83 = vector.shape_cast %82 : vector<8x8x128xf32> to vector<64x128xf32>
    %c8 = arith.constant 8 : index
    %c0_75 = arith.constant 0 : index
    %c0_76 = arith.constant 0 : index
    %84 = vector.load %arg2[%c8, %c0_75, %c0_76] : memref<9x128x128xf32, #tpu.memory_space<vmem>>, vector<1x128x128xf32>
    %85 = vector.shape_cast %84 : vector<1x128x128xf32> to vector<128x128xf32>
    %cst_77 = arith.constant dense<0.000000e+00> : vector<64x128xf32>
    %86 = tpu.matmul %83, %85, %cst_77 {dimension_numbers = #tpu.dot_dimension_numbers<[1], [0], [0], [1], [0, 0, 1, 1], [], []>} : vector<64x128xf32>, vector<128x128xf32>, vector<64x128xf32> -> vector<64x128xf32>
    %87 = arith.addf %81, %86 : vector<64x128xf32>
    %c0_78 = arith.constant 0 : index
    %c0_79 = arith.constant 0 : index
    %c0_80 = arith.constant 0 : index
    %88 = vector.load %arg5[%c0_78, %c0_79, %c0_80] : memref<1x64x128xf32, #tpu.memory_space<vmem>>, vector<1x64x128xf32>
    %89 = vector.shape_cast %88 : vector<1x64x128xf32> to vector<64x128xf32>
    %90 = vector.shape_cast %87 : vector<64x128xf32> to vector<1x64x128xf32>
    tpu.vector_store %arg5[%c0_78, %c0_79, %c0_80], %90 {strides = array<i32>} : memref<1x64x128xf32, #tpu.memory_space<vmem>>, vector<1x64x128xf32>,
    %c0_81 = arith.constant 0 : index
    %c0_82 = arith.constant 0 : index
    %91 = vector.load %arg6[%c0_81, %c0_82] : memref<8x128xf32, #tpu.memory_space<vmem>>, vector<1x128xf32>
    %cst_83 = arith.constant dense<0.000000e+00> : vector<128xf32>
    %92 = vector.multi_reduction <add>, %87, %cst_83 [0] : vector<64x128xf32> to vector<128xf32>
    %93 = vector.shape_cast %92 : vector<128xf32> to vector<1x128xf32>
    %94 = arith.addf %91, %93 : vector<1x128xf32>
    %c0_84 = arith.constant 0 : index
    %c0_85 = arith.constant 0 : index
    %95 = vector.load %arg6[%c0_84, %c0_85] : memref<8x128xf32, #tpu.memory_space<vmem>>, vector<1x128xf32>
    tpu.vector_store %arg6[%c0_84, %c0_85], %94 {strides = array<i32>} : memref<8x128xf32, #tpu.memory_space<vmem>>, vector<1x128xf32>,
    %c1_86 = arith.constant 1 : index
    %c0_87 = arith.constant 0 : index
    %96 = vector.load %arg6[%c1_86, %c0_87] : memref<8x128xf32, #tpu.memory_space<vmem>>, vector<1x128xf32>
    %97 = arith.mulf %87, %87 : vector<64x128xf32>
    %cst_88 = arith.constant dense<0.000000e+00> : vector<128xf32>
    %98 = vector.multi_reduction <add>, %97, %cst_88 [0] : vector<64x128xf32> to vector<128xf32>
    %99 = vector.shape_cast %98 : vector<128xf32> to vector<1x128xf32>
    %100 = arith.addf %96, %99 : vector<1x128xf32>
    %c1_89 = arith.constant 1 : index
    %c0_90 = arith.constant 0 : index
    %101 = vector.load %arg6[%c1_89, %c0_90] : memref<8x128xf32, #tpu.memory_space<vmem>>, vector<1x128xf32>
    tpu.vector_store %arg6[%c1_89, %c0_90], %100 {strides = array<i32>} : memref<8x128xf32, #tpu.memory_space<vmem>>, vector<1x128xf32>,
    return
  }
  func.func @transform_0(%arg0: i32) -> (i32, i32, i32) {
    %c0_i32 = arith.constant 0 : i32
    %c0_i32_0 = arith.constant 0 : i32
    %c0_i32_1 = arith.constant 0 : i32
    return %arg0, %c0_i32, %c0_i32_0 : i32, i32, i32
  }
  func.func @transform_1(%arg0: i32) -> (i32, i32, i32) {
    %c0_i32 = arith.constant 0 : i32
    %c0_i32_0 = arith.constant 0 : i32
    %c0_i32_1 = arith.constant 0 : i32
    %c0_i32_2 = arith.constant 0 : i32
    return %c0_i32, %c0_i32_0, %c0_i32_1 : i32, i32, i32
  }
  func.func @transform_2(%arg0: i32) -> (i32, i32) {
    %c0_i32 = arith.constant 0 : i32
    %c0_i32_0 = arith.constant 0 : i32
    %c0_i32_1 = arith.constant 0 : i32
    return %c0_i32, %c0_i32_0 : i32, i32
  }
  func.func @transform_3(%arg0: i32) -> (i32, i32) {
    %c0_i32 = arith.constant 0 : i32
    %c0_i32_0 = arith.constant 0 : i32
    %c0_i32_1 = arith.constant 0 : i32
    return %c0_i32, %c0_i32_0 : i32, i32
  }
  func.func @transform_4(%arg0: i32) -> (i32, i32, i32) {
    %c0_i32 = arith.constant 0 : i32
    %c0_i32_0 = arith.constant 0 : i32
    %c0_i32_1 = arith.constant 0 : i32
    return %arg0, %c0_i32, %c0_i32_0 : i32, i32, i32
  }
  func.func @transform_5(%arg0: i32) -> (i32, i32) {
    %c0_i32 = arith.constant 0 : i32
    %c0_i32_0 = arith.constant 0 : i32
    %c0_i32_1 = arith.constant 0 : i32
    return %c0_i32, %c0_i32_0 : i32, i32
  }
}

</mosaic_0001>

<llo_original>
// kernel: _compute_block_impl.5
$region0: #{_compute_block_impl.5}
  #allocation0 [shape = 'u32[]', space=smem, size = 0x4, offset = 0x4, fixed_abs, tag = 'smem constant byte address 0x4 - core index']
  #allocation1 [shape = 'u32[144,128]{1,0:T(1,128)}', space=vmem, size = 0x12000, scoped, tag = 'internal scratch']
  %s0 = inlined_call_operand.vmem [shape: f32[128,128], index: 0, kind: input, shape index: {}]
  %s1 = inlined_call_operand.vmem [shape: f32[128,256], index: 1, kind: input, shape index: {}]
  %s2 = inlined_call_operand.vmem [shape: f32[8,256], index: 2, kind: input, shape index: {}]
  %s3 = inlined_call_operand.vmem [shape: f32[8,128], index: 3, kind: input, shape index: {}]
  %s4 = inlined_call_operand.vmem [shape: f32[8,128], index: 4, kind: input, shape index: {}]
  %s5 = inlined_call_operand.vmem [shape: f32[128,128], index: 5, kind: output, shape index: {}]
  %s6 = sld [smem:[#allocation0]]
  $region30: #{_compute_block_impl.5} parent=0
    _
  %s8 = ssub.s32 1, %s6
  %s9 = scalar_select 0, %s8, %s6
  // Predicated region
  $region2: #{_compute_block_impl.5} parent=0 // pred_check
    _
  $region3: #{_compute_block_impl.5} parent=0 // pred_check_branch
    %11 = sbr.rel (0) target = $region5
  $region4: #{_compute_block_impl.5} parent=0 // pred_region
    _
  $region5: #{_compute_block_impl.5} parent=0 // pred_fallthru
    _
  // Predicated region
  $region6: #{_compute_block_impl.5} parent=0 // pred_check
    _
  $region7: #{_compute_block_impl.5} parent=0 // pred_check_branch
    %13 = sbr.rel (0) target = $region9
  $region8: #{_compute_block_impl.5} parent=0 // pred_region
    _
  $region9: #{_compute_block_impl.5} parent=0 // pred_fallthru
    _
  // Predicated region
  $region10: #{_compute_block_impl.5} parent=0 // pred_check
    _
  $region11: #{_compute_block_impl.5} parent=0 // pred_check_branch
    %15 = sbr.rel (0) target = $region13
  $region12: #{_compute_block_impl.5} parent=0 // pred_region
    _
  $region13: #{_compute_block_impl.5} parent=0 // pred_fallthru
    _
  // Predicated region
  $region14: #{_compute_block_impl.5} parent=0 // pred_check
    _
  $region15: #{_compute_block_impl.5} parent=0 // pred_check_branch
    %17 = sbr.rel (0) target = $region17
  $region16: #{_compute_block_impl.5} parent=0 // pred_region
    _
  $region17: #{_compute_block_impl.5} parent=0 // pred_fallthru
    _
  // Predicated region
  $region18: #{_compute_block_impl.5} parent=0 // pred_check
    _
  $region19: #{_compute_block_impl.5} parent=0 // pred_check_branch
    %19 = sbr.rel (0) target = $region21
  $region20: #{_compute_block_impl.5} parent=0 // pred_region
    _
  $region21: #{_compute_block_impl.5} parent=0 // pred_fallthru
    _
  %v20 = vld [vmem:[%s3] sm:$0x1]
  %v21 = vmul.f32 %v20, 0.0078125
  %v22 = vld [vmem:[%s3 + $0x1] sm:$0x1]
  %v23 = vmul.f32 %v22, 0.0078125
  %v24 = vmul.f32 %v21, %v21
  %v25 = vsub.f32 %v23, %v24
  %v26 = vmax.f32 %v25, 0.0
  %v27 = vld [vmem:[%s0] sm:$0xff]
  %v28 = vld [vmem:[%s0 + $0x8] sm:$0xff]
  %v29 = vld [vmem:[%s0 + $0x10] sm:$0xff]
  %v30 = vld [vmem:[%s0 + $0x18] sm:$0xff]
  %v31 = vld [vmem:[%s0 + $0x20] sm:$0xff]
  %v32 = vld [vmem:[%s0 + $0x28] sm:$0xff]
  %v33 = vld [vmem:[%s0 + $0x30] sm:$0xff]
  %v34 = vld [vmem:[%s0 + $0x38] sm:$0xff]
  %v35 = vld [vmem:[%s0 + $0x40] sm:$0xff]
  %v36 = vld [vmem:[%s0 + $0x48] sm:$0xff]
  %v37 = vld [vmem:[%s0 + $0x50] sm:$0xff]
  %v38 = vld [vmem:[%s0 + $0x58] sm:$0xff]
  %v39 = vld [vmem:[%s0 + $0x60] sm:$0xff]
  %v40 = vld [vmem:[%s0 + $0x68] sm:$0xff]
  %v41 = vld [vmem:[%s0 + $0x70] sm:$0xff]
  %v42 = vld [vmem:[%s0 + $0x78] sm:$0xff]
  %v43 = vlaneseq
  %v44 = vshrl.u32 %v43, 7
  %v45 = vsub.s32 0, %v44
  %v46 = vrot.slane %v21, %v45
  %v47 = vsub.f32 %v27, %v46
  %v48 = vsub.f32 %v28, %v46
  %v49 = vsub.f32 %v29, %v46
  %v50 = vsub.f32 %v30, %v46
  %v51 = vsub.f32 %v31, %v46
  %v52 = vsub.f32 %v32, %v46
  %v53 = vsub.f32 %v33, %v46
  %v54 = vsub.f32 %v34, %v46
  %v55 = vsub.f32 %v35, %v46
  %v56 = vsub.f32 %v36, %v46
  %v57 = vsub.f32 %v37, %v46
  %v58 = vsub.f32 %v38, %v46
  %v59 = vsub.f32 %v39, %v46
  %v60 = vsub.f32 %v40, %v46
  %v61 = vsub.f32 %v41, %v46
  %v62 = vsub.f32 %v42, %v46
  %v63 = vadd.f32 %v26, 1e-05
  %v64 = vrsqrt.pop %v63
  %v65 = vld [vmem:[%s4 + $0x2] sm:$0x1]
  %v66 = vmul.f32 %v64, %v65
  %v67 = vlaneseq
  %v68 = vshrl.u32 %v67, 7
  %v69 = vsub.s32 0, %v68
  %v70 = vrot.slane %v66, %v69
  %v71 = vmul.f32 %v47, %v70
  %v72 = vmul.f32 %v48, %v70
  %v73 = vmul.f32 %v49, %v70
  %v74 = vmul.f32 %v50, %v70
  %v75 = vmul.f32 %v51, %v70
  %v76 = vmul.f32 %v52, %v70
  %v77 = vmul.f32 %v53, %v70
  %v78 = vmul.f32 %v54, %v70
  %v79 = vmul.f32 %v55, %v70
  %v80 = vmul.f32 %v56, %v70
  %v81 = vmul.f32 %v57, %v70
  %v82 = vmul.f32 %v58, %v70
  %v83 = vmul.f32 %v59, %v70
  %v84 = vmul.f32 %v60, %v70
  %v85 = vmul.f32 %v61, %v70
  %v86 = vmul.f32 %v62, %v70
  %v87 = vld [vmem:[%s4 + $0x3] sm:$0x1]
  %v88 = vlaneseq
  %v89 = vshrl.u32 %v88, 7
  %v90 = vsub.s32 0, %v89
  %v91 = vrot.slane %v87, %v90
  %v92 = vadd.f32 %v71, %v91
  %v93 = vadd.f32 %v72, %v91
  %v94 = vadd.f32 %v73, %v91
  %v95 = vadd.f32 %v74, %v91
  %v96 = vadd.f32 %v75, %v91
  %v97 = vadd.f32 %v76, %v91
  %v98 = vadd.f32 %v77, %v91
  %v99 = vadd.f32 %v78, %v91
  %v100 = vadd.f32 %v79, %v91
  %v101 = vadd.f32 %v80, %v91
  %v102 = vadd.f32 %v81, %v91
  %v103 = vadd.f32 %v82, %v91
  %v104 = vadd.f32 %v83, %v91
  %v105 = vadd.f32 %v84, %v91
  %v106 = vadd.f32 %v85, %v91
  %v107 = vadd.f32 %v86, %v91
  %v108 = vld [vmem:[%s1 + $0x8] sm:$0xff]
  %v109 = vld [vmem:[%s1 + $0x18] sm:$0xff]
  %v110 = vld [vmem:[%s1 + $0x28] sm:$0xff]
  %v111 = vld [vmem:[%s1 + $0x38] sm:$0xff]
  %v112 = vld [vmem:[%s1 + $0x48] sm:$0xff]
  %v113 = vld [vmem:[%s1 + $0x58] sm:$0xff]
  %v114 = vld [vmem:[%s1 + $0x68] sm:$0xff]
  %v115 = vld [vmem:[%s1 + $0x78] sm:$0xff]
  %v116 = vld [vmem:[%s1 + $0x88] sm:$0xff]
  %v117 = vld [vmem:[%s1 + $0x98] sm:$0xff]
  %v118 = vld [vmem:[%s1 + $0xa8] sm:$0xff]
  %v119 = vld [vmem:[%s1 + $0xb8] sm:$0xff]
  %v120 = vld [vmem:[%s1 + $0xc8] sm:$0xff]
  %v121 = vld [vmem:[%s1 + $0xd8] sm:$0xff]
  %v122 = vld [vmem:[%s1 + $0xe8] sm:$0xff]
  %v123 = vld [vmem:[%s1 + $0xf8] sm:$0xff]
  %v124 = vld [vmem:[%s2 + $0x8] ss:$0 sm:$0xff]
  %v125 = vmul.f32 %v124, 0.0078125
  %v126 = vld [vmem:[%s2 + $0x9] ss:$0 sm:$0xff]
  %v127 = vmul.f32 %v126, 0.0078125
  %v128 = vmul.f32 %v125, %v125
  %v129 = vsub.f32 %v127, %v128
  %v130 = vmax.f32 %v129, 0.0
  %v131 = vsub.f32 %v108, %v125
  %v132 = vsub.f32 %v109, %v125
  %v133 = vsub.f32 %v110, %v125
  %v134 = vsub.f32 %v111, %v125
  %v135 = vsub.f32 %v112, %v125
  %v136 = vsub.f32 %v113, %v125
  %v137 = vsub.f32 %v114, %v125
  %v138 = vsub.f32 %v115, %v125
  %v139 = vsub.f32 %v116, %v125
  %v140 = vsub.f32 %v117, %v125
  %v141 = vsub.f32 %v118, %v125
  %v142 = vsub.f32 %v119, %v125
  %v143 = vsub.f32 %v120, %v125
  %v144 = vsub.f32 %v121, %v125
  %v145 = vsub.f32 %v122, %v125
  %v146 = vsub.f32 %v123, %v125
  %v147 = vadd.f32 %v130, 1e-05
  %v148 = vrsqrt.pop %v147
  %v149 = vld [vmem:[%s4 + $0x4] sm:$0x1]
  %v150 = vmul.f32 %v148, %v149
  %v151 = vlaneseq
  %v152 = vshrl.u32 %v151, 7
  %v153 = vsub.s32 0, %v152
  %v154 = vrot.slane %v150, %v153
  %v155 = vmul.f32 %v131, %v154
  %v156 = vmul.f32 %v132, %v154
  %v157 = vmul.f32 %v133, %v154
  %v158 = vmul.f32 %v134, %v154
  %v159 = vmul.f32 %v135, %v154
  %v160 = vmul.f32 %v136, %v154
  %v161 = vmul.f32 %v137, %v154
  %v162 = vmul.f32 %v138, %v154
  %v163 = vmul.f32 %v139, %v154
  %v164 = vmul.f32 %v140, %v154
  %v165 = vmul.f32 %v141, %v154
  %v166 = vmul.f32 %v142, %v154
  %v167 = vmul.f32 %v143, %v154
  %v168 = vmul.f32 %v144, %v154
  %v169 = vmul.f32 %v145, %v154
  %v170 = vmul.f32 %v146, %v154
  %v171 = vld [vmem:[%s4 + $0x5] sm:$0x1]
  %v172 = vlaneseq
  %v173 = vshrl.u32 %v172, 7
  %v174 = vsub.s32 0, %v173
  %v175 = vrot.slane %v171, %v174
  %v176 = vadd.f32 %v155, %v175
  %v177 = vadd.f32 %v156, %v175
  %v178 = vadd.f32 %v157, %v175
  %v179 = vadd.f32 %v158, %v175
  %v180 = vadd.f32 %v159, %v175
  %v181 = vadd.f32 %v160, %v175
  %v182 = vadd.f32 %v161, %v175
  %v183 = vadd.f32 %v162, %v175
  %v184 = vadd.f32 %v163, %v175
  %v185 = vadd.f32 %v164, %v175
  %v186 = vadd.f32 %v165, %v175
  %v187 = vadd.f32 %v166, %v175
  %v188 = vadd.f32 %v167, %v175
  %v189 = vadd.f32 %v168, %v175
  %v190 = vadd.f32 %v169, %v175
  %v191 = vadd.f32 %v170, %v175
  %v192 = vadd.f32 %v92, %v176
  %v193 = vadd.f32 %v93, %v177
  %v194 = vadd.f32 %v94, %v178
  %v195 = vadd.f32 %v95, %v179
  %v196 = vadd.f32 %v96, %v180
  %v197 = vadd.f32 %v97, %v181
  %v198 = vadd.f32 %v98, %v182
  %v199 = vadd.f32 %v99, %v183
  %v200 = vadd.f32 %v100, %v184
  %v201 = vadd.f32 %v101, %v185
  %v202 = vadd.f32 %v102, %v186
  %v203 = vadd.f32 %v103, %v187
  %v204 = vadd.f32 %v104, %v188
  %v205 = vadd.f32 %v105, %v189
  %v206 = vadd.f32 %v106, %v190
  %v207 = vadd.f32 %v107, %v191
  %v208 = vmax.f32 %v192, 0.0
  %v209 = vmax.f32 %v193, 0.0
  %v210 = vmax.f32 %v194, 0.0
  %v211 = vmax.f32 %v195, 0.0
  %v212 = vmax.f32 %v196, 0.0
  %v213 = vmax.f32 %v197, 0.0
  %v214 = vmax.f32 %v198, 0.0
  %v215 = vmax.f32 %v199, 0.0
  %v216 = vmax.f32 %v200, 0.0
  %v217 = vmax.f32 %v201, 0.0
  %v218 = vmax.f32 %v202, 0.0
  %v219 = vmax.f32 %v203, 0.0
  %v220 = vmax.f32 %v204, 0.0
  %v221 = vmax.f32 %v205, 0.0
  %v222 = vmax.f32 %v206, 0.0
  %v223 = vmax.f32 %v207, 0.0
  %224 = vst [vmem:[%s5] sm:$0xff] %v208
  %225 = vst [vmem:[%s5 + $0x8] sm:$0xff] %v209
  %226 = vst [vmem:[%s5 + $0x10] sm:$0xff] %v210
  %227 = vst [vmem:[%s5 + $0x18] sm:$0xff] %v211
  %228 = vst [vmem:[%s5 + $0x20] sm:$0xff] %v212
  %229 = vst [vmem:[%s5 + $0x28] sm:$0xff] %v213
  %230 = vst [vmem:[%s5 + $0x30] sm:$0xff] %v214
  %231 = vst [vmem:[%s5 + $0x38] sm:$0xff] %v215
  %232 = vst [vmem:[%s5 + $0x40] sm:$0xff] %v216
  %233 = vst [vmem:[%s5 + $0x48] sm:$0xff] %v217
  %234 = vst [vmem:[%s5 + $0x50] sm:$0xff] %v218
  %235 = vst [vmem:[%s5 + $0x58] sm:$0xff] %v219
  %236 = vst [vmem:[%s5 + $0x60] sm:$0xff] %v220
  %237 = vst [vmem:[%s5 + $0x68] sm:$0xff] %v221
  %238 = vst [vmem:[%s5 + $0x70] sm:$0xff] %v222
  %239 = vst [vmem:[%s5 + $0x78] sm:$0xff] %v223
  // Predicated region
  $region22: #{_compute_block_impl.5} parent=0 // pred_check
    _
  $region23: #{_compute_block_impl.5} parent=0 // pred_check_branch
    %241 = sbr.rel (0) target = $region25
  $region24: #{_compute_block_impl.5} parent=0 // pred_region
    _
  $region25: #{_compute_block_impl.5} parent=0 // pred_fallthru
    _
  // Predicated region
  $region26: #{_compute_block_impl.5} parent=0 // pred_check
    _
  $region27: #{_compute_block_impl.5} parent=0 // pred_check_branch
    %243 = sbr.rel (0) target = $region29
  $region28: #{_compute_block_impl.5} parent=0 // pred_region
    _
  $region29: #{_compute_block_impl.5} parent=0 // pred_fallthru
    _

// kernel: _compute_block_impl.3
$region0: #{_compute_block_impl.3}
  #allocation0 [shape = 'u32[]', space=smem, size = 0x4, offset = 0x4, fixed_abs, tag = 'smem constant byte address 0x4 - core index']
  #allocation1 [shape = 'u32[144,128]{1,0:T(1,128)}', space=vmem, size = 0x12000, scoped, tag = 'internal scratch']
  %s0 = inlined_call_operand.vmem [shape: f32[2,36,9,4], index: 0, kind: input, shape index: {}]
  %s1 = inlined_call_operand.vmem [shape: f32[9,4,256], index: 1, kind: input, shape index: {}]
  %s2 = inlined_call_operand.vmem [shape: f32[2,64,256], index: 2, kind: output, shape index: {0}]
  %s3 = inlined_call_operand.vmem [shape: f32[8,256], index: 3, kind: output, shape index: {1}]
  %4 = xla_tuple %s2, %s3
  %s5 = sld [smem:[#allocation0]]
  $region53: #{_compute_block_impl.3} parent=0
    _
  %s7 = ssub.s32 1, %s5
  %s8 = scalar_select 0, %s7, %s5
  loop: start=0, step=1, limit=4
  $region2: #{_compute_block_impl.3} parent=0 // loop_pre_header
    _
  $region3: #{_compute_block_impl.3} parent=0 // loop_header
    %s10 = sphi 0, %s14
    %p11 = scmp.ge.s32.totalorder %s10, 4
    %s20 = sphi 0, %s22
    %s23 = sphi 0, %s20
    %s24 = sphi 0, %s23
    %s40 = sphi 0, %s24
    %s44 = sphi 0, %s44
    %s46 = sphi 0, %s44
    %s47 = sphi 0, %s46
    %s61 = sphi 0, %s47
    %s67 = sphi 0, %s69
    %s70 = sphi 0, %s67
    %s71 = sphi 0, %s70
    %s87 = sphi 0, %s71
    %s91 = sphi 0, %s91
    %s93 = sphi 0, %s91
    %s94 = sphi 0, %s93
    %s108 = sphi 0, %s94
  $region4: #{_compute_block_impl.3} parent=0 // loop_header_branch
    %13 = sbr.rel (%p11) target = $region8
  $region5: #{_compute_block_impl.3} parent=0 // loop_body
    %s15 = ssub.s32 %s10, 1
    %s16 = ssub.s32 %s10, 2
    %s17 = sadd.s32 %s10, 1
    %s18 = ssub.s32 %s10, %s17
    %p19 = scmp.eq.s32.totalorder %s18, 0
    %s21 = sadd.s32 %s20, 1
    %s22 = scalar_select %p19, %s20, %s21
    %p25 = pneg %p19
    %p26 = scmp.eq.s32.totalorder %s10, 1
    %p27 = por %p25, %p26
    %p28 = scmp.ne.s32.totalorder %s20, %s23
    %p29 = scmp.eq.s32.totalorder %s10, 0
    %p30 = por %p28, %p29
    %p31 = scmp.ne.s32.totalorder %s20, %s23
    %p32 = scmp.eq.s32.totalorder %s15, 1
    %p33 = por %p31, %p32
    %p34 = scmp.ne.s32.totalorder %s23, %s24
    %p35 = scmp.eq.s32.totalorder %s15, 0
    %p36 = por %p34, %p35
    %p37 = scmp.ne.s32.totalorder %s23, %s24
    %p38 = scmp.eq.s32.totalorder %s16, 1
    %p39 = por %p37, %p38
    %p41 = scmp.ne.s32.totalorder %s24, %s40
    %p42 = scmp.eq.s32.totalorder %s16, 0
    %p43 = por %p41, %p42
    %s45 = sadd.s32 %s44, 1
    %p48 = scmp.eq.s32.totalorder %s10, 1
    %p49 = scmp.ne.s32.totalorder %s44, %s46
    %p50 = scmp.eq.s32.totalorder %s10, 0
    %p51 = por %p49, %p50
    %p52 = scmp.ne.s32.totalorder %s44, %s46
    %p53 = scmp.eq.s32.totalorder %s15, 1
    %p54 = por %p52, %p53
    %p55 = scmp.ne.s32.totalorder %s46, %s47
    %p56 = scmp.eq.s32.totalorder %s15, 0
    %p57 = por %p55, %p56
    %p58 = scmp.ne.s32.totalorder %s46, %s47
    %p59 = scmp.eq.s32.totalorder %s16, 1
    %p60 = por %p58, %p59
    %p62 = scmp.ne.s32.totalorder %s47, %s61
    %p63 = scmp.eq.s32.totalorder %s16, 0
    %p64 = por %p62, %p63
    %s65 = ssub.s32 %s10, %s17
    %p66 = scmp.eq.s32.totalorder %s65, 0
    %s68 = sadd.s32 %s67, 1
    %s69 = scalar_select %p66, %s67, %s68
    %p72 = pneg %p66
    %p73 = scmp.eq.s32.totalorder %s10, 1
    %p74 = por %p72, %p73
    %p75 = scmp.ne.s32.totalorder %s67, %s70
    %p76 = scmp.eq.s32.totalorder %s10, 0
    %p77 = por %p75, %p76
    %p78 = scmp.ne.s32.totalorder %s67, %s70
    %p79 = scmp.eq.s32.totalorder %s15, 1
    %p80 = por %p78, %p79
    %p81 = scmp.ne.s32.totalorder %s70, %s71
    %p82 = scmp.eq.s32.totalorder %s15, 0
    %p83 = por %p81, %p82
    %p84 = scmp.ne.s32.totalorder %s70, %s71
    %p85 = scmp.eq.s32.totalorder %s16, 1
    %p86 = por %p84, %p85
    %p88 = scmp.ne.s32.totalorder %s71, %s87
    %p89 = scmp.eq.s32.totalorder %s16, 0
    %p90 = por %p88, %p89
    %s92 = sadd.s32 %s91, 1
    %p95 = scmp.eq.s32.totalorder %s10, 1
    %p96 = scmp.ne.s32.totalorder %s91, %s93
    %p97 = scmp.eq.s32.totalorder %s10, 0
    %p98 = por %p96, %p97
    %p99 = scmp.ne.s32.totalorder %s91, %s93
    %p100 = scmp.eq.s32.totalorder %s15, 1
    %p101 = por %p99, %p100
    %p102 = scmp.ne.s32.totalorder %s93, %s94
    %p103 = scmp.eq.s32.totalorder %s15, 0
    %p104 = por %p102, %p103
    %p105 = scmp.ne.s32.totalorder %s93, %s94
    %p106 = scmp.eq.s32.totalorder %s16, 1
    %p107 = por %p105, %p106
    %p109 = scmp.ne.s32.totalorder %s94, %s108
    %p110 = scmp.eq.s32.totalorder %s16, 0
    %p111 = por %p109, %p110
    %p112 = scmp.le.s32.totalorder 1, %s10
    %p113 = scmp.lt.s32.totalorder %s10, 3
    %p114 = pnand %p112, %p113
    %p115 = pneg %p114
    // Predicated region
    $region9: #{_compute_block_impl.3} parent=5 // pred_check
      _
    $region10: #{_compute_block_impl.3} parent=5 // pred_check_branch
      %117 = sbr.rel (%p114) target = $region12
    $region11: #{_compute_block_impl.3} parent=5 // pred_region
      %s118 = ssub.s32 %s10, 1
      // Predicated region
      $region13: #{_compute_block_impl.3} parent=11 // pred_check
        %p119 = pneg %p57
      $region14: #{_compute_block_impl.3} parent=11 // pred_check_branch
        %121 = sbr.rel (%p119) target = $region16
      $region15: #{_compute_block_impl.3} parent=11 // pred_region
        _
      $region16: #{_compute_block_impl.3} parent=11 // pred_fallthru
        _
    $region12: #{_compute_block_impl.3} parent=5 // pred_fallthru
      _
    %p122 = scmp.lt.s32.totalorder %s10, 2
    // Predicated region
    $region17: #{_compute_block_impl.3} parent=5 // pred_check
      %p123 = pneg %p122
    $region18: #{_compute_block_impl.3} parent=5 // pred_check_branch
      %125 = sbr.rel (%p123) target = $region20
    $region19: #{_compute_block_impl.3} parent=5 // pred_region
      // Predicated region
      $region21: #{_compute_block_impl.3} parent=19 // pred_check
        %p126 = pneg %p30
      $region22: #{_compute_block_impl.3} parent=19 // pred_check_branch
        %128 = sbr.rel (%p126) target = $region24
      $region23: #{_compute_block_impl.3} parent=19 // pred_region
        %p129 = scmp.lt.s32.totalorder %s10, 1
        %s130 = scalar_select %p129, %s10, 1
        %s131 = smul.addr %s130, 72
        %s132 = smul.addr %s131, 8
        %s133 = scalar_lea.vmem %s0, %s132
      $region24: #{_compute_block_impl.3} parent=19 // pred_fallthru
        _
    $region20: #{_compute_block_impl.3} parent=5 // pred_fallthru
      _
    %p134 = scmp.le.s32.totalorder 1, %s10
    %p135 = scmp.lt.s32.totalorder %s10, 3
    %p136 = pnand %p134, %p135
    %p137 = pneg %p136
    // Predicated region
    $region25: #{_compute_block_impl.3} parent=5 // pred_check
      _
    $region26: #{_compute_block_impl.3} parent=5 // pred_check_branch
      %139 = sbr.rel (%p136) target = $region28
    $region27: #{_compute_block_impl.3} parent=5 // pred_region
      %s140 = ssub.s32 %s10, 1
      %p141 = scmp.lt.s32.totalorder %s15, 1
      %s142 = scalar_select %p141, %s15, 1
      %s143 = smul.addr %s142, 72
      %s144 = smul.addr %s143, 8
      %s145 = scalar_lea.vmem %s0, %s144
      %p146 = pneg %p36
      %p147 = pneg %p33
      %p148 = pneg %p57
      %p149 = pneg %p54
      %p150 = pneg %p83
      %p151 = pneg %p80
      %p152 = scmp.lt.s32.totalorder %s15, 1
      %s153 = scalar_select %p152, %s15, 1
      %s154 = smul.addr %s153, 16
      %s155 = smul.addr %s154, 8
      %s156 = scalar_lea.vmem %s2, %s155
      %p157 = pneg %p104
      %p158 = pneg %p101
      %p159 = scmp.lt.s32.totalorder %s15, 1
      %s160 = scalar_select %p159, %s15, 1
      %s161 = smul.addr %s160, 72
      %s162 = smul.addr %s161, 8
      %s163 = scalar_lea.vmem %s0, %s162
      %p164 = scmp.lt.s32.totalorder %s15, 1
      %s165 = scalar_select %p164, %s15, 1
      %s166 = smul.addr %s165, 16
      %s167 = smul.addr %s166, 8
      %s168 = scalar_lea.vmem %s2, %s167
      %p169 = scmp.eq.s32.totalorder %s15, 0
      // Predicated region
      $region29: #{_compute_block_impl.3} parent=27 // pred_check
        %p170 = pneg %p169
      $region30: #{_compute_block_impl.3} parent=27 // pred_check_branch
        %172 = sbr.rel (%p170) target = $region32
      $region31: #{_compute_block_impl.3} parent=27 // pred_region
        %173 = vst [vmem:[%s3] sm:$0xff] 0.0
        %174 = vst [vmem:[%s3 + $0x8] sm:$0xff] 0.0
      $region32: #{_compute_block_impl.3} parent=27 // pred_fallthru
        _
      %v175 = vld [vmem:[%s163] sm:$0xff]
      %v176 = vld [vmem:[%s163 + $0x10] sm:$0xff]
      %v177 = vld [vmem:[%s163 + $0x20] sm:$0xff]
      %v178 = vld [vmem:[%s163 + $0x30] sm:$0xff]
      %v179 = vld [vmem:[%s163 + $0x40] sm:$0xff]
      %v180 = vld [vmem:[%s163 + $0x50] sm:$0xff]
      %v181 = vld [vmem:[%s163 + $0x60] sm:$0xff]
      %v182 = vld [vmem:[%s163 + $0x70] sm:$0xff]
      %v183 = vld [vmem:[%s1] sm:$0xff]
      %s184 = scalar_lea.vmem %s163, 144
      %v185 = vld [vmem:[%s184] sm:$0xff]
      %v186 = vld [vmem:[%s184 + $0x10] sm:$0xff]
      %v187 = vld [vmem:[%s184 + $0x20] sm:$0xff]
      %v188 = vld [vmem:[%s184 + $0x30] sm:$0xff]
      %v189 = vld [vmem:[%s184 + $0x40] sm:$0xff]
      %v190 = vld [vmem:[%s184 + $0x50] sm:$0xff]
      %v191 = vld [vmem:[%s184 + $0x60] sm:$0xff]
      %v192 = vld [vmem:[%s184 + $0x70] sm:$0xff]
      %s193 = scalar_lea.vmem %s1, 8
      %v194 = vld [vmem:[%s193] sm:$0xff]
      %v196 = vcombine.high %v194, %v194
      %vm197 = vcmask 31744
      %v199 = vsel %vm197, %v185, 0
      %v202 = vsel %vm197, %v186, 0
      %v205 = vsel %vm197, %v187, 0
      %v208 = vsel %vm197, %v188, 0
      %v211 = vsel %vm197, %v189, 0
      %v214 = vsel %vm197, %v190, 0
      %v217 = vsel %vm197, %v191, 0
      %v220 = vsel %vm197, %v192, 0
      %vm222 = vcmask 1043456
      %v223 = vsel %vm222, %v194, 0
      %v225 = vsel %vm222, %v196, 0
      %227 = vmatprep.subr.mxu0 0.0
      %228 = vmatpush1.msra.mxu0 0.0
      %229 = vmatprep.subr.mxu0 0.0
      %230 = vmatpush1.msra.mxu0 0.0
      %231 = vmatprep.subr.mxu0 0.0
      %232 = vmatpush1.msra.mxu0 0.0
      %233 = vmatprep.subr.mxu0 0.0
      %234 = vmatpush1.msra.mxu0 0.0
      %235 = vmatprep.subr.mxu0 0.0
      %236 = vmatpush1.msra.mxu0 0.0
      %237 = vmatprep.subr.mxu0 0.0
      %238 = vmatpush1.msra.mxu0 0.0
      %239 = vmatprep.subr.mxu0 0.0
      %240 = vmatpush1.msra.mxu0 0.0
      %241 = vmatprep.subr.mxu0 0.0
      %242 = vmatpush1.msra.mxu0 0.0
      %243 = vmatprep.subr.mxu0 0.0
      %244 = vmatpush1.msra.mxu0 0.0
      %245 = vmatprep.subr.mxu0 0.0
      %246 = vmatpush1.msra.mxu0 0.0
      %247 = vmatprep.subr.mxu0 0.0
      %248 = vmatpush1.msra.mxu0 0.0
      %249 = vmatprep.subr.mxu0 0.0
      %250 = vmatpush1.msra.mxu0 0.0
      %251 = vmatprep.subr.mxu0 0.0
      %252 = vmatpush1.msra.mxu0 0.0
      %253 = vmatprep.subr.mxu0 0.0
      %254 = vmatpush1.msra.mxu0 0.0
      %255 = vmatprep.subr.mxu0 0.0
      %256 = vmatpush1.msra.mxu0 0.0
      %257 = vmatprep.subr.mxu0 %v225
      %258 = vmatpush1.msra.mxu0 %v223
      %259 = vmatprep.subr.mxu0 0.0
      %260 = vmatpush2.msra.mxu0 0.0
      %261 = vmatprep.subr.mxu0 0.0
      %262 = vmatpush2.msra.mxu0 0.0
      %263 = vmatprep.subr.mxu0 0.0
      %264 = vmatpush2.msra.mxu0 0.0
      %265 = vmatprep.subr.mxu0 0.0
      %266 = vmatpush2.msra.mxu0 0.0
      %267 = vmatprep.subr.mxu0 0.0
      %268 = vmatpush2.msra.mxu0 0.0
      %269 = vmatprep.subr.mxu0 0.0
      %270 = vmatpush2.msra.mxu0 0.0
      %271 = vmatprep.subr.mxu0 0.0
      %272 = vmatpush2.msra.mxu0 0.0
      %273 = vmatprep.subr.mxu0 0.0
      %274 = vmatpush2.msra.mxu0 0.0
      %275 = vmatprep.subr.mxu0 0.0
      %276 = vmatpush2.msra.mxu0 0.0
      %277 = vmatprep.subr.mxu0 0.0
      %278 = vmatpush2.msra.mxu0 0.0
      %279 = vmatprep.subr.mxu0 0.0
      %280 = vmatpush2.msra.mxu0 0.0
      %281 = vmatprep.subr.mxu0 0.0
      %282 = vmatpush2.msra.mxu0 0.0
      %283 = vmatprep.subr.mxu0 0.0
      %284 = vmatpush2.msra.mxu0 0.0
      %285 = vmatprep.subr.mxu0 0.0
      %286 = vmatpush2.msra.mxu0 0.0
      %287 = vmatprep.subr.mxu0 0.0
      %288 = vmatpush2.msra.mxu0 0.0
      %289 = vmatprep.subr.mxu0 0.0
      %290 = vmatpush2.msra.mxu0 0.0
      %291 = vmatprep.mubr.f32.mxu0 0.0
      %292 = vmatmul.mubr.f32.gmra.mxu0 %v199
      %v293 = vpop.f32.mrf.mxu0
      %v294 = vadd.f32 0.0, %v293
      %v295 = vpop.f32.mrf.mxu0
      %v296 = vadd.f32 0.0, %v295
      %297 = vmatprep.mubr.f32.mxu0 0.0
      %298 = vmatmul.mubr.f32.gmra.mxu0 %v202
      %v299 = vpop.f32.mrf.mxu0
      %v300 = vadd.f32 0.0, %v299
      %v301 = vpop.f32.mrf.mxu0
      %v302 = vadd.f32 0.0, %v301
      %303 = vmatprep.mubr.f32.mxu0 0.0
      %304 = vmatmul.mubr.f32.gmra.mxu0 %v205
      %v305 = vpop.f32.mrf.mxu0
      %v306 = vadd.f32 0.0, %v305
      %v307 = vpop.f32.mrf.mxu0
      %v308 = vadd.f32 0.0, %v307
      %309 = vmatprep.mubr.f32.mxu0 0.0
      %310 = vmatmul.mubr.f32.gmra.mxu0 %v208
      %v311 = vpop.f32.mrf.mxu0
      %v312 = vadd.f32 0.0, %v311
      %v313 = vpop.f32.mrf.mxu0
      %v314 = vadd.f32 0.0, %v313
      %315 = vmatprep.mubr.f32.mxu0 0.0
      %316 = vmatmul.mubr.f32.gmra.mxu0 %v211
      %v317 = vpop.f32.mrf.mxu0
      %v318 = vadd.f32 0.0, %v317
      %v319 = vpop.f32.mrf.mxu0
      %v320 = vadd.f32 0.0, %v319
      %321 = vmatprep.mubr.f32.mxu0 0.0
      %322 = vmatmul.mubr.f32.gmra.mxu0 %v214
      %v323 = vpop.f32.mrf.mxu0
      %v324 = vadd.f32 0.0, %v323
      %v325 = vpop.f32.mrf.mxu0
      %v326 = vadd.f32 0.0, %v325
      %327 = vmatprep.mubr.f32.mxu0 0.0
      %328 = vmatmul.mubr.f32.gmra.mxu0 %v217
      %v329 = vpop.f32.mrf.mxu0
      %v330 = vadd.f32 0.0, %v329
      %v331 = vpop.f32.mrf.mxu0
      %v332 = vadd.f32 0.0, %v331
      %333 = vmatprep.mubr.f32.mxu0 0.0
      %334 = vmatmul.mubr.f32.gmra.mxu0 %v220
      %v335 = vpop.f32.mrf.mxu0
      %v336 = vadd.f32 0.0, %v335
      %v337 = vpop.f32.mrf.mxu0
      %v338 = vadd.f32 0.0, %v337
      %339 = vdwg.mxu0
      %v341 = vcombine.high %v183, %v183
      %v343 = vsel %vm197, %v175, 0
      %v346 = vsel %vm197, %v176, 0
      %v349 = vsel %vm197, %v177, 0
      %v352 = vsel %vm197, %v178, 0
      %v355 = vsel %vm197, %v179, 0
      %v358 = vsel %vm197, %v180, 0
      %v361 = vsel %vm197, %v181, 0
      %v364 = vsel %vm197, %v182, 0
      %v366 = vsel %vm222, %v183, 0
      %v368 = vsel %vm222, %v341, 0
      %370 = vmatprep.subr.mxu0 0.0
      %371 = vmatpush1.msra.mxu0 0.0
      %372 = vmatprep.subr.mxu0 0.0
      %373 = vmatpush1.msra.mxu0 0.0
      %374 = vmatprep.subr.mxu0 0.0
      %375 = vmatpush1.msra.mxu0 0.0
      %376 = vmatprep.subr.mxu0 0.0
      %377 = vmatpush1.msra.mxu0 0.0
      %378 = vmatprep.subr.mxu0 0.0
      %379 = vmatpush1.msra.mxu0 0.0
      %380 = vmatprep.subr.mxu0 0.0
      %381 = vmatpush1.msra.mxu0 0.0
      %382 = vmatprep.subr.mxu0 0.0
      %383 = vmatpush1.msra.mxu0 0.0
      %384 = vmatprep.subr.mxu0 0.0
      %385 = vmatpush1.msra.mxu0 0.0
      %386 = vmatprep.subr.mxu0 0.0
      %387 = vmatpush1.msra.mxu0 0.0
      %388 = vmatprep.subr.mxu0 0.0
      %389 = vmatpush1.msra.mxu0 0.0
      %390 = vmatprep.subr.mxu0 0.0
      %391 = vmatpush1.msra.mxu0 0.0
      %392 = vmatprep.subr.mxu0 0.0
      %393 = vmatpush1.msra.mxu0 0.0
      %394 = vmatprep.subr.mxu0 0.0
      %395 = vmatpush1.msra.mxu0 0.0
      %396 = vmatprep.subr.mxu0 0.0
      %397 = vmatpush1.msra.mxu0 0.0
      %398 = vmatprep.subr.mxu0 0.0
      %399 = vmatpush1.msra.mxu0 0.0
      %400 = vmatprep.subr.mxu0 %v368
      %401 = vmatpush1.msra.mxu0 %v366
      %402 = vmatprep.subr.mxu0 0.0
      %403 = vmatpush2.msra.mxu0 0.0
      %404 = vmatprep.subr.mxu0 0.0
      %405 = vmatpush2.msra.mxu0 0.0
      %406 = vmatprep.subr.mxu0 0.0
      %407 = vmatpush2.msra.mxu0 0.0
      %408 = vmatprep.subr.mxu0 0.0
      %409 = vmatpush2.msra.mxu0 0.0
      %410 = vmatprep.subr.mxu0 0.0
      %411 = vmatpush2.msra.mxu0 0.0
      %412 = vmatprep.subr.mxu0 0.0
      %413 = vmatpush2.msra.mxu0 0.0
      %414 = vmatprep.subr.mxu0 0.0
      %415 = vmatpush2.msra.mxu0 0.0
      %416 = vmatprep.subr.mxu0 0.0
      %417 = vmatpush2.msra.mxu0 0.0
      %418 = vmatprep.subr.mxu0 0.0
      %419 = vmatpush2.msra.mxu0 0.0
      %420 = vmatprep.subr.mxu0 0.0
      %421 = vmatpush2.msra.mxu0 0.0
      %422 = vmatprep.subr.mxu0 0.0
      %423 = vmatpush2.msra.mxu0 0.0
      %424 = vmatprep.subr.mxu0 0.0
      %425 = vmatpush2.msra.mxu0 0.0
      %426 = vmatprep.subr.mxu0 0.0
      %427 = vmatpush2.msra.mxu0 0.0
      %428 = vmatprep.subr.mxu0 0.0
      %429 = vmatpush2.msra.mxu0 0.0
      %430 = vmatprep.subr.mxu0 0.0
      %431 = vmatpush2.msra.mxu0 0.0
      %432 = vmatprep.subr.mxu0 0.0
      %433 = vmatpush2.msra.mxu0 0.0
      %434 = vmatprep.mubr.f32.mxu0 0.0
      %435 = vmatmul.mubr.f32.gmra.mxu0 %v343
      %v436 = vpop.f32.mrf.mxu0
      %v437 = vadd.f32 %v294, %v436
      %v438 = vpop.f32.mrf.mxu0
      %v439 = vadd.f32 %v296, %v438
      %440 = vmatprep.mubr.f32.mxu0 0.0
      %441 = vmatmul.mubr.f32.gmra.mxu0 %v346
      %v442 = vpop.f32.mrf.mxu0
      %v443 = vadd.f32 %v300, %v442
      %v444 = vpop.f32.mrf.mxu0
      %v445 = vadd.f32 %v302, %v444
      %446 = vmatprep.mubr.f32.mxu0 0.0
      %447 = vmatmul.mubr.f32.gmra.mxu0 %v349
      %v448 = vpop.f32.mrf.mxu0
      %v449 = vadd.f32 %v306, %v448
      %v450 = vpop.f32.mrf.mxu0
      %v451 = vadd.f32 %v308, %v450
      %452 = vmatprep.mubr.f32.mxu0 0.0
      %453 = vmatmul.mubr.f32.gmra.mxu0 %v352
      %v454 = vpop.f32.mrf.mxu0
      %v455 = vadd.f32 %v312, %v454
      %v456 = vpop.f32.mrf.mxu0
      %v457 = vadd.f32 %v314, %v456
      %458 = vmatprep.mubr.f32.mxu0 0.0
      %459 = vmatmul.mubr.f32.gmra.mxu0 %v355
      %v460 = vpop.f32.mrf.mxu0
      %v461 = vadd.f32 %v318, %v460
      %v462 = vpop.f32.mrf.mxu0
      %v463 = vadd.f32 %v320, %v462
      %464 = vmatprep.mubr.f32.mxu0 0.0
      %465 = vmatmul.mubr.f32.gmra.mxu0 %v358
      %v466 = vpop.f32.mrf.mxu0
      %v467 = vadd.f32 %v324, %v466
      %v468 = vpop.f32.mrf.mxu0
      %v469 = vadd.f32 %v326, %v468
      %470 = vmatprep.mubr.f32.mxu0 0.0
      %471 = vmatmul.mubr.f32.gmra.mxu0 %v361
      %v472 = vpop.f32.mrf.mxu0
      %v473 = vadd.f32 %v330, %v472
      %v474 = vpop.f32.mrf.mxu0
      %v475 = vadd.f32 %v332, %v474
      %476 = vmatprep.mubr.f32.mxu0 0.0
      %477 = vmatmul.mubr.f32.gmra.mxu0 %v364
      %v478 = vpop.f32.mrf.mxu0
      %v479 = vadd.f32 %v336, %v478
      %v480 = vpop.f32.mrf.mxu0
      %v481 = vadd.f32 %v338, %v480
      %482 = vdwg.mxu0
      %v483 = vld [vmem:[%s163 + $0x1] sm:$0xff]
      %v484 = vld [vmem:[%s163 + $0x11] sm:$0xff]
      %v485 = vld [vmem:[%s163 + $0x21] sm:$0xff]
      %v486 = vld [vmem:[%s163 + $0x31] sm:$0xff]
      %v487 = vld [vmem:[%s163 + $0x41] sm:$0xff]
      %v488 = vld [vmem:[%s163 + $0x51] sm:$0xff]
      %v489 = vld [vmem:[%s163 + $0x61] sm:$0xff]
      %v490 = vld [vmem:[%s163 + $0x71] sm:$0xff]
      %s491 = scalar_lea.vmem %s1, 16
      %v492 = vld [vmem:[%s491] sm:$0xff]
      %v494 = vcombine.high %v492, %v492
      %v496 = vsel %vm197, %v483, 0
      %v499 = vsel %vm197, %v484, 0
      %v502 = vsel %vm197, %v485, 0
      %v505 = vsel %vm197, %v486, 0
      %v508 = vsel %vm197, %v487, 0
      %v511 = vsel %vm197, %v488, 0
      %v514 = vsel %vm197, %v489, 0
      %v517 = vsel %vm197, %v490, 0
      %v519 = vsel %vm222, %v492, 0
      %v521 = vsel %vm222, %v494, 0
      %523 = vmatprep.subr.mxu0 0.0
      %524 = vmatpush1.msra.mxu0 0.0
      %525 = vmatprep.subr.mxu0 0.0
      %526 = vmatpush1.msra.mxu0 0.0
      %527 = vmatprep.subr.mxu0 0.0
      %528 = vmatpush1.msra.mxu0 0.0
      %529 = vmatprep.subr.mxu0 0.0
      %530 = vmatpush1.msra.mxu0 0.0
      %531 = vmatprep.subr.mxu0 0.0
      %532 = vmatpush1.msra.mxu0 0.0
      %533 = vmatprep.subr.mxu0 0.0
      %534 = vmatpush1.msra.mxu0 0.0
      %535 = vmatprep.subr.mxu0 0.0
      %536 = vmatpush1.msra.mxu0 0.0
      %537 = vmatprep.subr.mxu0 0.0
      %538 = vmatpush1.msra.mxu0 0.0
      %539 = vmatprep.subr.mxu0 0.0
      %540 = vmatpush1.msra.mxu0 0.0
      %541 = vmatprep.subr.mxu0 0.0
      %542 = vmatpush1.msra.mxu0 0.0
      %543 = vmatprep.subr.mxu0 0.0
      %544 = vmatpush1.msra.mxu0 0.0
      %545 = vmatprep.subr.mxu0 0.0
      %546 = vmatpush1.msra.mxu0 0.0
      %547 = vmatprep.subr.mxu0 0.0
      %548 = vmatpush1.msra.mxu0 0.0
      %549 = vmatprep.subr.mxu0 0.0
      %550 = vmatpush1.msra.mxu0 0.0
      %551 = vmatprep.subr.mxu0 0.0
      %552 = vmatpush1.msra.mxu0 0.0
      %553 = vmatprep.subr.mxu0 %v521
      %554 = vmatpush1.msra.mxu0 %v519
      %555 = vmatprep.subr.mxu0 0.0
      %556 = vmatpush2.msra.mxu0 0.0
      %557 = vmatprep.subr.mxu0 0.0
      %558 = vmatpush2.msra.mxu0 0.0
      %559 = vmatprep.subr.mxu0 0.0
      %560 = vmatpush2.msra.mxu0 0.0
      %561 = vmatprep.subr.mxu0 0.0
      %562 = vmatpush2.msra.mxu0 0.0
      %563 = vmatprep.subr.mxu0 0.0
      %564 = vmatpush2.msra.mxu0 0.0
      %565 = vmatprep.subr.mxu0 0.0
      %566 = vmatpush2.msra.mxu0 0.0
      %567 = vmatprep.subr.mxu0 0.0
      %568 = vmatpush2.msra.mxu0 0.0
      %569 = vmatprep.subr.mxu0 0.0
      %570 = vmatpush2.msra.mxu0 0.0
      %571 = vmatprep.subr.mxu0 0.0
      %572 = vmatpush2.msra.mxu0 0.0
      %573 = vmatprep.subr.mxu0 0.0
      %574 = vmatpush2.msra.mxu0 0.0
      %575 = vmatprep.subr.mxu0 0.0
      %576 = vmatpush2.msra.mxu0 0.0
      %577 = vmatprep.subr.mxu0 0.0
      %578 = vmatpush2.msra.mxu0 0.0
      %579 = vmatprep.subr.mxu0 0.0
      %580 = vmatpush2.msra.mxu0 0.0
      %581 = vmatprep.subr.mxu0 0.0
      %582 = vmatpush2.msra.mxu0 0.0
      %583 = vmatprep.subr.mxu0 0.0
      %584 = vmatpush2.msra.mxu0 0.0
      %585 = vmatprep.subr.mxu0 0.0
      %586 = vmatpush2.msra.mxu0 0.0
      %587 = vmatprep.mubr.f32.mxu0 0.0
      %588 = vmatmul.mubr.f32.gmra.mxu0 %v496
      %v589 = vpop.f32.mrf.mxu0
      %v590 = vadd.f32 0.0, %v589
      %v591 = vpop.f32.mrf.mxu0
      %v592 = vadd.f32 0.0, %v591
      %593 = vmatprep.mubr.f32.mxu0 0.0
      %594 = vmatmul.mubr.f32.gmra.mxu0 %v499
      %v595 = vpop.f32.mrf.mxu0
      %v596 = vadd.f32 0.0, %v595
      %v597 = vpop.f32.mrf.mxu0
      %v598 = vadd.f32 0.0, %v597
      %599 = vmatprep.mubr.f32.mxu0 0.0
      %600 = vmatmul.mubr.f32.gmra.mxu0 %v502
      %v601 = vpop.f32.mrf.mxu0
      %v602 = vadd.f32 0.0, %v601
      %v603 = vpop.f32.mrf.mxu0
      %v604 = vadd.f32 0.0, %v603
      %605 = vmatprep.mubr.f32.mxu0 0.0
      %606 = vmatmul.mubr.f32.gmra.mxu0 %v505
      %v607 = vpop.f32.mrf.mxu0
      %v608 = vadd.f32 0.0, %v607
      %v609 = vpop.f32.mrf.mxu0
      %v610 = vadd.f32 0.0, %v609
      %611 = vmatprep.mubr.f32.mxu0 0.0
      %612 = vmatmul.mubr.f32.gmra.mxu0 %v508
      %v613 = vpop.f32.mrf.mxu0
      %v614 = vadd.f32 0.0, %v613
      %v615 = vpop.f32.mrf.mxu0
      %v616 = vadd.f32 0.0, %v615
      %617 = vmatprep.mubr.f32.mxu0 0.0
      %618 = vmatmul.mubr.f32.gmra.mxu0 %v511
      %v619 = vpop.f32.mrf.mxu0
      %v620 = vadd.f32 0.0, %v619
      %v621 = vpop.f32.mrf.mxu0
      %v622 = vadd.f32 0.0, %v621
      %623 = vmatprep.mubr.f32.mxu0 0.0
      %624 = vmatmul.mubr.f32.gmra.mxu0 %v514
      %v625 = vpop.f32.mrf.mxu0
      %v626 = vadd.f32 0.0, %v625
      %v627 = vpop.f32.mrf.mxu0
      %v628 = vadd.f32 0.0, %v627
      %629 = vmatprep.mubr.f32.mxu0 0.0
      %630 = vmatmul.mubr.f32.gmra.mxu0 %v517
      %v631 = vpop.f32.mrf.mxu0
      %v632 = vadd.f32 0.0, %v631
      %v633 = vpop.f32.mrf.mxu0
      %v634 = vadd.f32 0.0, %v633
      %635 = vdwg.mxu0
      %v636 = vadd.f32 %v437, %v590
      %v637 = vadd.f32 %v439, %v592
      %v638 = vadd.f32 %v443, %v596
      %v639 = vadd.f32 %v445, %v598
      %v640 = vadd.f32 %v449, %v602
      %v641 = vadd.f32 %v451, %v604
      %v642 = vadd.f32 %v455, %v608
      %v643 = vadd.f32 %v457, %v610
      %v644 = vadd.f32 %v461, %v614
      %v645 = vadd.f32 %v463, %v616
      %v646 = vadd.f32 %v467, %v620
      %v647 = vadd.f32 %v469, %v622
      %v648 = vadd.f32 %v473, %v626
      %v649 = vadd.f32 %v475, %v628
      %v650 = vadd.f32 %v479, %v632
      %v651 = vadd.f32 %v481, %v634
      %s652 = scalar_lea.vmem %s163, 288
      %v653 = vld [vmem:[%s652] sm:$0xff]
      %v654 = vld [vmem:[%s652 + $0x10] sm:$0xff]
      %v655 = vld [vmem:[%s652 + $0x20] sm:$0xff]
      %v656 = vld [vmem:[%s652 + $0x30] sm:$0xff]
      %v657 = vld [vmem:[%s652 + $0x40] sm:$0xff]
      %v658 = vld [vmem:[%s652 + $0x50] sm:$0xff]
      %v659 = vld [vmem:[%s652 + $0x60] sm:$0xff]
      %v660 = vld [vmem:[%s652 + $0x70] sm:$0xff]
      %s661 = scalar_lea.vmem %s1, 24
      %v662 = vld [vmem:[%s661] sm:$0xff]
      %v664 = vcombine.high %v662, %v662
      %v666 = vsel %vm197, %v653, 0
      %v669 = vsel %vm197, %v654, 0
      %v672 = vsel %vm197, %v655, 0
      %v675 = vsel %vm197, %v656, 0
      %v678 = vsel %vm197, %v657, 0
      %v681 = vsel %vm197, %v658, 0
      %v684 = vsel %vm197, %v659, 0
      %v687 = vsel %vm197, %v660, 0
      %v689 = vsel %vm222, %v662, 0
      %v691 = vsel %vm222, %v664, 0
      %693 = vmatprep.subr.mxu0 0.0
      %694 = vmatpush1.msra.mxu0 0.0
      %695 = vmatprep.subr.mxu0 0.0
      %696 = vmatpush1.msra.mxu0 0.0
      %697 = vmatprep.subr.mxu0 0.0
      %698 = vmatpush1.msra.mxu0 0.0
      %699 = vmatprep.subr.mxu0 0.0
      %700 = vmatpush1.msra.mxu0 0.0
      %701 = vmatprep.subr.mxu0 0.0
      %702 = vmatpush1.msra.mxu0 0.0
      %703 = vmatprep.subr.mxu0 0.0
      %704 = vmatpush1.msra.mxu0 0.0
      %705 = vmatprep.subr.mxu0 0.0
      %706 = vmatpush1.msra.mxu0 0.0
      %707 = vmatprep.subr.mxu0 0.0
      %708 = vmatpush1.msra.mxu0 0.0
      %709 = vmatprep.subr.mxu0 0.0
      %710 = vmatpush1.msra.mxu0 0.0
      %711 = vmatprep.subr.mxu0 0.0
      %712 = vmatpush1.msra.mxu0 0.0
      %713 = vmatprep.subr.mxu0 0.0
      %714 = vmatpush1.msra.mxu0 0.0
      %715 = vmatprep.subr.mxu0 0.0
      %716 = vmatpush1.msra.mxu0 0.0
      %717 = vmatprep.subr.mxu0 0.0
      %718 = vmatpush1.msra.mxu0 0.0
      %719 = vmatprep.subr.mxu0 0.0
      %720 = vmatpush1.msra.mxu0 0.0
      %721 = vmatprep.subr.mxu0 0.0
      %722 = vmatpush1.msra.mxu0 0.0
      %723 = vmatprep.subr.mxu0 %v691
      %724 = vmatpush1.msra.mxu0 %v689
      %725 = vmatprep.subr.mxu0 0.0
      %726 = vmatpush2.msra.mxu0 0.0
      %727 = vmatprep.subr.mxu0 0.0
      %728 = vmatpush2.msra.mxu0 0.0
      %729 = vmatprep.subr.mxu0 0.0
      %730 = vmatpush2.msra.mxu0 0.0
      %731 = vmatprep.subr.mxu0 0.0
      %732 = vmatpush2.msra.mxu0 0.0
      %733 = vmatprep.subr.mxu0 0.0
      %734 = vmatpush2.msra.mxu0 0.0
      %735 = vmatprep.subr.mxu0 0.0
      %736 = vmatpush2.msra.mxu0 0.0
      %737 = vmatprep.subr.mxu0 0.0
      %738 = vmatpush2.msra.mxu0 0.0
      %739 = vmatprep.subr.mxu0 0.0
      %740 = vmatpush2.msra.mxu0 0.0
      %741 = vmatprep.subr.mxu0 0.0
      %742 = vmatpush2.msra.mxu0 0.0
      %743 = vmatprep.subr.mxu0 0.0
      %744 = vmatpush2.msra.mxu0 0.0
      %745 = vmatprep.subr.mxu0 0.0
      %746 = vmatpush2.msra.mxu0 0.0
      %747 = vmatprep.subr.mxu0 0.0
      %748 = vmatpush2.msra.mxu0 0.0
      %749 = vmatprep.subr.mxu0 0.0
      %750 = vmatpush2.msra.mxu0 0.0
      %751 = vmatprep.subr.mxu0 0.0
      %752 = vmatpush2.msra.mxu0 0.0
      %753 = vmatprep.subr.mxu0 0.0
      %754 = vmatpush2.msra.mxu0 0.0
      %755 = vmatprep.subr.mxu0 0.0
      %756 = vmatpush2.msra.mxu0 0.0
      %757 = vmatprep.mubr.f32.mxu0 0.0
      %758 = vmatmul.mubr.f32.gmra.mxu0 %v666
      %v759 = vpop.f32.mrf.mxu0
      %v760 = vadd.f32 0.0, %v759
      %v761 = vpop.f32.mrf.mxu0
      %v762 = vadd.f32 0.0, %v761
      %763 = vmatprep.mubr.f32.mxu0 0.0
      %764 = vmatmul.mubr.f32.gmra.mxu0 %v669
      %v765 = vpop.f32.mrf.mxu0
      %v766 = vadd.f32 0.0, %v765
      %v767 = vpop.f32.mrf.mxu0
      %v768 = vadd.f32 0.0, %v767
      %769 = vmatprep.mubr.f32.mxu0 0.0
      %770 = vmatmul.mubr.f32.gmra.mxu0 %v672
      %v771 = vpop.f32.mrf.mxu0
      %v772 = vadd.f32 0.0, %v771
      %v773 = vpop.f32.mrf.mxu0
      %v774 = vadd.f32 0.0, %v773
      %775 = vmatprep.mubr.f32.mxu0 0.0
      %776 = vmatmul.mubr.f32.gmra.mxu0 %v675
      %v777 = vpop.f32.mrf.mxu0
      %v778 = vadd.f32 0.0, %v777
      %v779 = vpop.f32.mrf.mxu0
      %v780 = vadd.f32 0.0, %v779
      %781 = vmatprep.mubr.f32.mxu0 0.0
      %782 = vmatmul.mubr.f32.gmra.mxu0 %v678
      %v783 = vpop.f32.mrf.mxu0
      %v784 = vadd.f32 0.0, %v783
      %v785 = vpop.f32.mrf.mxu0
      %v786 = vadd.f32 0.0, %v785
      %787 = vmatprep.mubr.f32.mxu0 0.0
      %788 = vmatmul.mubr.f32.gmra.mxu0 %v681
      %v789 = vpop.f32.mrf.mxu0
      %v790 = vadd.f32 0.0, %v789
      %v791 = vpop.f32.mrf.mxu0
      %v792 = vadd.f32 0.0, %v791
      %793 = vmatprep.mubr.f32.mxu0 0.0
      %794 = vmatmul.mubr.f32.gmra.mxu0 %v684
      %v795 = vpop.f32.mrf.mxu0
      %v796 = vadd.f32 0.0, %v795
      %v797 = vpop.f32.mrf.mxu0
      %v798 = vadd.f32 0.0, %v797
      %799 = vmatprep.mubr.f32.mxu0 0.0
      %800 = vmatmul.mubr.f32.gmra.mxu0 %v687
      %v801 = vpop.f32.mrf.mxu0
      %v802 = vadd.f32 0.0, %v801
      %v803 = vpop.f32.mrf.mxu0
      %v804 = vadd.f32 0.0, %v803
      %805 = vdwg.mxu0
      %v806 = vadd.f32 %v636, %v760
      %v807 = vadd.f32 %v637, %v762
      %v808 = vadd.f32 %v638, %v766
      %v809 = vadd.f32 %v639, %v768
      %v810 = vadd.f32 %v640, %v772
      %v811 = vadd.f32 %v641, %v774
      %v812 = vadd.f32 %v642, %v778
      %v813 = vadd.f32 %v643, %v780
      %v814 = vadd.f32 %v644, %v784
      %v815 = vadd.f32 %v645, %v786
      %v816 = vadd.f32 %v646, %v790
      %v817 = vadd.f32 %v647, %v792
      %v818 = vadd.f32 %v648, %v796
      %v819 = vadd.f32 %v649, %v798
      %v820 = vadd.f32 %v650, %v802
      %v821 = vadd.f32 %v651, %v804
      %s822 = scalar_lea.vmem %s163, 432
      %v823 = vld [vmem:[%s822] sm:$0xff]
      %v824 = vld [vmem:[%s822 + $0x10] sm:$0xff]
      %v825 = vld [vmem:[%s822 + $0x20] sm:$0xff]
      %v826 = vld [vmem:[%s822 + $0x30] sm:$0xff]
      %v827 = vld [vmem:[%s822 + $0x40] sm:$0xff]
      %v828 = vld [vmem:[%s822 + $0x50] sm:$0xff]
      %v829 = vld [vmem:[%s822 + $0x60] sm:$0xff]
      %v830 = vld [vmem:[%s822 + $0x70] sm:$0xff]
      %s831 = scalar_lea.vmem %s1, 32
      %v832 = vld [vmem:[%s831] sm:$0xff]
      %v834 = vcombine.high %v832, %v832
      %v836 = vsel %vm197, %v823, 0
      %v839 = vsel %vm197, %v824, 0
      %v842 = vsel %vm197, %v825, 0
      %v845 = vsel %vm197, %v826, 0
      %v848 = vsel %vm197, %v827, 0
      %v851 = vsel %vm197, %v828, 0
      %v854 = vsel %vm197, %v829, 0
      %v857 = vsel %vm197, %v830, 0
      %v859 = vsel %vm222, %v832, 0
      %v861 = vsel %vm222, %v834, 0
      %863 = vmatprep.subr.mxu0 0.0
      %864 = vmatpush1.msra.mxu0 0.0
      %865 = vmatprep.subr.mxu0 0.0
      %866 = vmatpush1.msra.mxu0 0.0
      %867 = vmatprep.subr.mxu0 0.0
      %868 = vmatpush1.msra.mxu0 0.0
      %869 = vmatprep.subr.mxu0 0.0
      %870 = vmatpush1.msra.mxu0 0.0
      %871 = vmatprep.subr.mxu0 0.0
      %872 = vmatpush1.msra.mxu0 0.0
      %873 = vmatprep.subr.mxu0 0.0
      %874 = vmatpush1.msra.mxu0 0.0
      %875 = vmatprep.subr.mxu0 0.0
      %876 = vmatpush1.msra.mxu0 0.0
      %877 = vmatprep.subr.mxu0 0.0
      %878 = vmatpush1.msra.mxu0 0.0
      %879 = vmatprep.subr.mxu0 0.0
      %880 = vmatpush1.msra.mxu0 0.0
      %881 = vmatprep.subr.mxu0 0.0
      %882 = vmatpush1.msra.mxu0 0.0
      %883 = vmatprep.subr.mxu0 0.0
      %884 = vmatpush1.msra.mxu0 0.0
      %885 = vmatprep.subr.mxu0 0.0
      %886 = vmatpush1.msra.mxu0 0.0
      %887 = vmatprep.subr.mxu0 0.0
      %888 = vmatpush1.msra.mxu0 0.0
      %889 = vmatprep.subr.mxu0 0.0
      %890 = vmatpush1.msra.mxu0 0.0
      %891 = vmatprep.subr.mxu0 0.0
      %892 = vmatpush1.msra.mxu0 0.0
      %893 = vmatprep.subr.mxu0 %v861
      %894 = vmatpush1.msra.mxu0 %v859
      %895 = vmatprep.subr.mxu0 0.0
      %896 = vmatpush2.msra.mxu0 0.0
      %897 = vmatprep.subr.mxu0 0.0
      %898 = vmatpush2.msra.mxu0 0.0
      %899 = vmatprep.subr.mxu0 0.0
      %900 = vmatpush2.msra.mxu0 0.0
      %901 = vmatprep.subr.mxu0 0.0
      %902 = vmatpush2.msra.mxu0 0.0
      %903 = vmatprep.subr.mxu0 0.0
      %904 = vmatpush2.msra.mxu0 0.0
      %905 = vmatprep.subr.mxu0 0.0
      %906 = vmatpush2.msra.mxu0 0.0
      %907 = vmatprep.subr.mxu0 0.0
      %908 = vmatpush2.msra.mxu0 0.0
      %909 = vmatprep.subr.mxu0 0.0
      %910 = vmatpush2.msra.mxu0 0.0
      %911 = vmatprep.subr.mxu0 0.0
      %912 = vmatpush2.msra.mxu0 0.0
      %913 = vmatprep.subr.mxu0 0.0
      %914 = vmatpush2.msra.mxu0 0.0
      %915 = vmatprep.subr.mxu0 0.0
      %916 = vmatpush2.msra.mxu0 0.0
      %917 = vmatprep.subr.mxu0 0.0
      %918 = vmatpush2.msra.mxu0 0.0
      %919 = vmatprep.subr.mxu0 0.0
      %920 = vmatpush2.msra.mxu0 0.0
      %921 = vmatprep.subr.mxu0 0.0
      %922 = vmatpush2.msra.mxu0 0.0
      %923 = vmatprep.subr.mxu0 0.0
      %924 = vmatpush2.msra.mxu0 0.0
      %925 = vmatprep.subr.mxu0 0.0
      %926 = vmatpush2.msra.mxu0 0.0
      %927 = vmatprep.mubr.f32.mxu0 0.0
      %928 = vmatmul.mubr.f32.gmra.mxu0 %v836
      %v929 = vpop.f32.mrf.mxu0
      %v930 = vadd.f32 0.0, %v929
      %v931 = vpop.f32.mrf.mxu0
      %v932 = vadd.f32 0.0, %v931
      %933 = vmatprep.mubr.f32.mxu0 0.0
      %934 = vmatmul.mubr.f32.gmra.mxu0 %v839
      %v935 = vpop.f32.mrf.mxu0
      %v936 = vadd.f32 0.0, %v935
      %v937 = vpop.f32.mrf.mxu0
      %v938 = vadd.f32 0.0, %v937
      %939 = vmatprep.mubr.f32.mxu0 0.0
      %940 = vmatmul.mubr.f32.gmra.mxu0 %v842
      %v941 = vpop.f32.mrf.mxu0
      %v942 = vadd.f32 0.0, %v941
      %v943 = vpop.f32.mrf.mxu0
      %v944 = vadd.f32 0.0, %v943
      %945 = vmatprep.mubr.f32.mxu0 0.0
      %946 = vmatmul.mubr.f32.gmra.mxu0 %v845
      %v947 = vpop.f32.mrf.mxu0
      %v948 = vadd.f32 0.0, %v947
      %v949 = vpop.f32.mrf.mxu0
      %v950 = vadd.f32 0.0, %v949
      %951 = vmatprep.mubr.f32.mxu0 0.0
      %952 = vmatmul.mubr.f32.gmra.mxu0 %v848
      %v953 = vpop.f32.mrf.mxu0
      %v954 = vadd.f32 0.0, %v953
      %v955 = vpop.f32.mrf.mxu0
      %v956 = vadd.f32 0.0, %v955
      %957 = vmatprep.mubr.f32.mxu0 0.0
      %958 = vmatmul.mubr.f32.gmra.mxu0 %v851
      %v959 = vpop.f32.mrf.mxu0
      %v960 = vadd.f32 0.0, %v959
      %v961 = vpop.f32.mrf.mxu0
      %v962 = vadd.f32 0.0, %v961
      %963 = vmatprep.mubr.f32.mxu0 0.0
      %964 = vmatmul.mubr.f32.gmra.mxu0 %v854
      %v965 = vpop.f32.mrf.mxu0
      %v966 = vadd.f32 0.0, %v965
      %v967 = vpop.f32.mrf.mxu0
      %v968 = vadd.f32 0.0, %v967
      %969 = vmatprep.mubr.f32.mxu0 0.0
      %970 = vmatmul.mubr.f32.gmra.mxu0 %v857
      %v971 = vpop.f32.mrf.mxu0
      %v972 = vadd.f32 0.0, %v971
      %v973 = vpop.f32.mrf.mxu0
      %v974 = vadd.f32 0.0, %v973
      %975 = vdwg.mxu0
      %v976 = vadd.f32 %v806, %v930
      %v977 = vadd.f32 %v807, %v932
      %v978 = vadd.f32 %v808, %v936
      %v979 = vadd.f32 %v809, %v938
      %v980 = vadd.f32 %v810, %v942
      %v981 = vadd.f32 %v811, %v944
      %v982 = vadd.f32 %v812, %v948
      %v983 = vadd.f32 %v813, %v950
      %v984 = vadd.f32 %v814, %v954
      %v985 = vadd.f32 %v815, %v956
      %v986 = vadd.f32 %v816, %v960
      %v987 = vadd.f32 %v817, %v962
      %v988 = vadd.f32 %v818, %v966
      %v989 = vadd.f32 %v819, %v968
      %v990 = vadd.f32 %v820, %v972
      %v991 = vadd.f32 %v821, %v974
      %v992 = vld [vmem:[%s652 + $0x1] sm:$0xff]
      %v993 = vld [vmem:[%s652 + $0x11] sm:$0xff]
      %v994 = vld [vmem:[%s652 + $0x21] sm:$0xff]
      %v995 = vld [vmem:[%s652 + $0x31] sm:$0xff]
      %v996 = vld [vmem:[%s652 + $0x41] sm:$0xff]
      %v997 = vld [vmem:[%s652 + $0x51] sm:$0xff]
      %v998 = vld [vmem:[%s652 + $0x61] sm:$0xff]
      %v999 = vld [vmem:[%s652 + $0x71] sm:$0xff]
      %s1000 = scalar_lea.vmem %s1, 40
      %v1001 = vld [vmem:[%s1000] sm:$0xff]
      %v1003 = vcombine.high %v1001, %v1001
      %v1005 = vsel %vm197, %v992, 0
      %v1008 = vsel %vm197, %v993, 0
      %v1011 = vsel %vm197, %v994, 0
      %v1014 = vsel %vm197, %v995, 0
      %v1017 = vsel %vm197, %v996, 0
      %v1020 = vsel %vm197, %v997, 0
      %v1023 = vsel %vm197, %v998, 0
      %v1026 = vsel %vm197, %v999, 0
      %v1028 = vsel %vm222, %v1001, 0
      %v1030 = vsel %vm222, %v1003, 0
      %1032 = vmatprep.subr.mxu0 0.0
      %1033 = vmatpush1.msra.mxu0 0.0
      %1034 = vmatprep.subr.mxu0 0.0
      %1035 = vmatpush1.msra.mxu0 0.0
      %1036 = vmatprep.subr.mxu0 0.0
      %1037 = vmatpush1.msra.mxu0 0.0
      %1038 = vmatprep.subr.mxu0 0.0
      %1039 = vmatpush1.msra.mxu0 0.0
      %1040 = vmatprep.subr.mxu0 0.0
      %1041 = vmatpush1.msra.mxu0 0.0
      %1042 = vmatprep.subr.mxu0 0.0
      %1043 = vmatpush1.msra.mxu0 0.0
      %1044 = vmatprep.subr.mxu0 0.0
      %1045 = vmatpush1.msra.mxu0 0.0
      %1046 = vmatprep.subr.mxu0 0.0
      %1047 = vmatpush1.msra.mxu0 0.0
      %1048 = vmatprep.subr.mxu0 0.0
      %1049 = vmatpush1.msra.mxu0 0.0
      %1050 = vmatprep.subr.mxu0 0.0
      %1051 = vmatpush1.msra.mxu0 0.0
      %1052 = vmatprep.subr.mxu0 0.0
      %1053 = vmatpush1.msra.mxu0 0.0
      %1054 = vmatprep.subr.mxu0 0.0
      %1055 = vmatpush1.msra.mxu0 0.0
      %1056 = vmatprep.subr.mxu0 0.0
      %1057 = vmatpush1.msra.mxu0 0.0
      %1058 = vmatprep.subr.mxu0 0.0
      %1059 = vmatpush1.msra.mxu0 0.0
      %1060 = vmatprep.subr.mxu0 0.0
      %1061 = vmatpush1.msra.mxu0 0.0
      %1062 = vmatprep.subr.mxu0 %v1030
      %1063 = vmatpush1.msra.mxu0 %v1028
      %1064 = vmatprep.subr.mxu0 0.0
      %1065 = vmatpush2.msra.mxu0 0.0
      %1066 = vmatprep.subr.mxu0 0.0
      %1067 = vmatpush2.msra.mxu0 0.0
      %1068 = vmatprep.subr.mxu0 0.0
      %1069 = vmatpush2.msra.mxu0 0.0
      %1070 = vmatprep.subr.mxu0 0.0
      %1071 = vmatpush2.msra.mxu0 0.0
      %1072 = vmatprep.subr.mxu0 0.0
      %1073 = vmatpush2.msra.mxu0 0.0
      %1074 = vmatprep.subr.mxu0 0.0
      %1075 = vmatpush2.msra.mxu0 0.0
      %1076 = vmatprep.subr.mxu0 0.0
      %1077 = vmatpush2.msra.mxu0 0.0
      %1078 = vmatprep.subr.mxu0 0.0
      %1079 = vmatpush2.msra.mxu0 0.0
      %1080 = vmatprep.subr.mxu0 0.0
      %1081 = vmatpush2.msra.mxu0 0.0
      %1082 = vmatprep.subr.mxu0 0.0
      %1083 = vmatpush2.msra.mxu0 0.0
      %1084 = vmatprep.subr.mxu0 0.0
      %1085 = vmatpush2.msra.mxu0 0.0
      %1086 = vmatprep.subr.mxu0 0.0
      %1087 = vmatpush2.msra.mxu0 0.0
      %1088 = vmatprep.subr.mxu0 0.0
      %1089 = vmatpush2.msra.mxu0 0.0
      %1090 = vmatprep.subr.mxu0 0.0
      %1091 = vmatpush2.msra.mxu0 0.0
      %1092 = vmatprep.subr.mxu0 0.0
      %1093 = vmatpush2.msra.mxu0 0.0
      %1094 = vmatprep.subr.mxu0 0.0
      %1095 = vmatpush2.msra.mxu0 0.0
      %1096 = vmatprep.mubr.f32.mxu0 0.0
      %1097 = vmatmul.mubr.f32.gmra.mxu0 %v1005
      %v1098 = vpop.f32.mrf.mxu0
      %v1099 = vadd.f32 0.0, %v1098
      %v1100 = vpop.f32.mrf.mxu0
      %v1101 = vadd.f32 0.0, %v1100
      %1102 = vmatprep.mubr.f32.mxu0 0.0
      %1103 = vmatmul.mubr.f32.gmra.mxu0 %v1008
      %v1104 = vpop.f32.mrf.mxu0
      %v1105 = vadd.f32 0.0, %v1104
      %v1106 = vpop.f32.mrf.mxu0
      %v1107 = vadd.f32 0.0, %v1106
      %1108 = vmatprep.mubr.f32.mxu0 0.0
      %1109 = vmatmul.mubr.f32.gmra.mxu0 %v1011
      %v1110 = vpop.f32.mrf.mxu0
      %v1111 = vadd.f32 0.0, %v1110
      %v1112 = vpop.f32.mrf.mxu0
      %v1113 = vadd.f32 0.0, %v1112
      %1114 = vmatprep.mubr.f32.mxu0 0.0
      %1115 = vmatmul.mubr.f32.gmra.mxu0 %v1014
      %v1116 = vpop.f32.mrf.mxu0
      %v1117 = vadd.f32 0.0, %v1116
      %v1118 = vpop.f32.mrf.mxu0
      %v1119 = vadd.f32 0.0, %v1118
      %1120 = vmatprep.mubr.f32.mxu0 0.0
      %1121 = vmatmul.mubr.f32.gmra.mxu0 %v1017
      %v1122 = vpop.f32.mrf.mxu0
      %v1123 = vadd.f32 0.0, %v1122
      %v1124 = vpop.f32.mrf.mxu0
      %v1125 = vadd.f32 0.0, %v1124
      %1126 = vmatprep.mubr.f32.mxu0 0.0
      %1127 = vmatmul.mubr.f32.gmra.mxu0 %v1020
      %v1128 = vpop.f32.mrf.mxu0
      %v1129 = vadd.f32 0.0, %v1128
      %v1130 = vpop.f32.mrf.mxu0
      %v1131 = vadd.f32 0.0, %v1130
      %1132 = vmatprep.mubr.f32.mxu0 0.0
      %1133 = vmatmul.mubr.f32.gmra.mxu0 %v1023
      %v1134 = vpop.f32.mrf.mxu0
      %v1135 = vadd.f32 0.0, %v1134
      %v1136 = vpop.f32.mrf.mxu0
      %v1137 = vadd.f32 0.0, %v1136
      %1138 = vmatprep.mubr.f32.mxu0 0.0
      %1139 = vmatmul.mubr.f32.gmra.mxu0 %v1026
      %v1140 = vpop.f32.mrf.mxu0
      %v1141 = vadd.f32 0.0, %v1140
      %v1142 = vpop.f32.mrf.mxu0
      %v1143 = vadd.f32 0.0, %v1142
      %1144 = vdwg.mxu0
      %v1145 = vadd.f32 %v976, %v1099
      %v1146 = vadd.f32 %v977, %v1101
      %v1147 = vadd.f32 %v978, %v1105
      %v1148 = vadd.f32 %v979, %v1107
      %v1149 = vadd.f32 %v980, %v1111
      %v1150 = vadd.f32 %v981, %v1113
      %v1151 = vadd.f32 %v982, %v1117
      %v1152 = vadd.f32 %v983, %v1119
      %v1153 = vadd.f32 %v984, %v1123
      %v1154 = vadd.f32 %v985, %v1125
      %v1155 = vadd.f32 %v986, %v1129
      %v1156 = vadd.f32 %v987, %v1131
      %v1157 = vadd.f32 %v988, %v1135
      %v1158 = vadd.f32 %v989, %v1137
      %v1159 = vadd.f32 %v990, %v1141
      %v1160 = vadd.f32 %v991, %v1143
      %s1161 = scalar_lea.vmem %s163, 16
      %v1162 = vld [vmem:[%s1161] sm:$0xff]
      %v1163 = vld [vmem:[%s1161 + $0x10] sm:$0xff]
      %v1164 = vld [vmem:[%s1161 + $0x20] sm:$0xff]
      %v1165 = vld [vmem:[%s1161 + $0x30] sm:$0xff]
      %v1166 = vld [vmem:[%s1161 + $0x40] sm:$0xff]
      %v1167 = vld [vmem:[%s1161 + $0x50] sm:$0xff]
      %v1168 = vld [vmem:[%s1161 + $0x60] sm:$0xff]
      %v1169 = vld [vmem:[%s1161 + $0x70] sm:$0xff]
      %s1170 = scalar_lea.vmem %s1, 48
      %v1171 = vld [vmem:[%s1170] sm:$0xff]
      %v1173 = vcombine.high %v1171, %v1171
      %v1175 = vsel %vm197, %v1162, 0
      %v1178 = vsel %vm197, %v1163, 0
      %v1181 = vsel %vm197, %v1164, 0
      %v1184 = vsel %vm197, %v1165, 0
      %v1187 = vsel %vm197, %v1166, 0
      %v1190 = vsel %vm197, %v1167, 0
      %v1193 = vsel %vm197, %v1168, 0
      %v1196 = vsel %vm197, %v1169, 0
      %v1198 = vsel %vm222, %v1171, 0
      %v1200 = vsel %vm222, %v1173, 0
      %1202 = vmatprep.subr.mxu0 0.0
      %1203 = vmatpush1.msra.mxu0 0.0
      %1204 = vmatprep.subr.mxu0 0.0
      %1205 = vmatpush1.msra.mxu0 0.0
      %1206 = vmatprep.subr.mxu0 0.0
      %1207 = vmatpush1.msra.mxu0 0.0
      %1208 = vmatprep.subr.mxu0 0.0
      %1209 = vmatpush1.msra.mxu0 0.0
      %1210 = vmatprep.subr.mxu0 0.0
      %1211 = vmatpush1.msra.mxu0 0.0
      %1212 = vmatprep.subr.mxu0 0.0
      %1213 = vmatpush1.msra.mxu0 0.0
      %1214 = vmatprep.subr.mxu0 0.0
      %1215 = vmatpush1.msra.mxu0 0.0
      %1216 = vmatprep.subr.mxu0 0.0
      %1217 = vmatpush1.msra.mxu0 0.0
      %1218 = vmatprep.subr.mxu0 0.0
      %1219 = vmatpush1.msra.mxu0 0.0
      %1220 = vmatprep.subr.mxu0 0.0
      %1221 = vmatpush1.msra.mxu0 0.0
      %1222 = vmatprep.subr.mxu0 0.0
      %1223 = vmatpush1.msra.mxu0 0.0
      %1224 = vmatprep.subr.mxu0 0.0
      %1225 = vmatpush1.msra.mxu0 0.0
      %1226 = vmatprep.subr.mxu0 0.0
      %1227 = vmatpush1.msra.mxu0 0.0
      %1228 = vmatprep.subr.mxu0 0.0
      %1229 = vmatpush1.msra.mxu0 0.0
      %1230 = vmatprep.subr.mxu0 0.0
      %1231 = vmatpush1.msra.mxu0 0.0
      %1232 = vmatprep.subr.mxu0 %v1200
      %1233 = vmatpush1.msra.mxu0 %v1198
      %1234 = vmatprep.subr.mxu0 0.0
      %1235 = vmatpush2.msra.mxu0 0.0
      %1236 = vmatprep.subr.mxu0 0.0
      %1237 = vmatpush2.msra.mxu0 0.0
      %1238 = vmatprep.subr.mxu0 0.0
      %1239 = vmatpush2.msra.mxu0 0.0
      %1240 = vmatprep.subr.mxu0 0.0
      %1241 = vmatpush2.msra.mxu0 0.0
      %1242 = vmatprep.subr.mxu0 0.0
      %1243 = vmatpush2.msra.mxu0 0.0
      %1244 = vmatprep.subr.mxu0 0.0
      %1245 = vmatpush2.msra.mxu0 0.0
      %1246 = vmatprep.subr.mxu0 0.0
      %1247 = vmatpush2.msra.mxu0 0.0
      %1248 = vmatprep.subr.mxu0 0.0
      %1249 = vmatpush2.msra.mxu0 0.0
      %1250 = vmatprep.subr.mxu0 0.0
      %1251 = vmatpush2.msra.mxu0 0.0
      %1252 = vmatprep.subr.mxu0 0.0
      %1253 = vmatpush2.msra.mxu0 0.0
      %1254 = vmatprep.subr.mxu0 0.0
      %1255 = vmatpush2.msra.mxu0 0.0
      %1256 = vmatprep.subr.mxu0 0.0
      %1257 = vmatpush2.msra.mxu0 0.0
      %1258 = vmatprep.subr.mxu0 0.0
      %1259 = vmatpush2.msra.mxu0 0.0
      %1260 = vmatprep.subr.mxu0 0.0
      %1261 = vmatpush2.msra.mxu0 0.0
      %1262 = vmatprep.subr.mxu0 0.0
      %1263 = vmatpush2.msra.mxu0 0.0
      %1264 = vmatprep.subr.mxu0 0.0
      %1265 = vmatpush2.msra.mxu0 0.0
      %1266 = vmatprep.mubr.f32.mxu0 0.0
      %1267 = vmatmul.mubr.f32.gmra.mxu0 %v1175
      %v1268 = vpop.f32.mrf.mxu0
      %v1269 = vadd.f32 0.0, %v1268
      %v1270 = vpop.f32.mrf.mxu0
      %v1271 = vadd.f32 0.0, %v1270
      %1272 = vmatprep.mubr.f32.mxu0 0.0
      %1273 = vmatmul.mubr.f32.gmra.mxu0 %v1178
      %v1274 = vpop.f32.mrf.mxu0
      %v1275 = vadd.f32 0.0, %v1274
      %v1276 = vpop.f32.mrf.mxu0
      %v1277 = vadd.f32 0.0, %v1276
      %1278 = vmatprep.mubr.f32.mxu0 0.0
      %1279 = vmatmul.mubr.f32.gmra.mxu0 %v1181
      %v1280 = vpop.f32.mrf.mxu0
      %v1281 = vadd.f32 0.0, %v1280
      %v1282 = vpop.f32.mrf.mxu0
      %v1283 = vadd.f32 0.0, %v1282
      %1284 = vmatprep.mubr.f32.mxu0 0.0
      %1285 = vmatmul.mubr.f32.gmra.mxu0 %v1184
      %v1286 = vpop.f32.mrf.mxu0
      %v1287 = vadd.f32 0.0, %v1286
      %v1288 = vpop.f32.mrf.mxu0
      %v1289 = vadd.f32 0.0, %v1288
      %1290 = vmatprep.mubr.f32.mxu0 0.0
      %1291 = vmatmul.mubr.f32.gmra.mxu0 %v1187
      %v1292 = vpop.f32.mrf.mxu0
      %v1293 = vadd.f32 0.0, %v1292
      %v1294 = vpop.f32.mrf.mxu0
      %v1295 = vadd.f32 0.0, %v1294
      %1296 = vmatprep.mubr.f32.mxu0 0.0
      %1297 = vmatmul.mubr.f32.gmra.mxu0 %v1190
      %v1298 = vpop.f32.mrf.mxu0
      %v1299 = vadd.f32 0.0, %v1298
      %v1300 = vpop.f32.mrf.mxu0
      %v1301 = vadd.f32 0.0, %v1300
      %1302 = vmatprep.mubr.f32.mxu0 0.0
      %1303 = vmatmul.mubr.f32.gmra.mxu0 %v1193
      %v1304 = vpop.f32.mrf.mxu0
      %v1305 = vadd.f32 0.0, %v1304
      %v1306 = vpop.f32.mrf.mxu0
      %v1307 = vadd.f32 0.0, %v1306
      %1308 = vmatprep.mubr.f32.mxu0 0.0
      %1309 = vmatmul.mubr.f32.gmra.mxu0 %v1196
      %v1310 = vpop.f32.mrf.mxu0
      %v1311 = vadd.f32 0.0, %v1310
      %v1312 = vpop.f32.mrf.mxu0
      %v1313 = vadd.f32 0.0, %v1312
      %1314 = vdwg.mxu0
      %v1315 = vadd.f32 %v1145, %v1269
      %v1316 = vadd.f32 %v1146, %v1271
      %v1317 = vadd.f32 %v1147, %v1275
      %v1318 = vadd.f32 %v1148, %v1277
      %v1319 = vadd.f32 %v1149, %v1281
      %v1320 = vadd.f32 %v1150, %v1283
      %v1321 = vadd.f32 %v1151, %v1287
      %v1322 = vadd.f32 %v1152, %v1289
      %v1323 = vadd.f32 %v1153, %v1293
      %v1324 = vadd.f32 %v1154, %v1295
      %v1325 = vadd.f32 %v1155, %v1299
      %v1326 = vadd.f32 %v1156, %v1301
      %v1327 = vadd.f32 %v1157, %v1305
      %v1328 = vadd.f32 %v1158, %v1307
      %v1329 = vadd.f32 %v1159, %v1311
      %v1330 = vadd.f32 %v1160, %v1313
      %s1331 = scalar_lea.vmem %s163, 160
      %v1332 = vld [vmem:[%s1331] sm:$0xff]
      %v1333 = vld [vmem:[%s1331 + $0x10] sm:$0xff]
      %v1334 = vld [vmem:[%s1331 + $0x20] sm:$0xff]
      %v1335 = vld [vmem:[%s1331 + $0x30] sm:$0xff]
      %v1336 = vld [vmem:[%s1331 + $0x40] sm:$0xff]
      %v1337 = vld [vmem:[%s1331 + $0x50] sm:$0xff]
      %v1338 = vld [vmem:[%s1331 + $0x60] sm:$0xff]
      %v1339 = vld [vmem:[%s1331 + $0x70] sm:$0xff]
      %s1340 = scalar_lea.vmem %s1, 56
      %v1341 = vld [vmem:[%s1340] sm:$0xff]
      %v1343 = vcombine.high %v1341, %v1341
      %v1345 = vsel %vm197, %v1332, 0
      %v1348 = vsel %vm197, %v1333, 0
      %v1351 = vsel %vm197, %v1334, 0
      %v1354 = vsel %vm197, %v1335, 0
      %v1357 = vsel %vm197, %v1336, 0
      %v1360 = vsel %vm197, %v1337, 0
      %v1363 = vsel %vm197, %v1338, 0
      %v1366 = vsel %vm197, %v1339, 0
      %v1368 = vsel %vm222, %v1341, 0
      %v1370 = vsel %vm222, %v1343, 0
      %1372 = vmatprep.subr.mxu0 0.0
      %1373 = vmatpush1.msra.mxu0 0.0
      %1374 = vmatprep.subr.mxu0 0.0
      %1375 = vmatpush1.msra.mxu0 0.0
      %1376 = vmatprep.subr.mxu0 0.0
      %1377 = vmatpush1.msra.mxu0 0.0
      %1378 = vmatprep.subr.mxu0 0.0
      %1379 = vmatpush1.msra.mxu0 0.0
      %1380 = vmatprep.subr.mxu0 0.0
      %1381 = vmatpush1.msra.mxu0 0.0
      %1382 = vmatprep.subr.mxu0 0.0
      %1383 = vmatpush1.msra.mxu0 0.0
      %1384 = vmatprep.subr.mxu0 0.0
      %1385 = vmatpush1.msra.mxu0 0.0
      %1386 = vmatprep.subr.mxu0 0.0
      %1387 = vmatpush1.msra.mxu0 0.0
      %1388 = vmatprep.subr.mxu0 0.0
      %1389 = vmatpush1.msra.mxu0 0.0
      %1390 = vmatprep.subr.mxu0 0.0
      %1391 = vmatpush1.msra.mxu0 0.0
      %1392 = vmatprep.subr.mxu0 0.0
      %1393 = vmatpush1.msra.mxu0 0.0
      %1394 = vmatprep.subr.mxu0 0.0
      %1395 = vmatpush1.msra.mxu0 0.0
      %1396 = vmatprep.subr.mxu0 0.0
      %1397 = vmatpush1.msra.mxu0 0.0
      %1398 = vmatprep.subr.mxu0 0.0
      %1399 = vmatpush1.msra.mxu0 0.0
      %1400 = vmatprep.subr.mxu0 0.0
      %1401 = vmatpush1.msra.mxu0 0.0
      %1402 = vmatprep.subr.mxu0 %v1370
      %1403 = vmatpush1.msra.mxu0 %v1368
      %1404 = vmatprep.subr.mxu0 0.0
      %1405 = vmatpush2.msra.mxu0 0.0
      %1406 = vmatprep.subr.mxu0 0.0
      %1407 = vmatpush2.msra.mxu0 0.0
      %1408 = vmatprep.subr.mxu0 0.0
      %1409 = vmatpush2.msra.mxu0 0.0
      %1410 = vmatprep.subr.mxu0 0.0
      %1411 = vmatpush2.msra.mxu0 0.0
      %1412 = vmatprep.subr.mxu0 0.0
      %1413 = vmatpush2.msra.mxu0 0.0
      %1414 = vmatprep.subr.mxu0 0.0
      %1415 = vmatpush2.msra.mxu0 0.0
      %1416 = vmatprep.subr.mxu0 0.0
      %1417 = vmatpush2.msra.mxu0 0.0
      %1418 = vmatprep.subr.mxu0 0.0
      %1419 = vmatpush2.msra.mxu0 0.0
      %1420 = vmatprep.subr.mxu0 0.0
      %1421 = vmatpush2.msra.mxu0 0.0
      %1422 = vmatprep.subr.mxu0 0.0
      %1423 = vmatpush2.msra.mxu0 0.0
      %1424 = vmatprep.subr.mxu0 0.0
      %1425 = vmatpush2.msra.mxu0 0.0
      %1426 = vmatprep.subr.mxu0 0.0
      %1427 = vmatpush2.msra.mxu0 0.0
      %1428 = vmatprep.subr.mxu0 0.0
      %1429 = vmatpush2.msra.mxu0 0.0
      %1430 = vmatprep.subr.mxu0 0.0
      %1431 = vmatpush2.msra.mxu0 0.0
      %1432 = vmatprep.subr.mxu0 0.0
      %1433 = vmatpush2.msra.mxu0 0.0
      %1434 = vmatprep.subr.mxu0 0.0
      %1435 = vmatpush2.msra.mxu0 0.0
      %1436 = vmatprep.mubr.f32.mxu0 0.0
      %1437 = vmatmul.mubr.f32.gmra.mxu0 %v1345
      %v1438 = vpop.f32.mrf.mxu0
      %v1439 = vadd.f32 0.0, %v1438
      %v1440 = vpop.f32.mrf.mxu0
      %v1441 = vadd.f32 0.0, %v1440
      %1442 = vmatprep.mubr.f32.mxu0 0.0
      %1443 = vmatmul.mubr.f32.gmra.mxu0 %v1348
      %v1444 = vpop.f32.mrf.mxu0
      %v1445 = vadd.f32 0.0, %v1444
      %v1446 = vpop.f32.mrf.mxu0
      %v1447 = vadd.f32 0.0, %v1446
      %1448 = vmatprep.mubr.f32.mxu0 0.0
      %1449 = vmatmul.mubr.f32.gmra.mxu0 %v1351
      %v1450 = vpop.f32.mrf.mxu0
      %v1451 = vadd.f32 0.0, %v1450
      %v1452 = vpop.f32.mrf.mxu0
      %v1453 = vadd.f32 0.0, %v1452
      %1454 = vmatprep.mubr.f32.mxu0 0.0
      %1455 = vmatmul.mubr.f32.gmra.mxu0 %v1354
      %v1456 = vpop.f32.mrf.mxu0
      %v1457 = vadd.f32 0.0, %v1456
      %v1458 = vpop.f32.mrf.mxu0
      %v1459 = vadd.f32 0.0, %v1458
      %1460 = vmatprep.mubr.f32.mxu0 0.0
      %1461 = vmatmul.mubr.f32.gmra.mxu0 %v1357
      %v1462 = vpop.f32.mrf.mxu0
      %v1463 = vadd.f32 0.0, %v1462
      %v1464 = vpop.f32.mrf.mxu0
      %v1465 = vadd.f32 0.0, %v1464
      %1466 = vmatprep.mubr.f32.mxu0 0.0
      %1467 = vmatmul.mubr.f32.gmra.mxu0 %v1360
      %v1468 = vpop.f32.mrf.mxu0
      %v1469 = vadd.f32 0.0, %v1468
      %v1470 = vpop.f32.mrf.mxu0
      %v1471 = vadd.f32 0.0, %v1470
      %1472 = vmatprep.mubr.f32.mxu0 0.0
      %1473 = vmatmul.mubr.f32.gmra.mxu0 %v1363
      %v1474 = vpop.f32.mrf.mxu0
      %v1475 = vadd.f32 0.0, %v1474
      %v1476 = vpop.f32.mrf.mxu0
      %v1477 = vadd.f32 0.0, %v1476
      %1478 = vmatprep.mubr.f32.mxu0 0.0
      %1479 = vmatmul.mubr.f32.gmra.mxu0 %v1366
      %v1480 = vpop.f32.mrf.mxu0
      %v1481 = vadd.f32 0.0, %v1480
      %v1482 = vpop.f32.mrf.mxu0
      %v1483 = vadd.f32 0.0, %v1482
      %1484 = vdwg.mxu0
      %v1485 = vadd.f32 %v1315, %v1439
      %v1486 = vadd.f32 %v1316, %v1441
      %v1487 = vadd.f32 %v1317, %v1445
      %v1488 = vadd.f32 %v1318, %v1447
      %v1489 = vadd.f32 %v1319, %v1451
      %v1490 = vadd.f32 %v1320, %v1453
      %v1491 = vadd.f32 %v1321, %v1457
      %v1492 = vadd.f32 %v1322, %v1459
      %v1493 = vadd.f32 %v1323, %v1463
      %v1494 = vadd.f32 %v1324, %v1465
      %v1495 = vadd.f32 %v1325, %v1469
      %v1496 = vadd.f32 %v1326, %v1471
      %v1497 = vadd.f32 %v1327, %v1475
      %v1498 = vadd.f32 %v1328, %v1477
      %v1499 = vadd.f32 %v1329, %v1481
      %v1500 = vadd.f32 %v1330, %v1483
      %v1501 = vld [vmem:[%s1161 + $0x1] sm:$0xff]
      %v1502 = vld [vmem:[%s1161 + $0x11] sm:$0xff]
      %v1503 = vld [vmem:[%s1161 + $0x21] sm:$0xff]
      %v1504 = vld [vmem:[%s1161 + $0x31] sm:$0xff]
      %v1505 = vld [vmem:[%s1161 + $0x41] sm:$0xff]
      %v1506 = vld [vmem:[%s1161 + $0x51] sm:$0xff]
      %v1507 = vld [vmem:[%s1161 + $0x61] sm:$0xff]
      %v1508 = vld [vmem:[%s1161 + $0x71] sm:$0xff]
      %s1509 = scalar_lea.vmem %s1, 64
      %v1510 = vld [vmem:[%s1509] sm:$0xff]
      %v1512 = vcombine.high %v1510, %v1510
      %v1514 = vsel %vm197, %v1501, 0
      %v1517 = vsel %vm197, %v1502, 0
      %v1520 = vsel %vm197, %v1503, 0
      %v1523 = vsel %vm197, %v1504, 0
      %v1526 = vsel %vm197, %v1505, 0
      %v1529 = vsel %vm197, %v1506, 0
      %v1532 = vsel %vm197, %v1507, 0
      %v1535 = vsel %vm197, %v1508, 0
      %v1537 = vsel %vm222, %v1510, 0
      %v1539 = vsel %vm222, %v1512, 0
      %1541 = vmatprep.subr.mxu0 0.0
      %1542 = vmatpush1.msra.mxu0 0.0
      %1543 = vmatprep.subr.mxu0 0.0
      %1544 = vmatpush1.msra.mxu0 0.0
      %1545 = vmatprep.subr.mxu0 0.0
      %1546 = vmatpush1.msra.mxu0 0.0
      %1547 = vmatprep.subr.mxu0 0.0
      %1548 = vmatpush1.msra.mxu0 0.0
      %1549 = vmatprep.subr.mxu0 0.0
      %1550 = vmatpush1.msra.mxu0 0.0
      %1551 = vmatprep.subr.mxu0 0.0
      %1552 = vmatpush1.msra.mxu0 0.0
      %1553 = vmatprep.subr.mxu0 0.0
      %1554 = vmatpush1.msra.mxu0 0.0
      %1555 = vmatprep.subr.mxu0 0.0
      %1556 = vmatpush1.msra.mxu0 0.0
      %1557 = vmatprep.subr.mxu0 0.0
      %1558 = vmatpush1.msra.mxu0 0.0
      %1559 = vmatprep.subr.mxu0 0.0
      %1560 = vmatpush1.msra.mxu0 0.0
      %1561 = vmatprep.subr.mxu0 0.0
      %1562 = vmatpush1.msra.mxu0 0.0
      %1563 = vmatprep.subr.mxu0 0.0
      %1564 = vmatpush1.msra.mxu0 0.0
      %1565 = vmatprep.subr.mxu0 0.0
      %1566 = vmatpush1.msra.mxu0 0.0
      %1567 = vmatprep.subr.mxu0 0.0
      %1568 = vmatpush1.msra.mxu0 0.0
      %1569 = vmatprep.subr.mxu0 0.0
      %1570 = vmatpush1.msra.mxu0 0.0
      %1571 = vmatprep.subr.mxu0 %v1539
      %1572 = vmatpush1.msra.mxu0 %v1537
      %1573 = vmatprep.subr.mxu0 0.0
      %1574 = vmatpush2.msra.mxu0 0.0
      %1575 = vmatprep.subr.mxu0 0.0
      %1576 = vmatpush2.msra.mxu0 0.0
      %1577 = vmatprep.subr.mxu0 0.0
      %1578 = vmatpush2.msra.mxu0 0.0
      %1579 = vmatprep.subr.mxu0 0.0
      %1580 = vmatpush2.msra.mxu0 0.0
      %1581 = vmatprep.subr.mxu0 0.0
      %1582 = vmatpush2.msra.mxu0 0.0
      %1583 = vmatprep.subr.mxu0 0.0
      %1584 = vmatpush2.msra.mxu0 0.0
      %1585 = vmatprep.subr.mxu0 0.0
      %1586 = vmatpush2.msra.mxu0 0.0
      %1587 = vmatprep.subr.mxu0 0.0
      %1588 = vmatpush2.msra.mxu0 0.0
      %1589 = vmatprep.subr.mxu0 0.0
      %1590 = vmatpush2.msra.mxu0 0.0
      %1591 = vmatprep.subr.mxu0 0.0
      %1592 = vmatpush2.msra.mxu0 0.0
      %1593 = vmatprep.subr.mxu0 0.0
      %1594 = vmatpush2.msra.mxu0 0.0
      %1595 = vmatprep.subr.mxu0 0.0
      %1596 = vmatpush2.msra.mxu0 0.0
      %1597 = vmatprep.subr.mxu0 0.0
      %1598 = vmatpush2.msra.mxu0 0.0
      %1599 = vmatprep.subr.mxu0 0.0
      %1600 = vmatpush2.msra.mxu0 0.0
      %1601 = vmatprep.subr.mxu0 0.0
      %1602 = vmatpush2.msra.mxu0 0.0
      %1603 = vmatprep.subr.mxu0 0.0
      %1604 = vmatpush2.msra.mxu0 0.0
      %1605 = vmatprep.mubr.f32.mxu0 0.0
      %1606 = vmatmul.mubr.f32.gmra.mxu0 %v1514
      %v1607 = vpop.f32.mrf.mxu0
      %v1608 = vadd.f32 0.0, %v1607
      %v1609 = vpop.f32.mrf.mxu0
      %v1610 = vadd.f32 0.0, %v1609
      %1611 = vmatprep.mubr.f32.mxu0 0.0
      %1612 = vmatmul.mubr.f32.gmra.mxu0 %v1517
      %v1613 = vpop.f32.mrf.mxu0
      %v1614 = vadd.f32 0.0, %v1613
      %v1615 = vpop.f32.mrf.mxu0
      %v1616 = vadd.f32 0.0, %v1615
      %1617 = vmatprep.mubr.f32.mxu0 0.0
      %1618 = vmatmul.mubr.f32.gmra.mxu0 %v1520
      %v1619 = vpop.f32.mrf.mxu0
      %v1620 = vadd.f32 0.0, %v1619
      %v1621 = vpop.f32.mrf.mxu0
      %v1622 = vadd.f32 0.0, %v1621
      %1623 = vmatprep.mubr.f32.mxu0 0.0
      %1624 = vmatmul.mubr.f32.gmra.mxu0 %v1523
      %v1625 = vpop.f32.mrf.mxu0
      %v1626 = vadd.f32 0.0, %v1625
      %v1627 = vpop.f32.mrf.mxu0
      %v1628 = vadd.f32 0.0, %v1627
      %1629 = vmatprep.mubr.f32.mxu0 0.0
      %1630 = vmatmul.mubr.f32.gmra.mxu0 %v1526
      %v1631 = vpop.f32.mrf.mxu0
      %v1632 = vadd.f32 0.0, %v1631
      %v1633 = vpop.f32.mrf.mxu0
      %v1634 = vadd.f32 0.0, %v1633
      %1635 = vmatprep.mubr.f32.mxu0 0.0
      %1636 = vmatmul.mubr.f32.gmra.mxu0 %v1529
      %v1637 = vpop.f32.mrf.mxu0
      %v1638 = vadd.f32 0.0, %v1637
      %v1639 = vpop.f32.mrf.mxu0
      %v1640 = vadd.f32 0.0, %v1639
      %1641 = vmatprep.mubr.f32.mxu0 0.0
      %1642 = vmatmul.mubr.f32.gmra.mxu0 %v1532
      %v1643 = vpop.f32.mrf.mxu0
      %v1644 = vadd.f32 0.0, %v1643
      %v1645 = vpop.f32.mrf.mxu0
      %v1646 = vadd.f32 0.0, %v1645
      %1647 = vmatprep.mubr.f32.mxu0 0.0
      %1648 = vmatmul.mubr.f32.gmra.mxu0 %v1535
      %v1649 = vpop.f32.mrf.mxu0
      %v1650 = vadd.f32 0.0, %v1649
      %v1651 = vpop.f32.mrf.mxu0
      %v1652 = vadd.f32 0.0, %v1651
      %1653 = vdwg.mxu0
      %v1654 = vadd.f32 %v1485, %v1608
      %v1655 = vadd.f32 %v1486, %v1610
      %v1656 = vadd.f32 %v1487, %v1614
      %v1657 = vadd.f32 %v1488, %v1616
      %v1658 = vadd.f32 %v1489, %v1620
      %v1659 = vadd.f32 %v1490, %v1622
      %v1660 = vadd.f32 %v1491, %v1626
      %v1661 = vadd.f32 %v1492, %v1628
      %v1662 = vadd.f32 %v1493, %v1632
      %v1663 = vadd.f32 %v1494, %v1634
      %v1664 = vadd.f32 %v1495, %v1638
      %v1665 = vadd.f32 %v1496, %v1640
      %v1666 = vadd.f32 %v1497, %v1644
      %v1667 = vadd.f32 %v1498, %v1646
      %v1668 = vadd.f32 %v1499, %v1650
      %v1669 = vadd.f32 %v1500, %v1652
      %1670 = vst [vmem:[%s168] sm:$0xff] %v1654
      %1671 = vst [vmem:[%s168 + $0x8] sm:$0xff] %v1655
      %1672 = vst [vmem:[%s168 + $0x10] sm:$0xff] %v1656
      %1673 = vst [vmem:[%s168 + $0x18] sm:$0xff] %v1657
      %1674 = vst [vmem:[%s168 + $0x20] sm:$0xff] %v1658
      %1675 = vst [vmem:[%s168 + $0x28] sm:$0xff] %v1659
      %1676 = vst [vmem:[%s168 + $0x30] sm:$0xff] %v1660
      %1677 = vst [vmem:[%s168 + $0x38] sm:$0xff] %v1661
      %1678 = vst [vmem:[%s168 + $0x40] sm:$0xff] %v1662
      %1679 = vst [vmem:[%s168 + $0x48] sm:$0xff] %v1663
      %1680 = vst [vmem:[%s168 + $0x50] sm:$0xff] %v1664
      %1681 = vst [vmem:[%s168 + $0x58] sm:$0xff] %v1665
      %1682 = vst [vmem:[%s168 + $0x60] sm:$0xff] %v1666
      %1683 = vst [vmem:[%s168 + $0x68] sm:$0xff] %v1667
      %1684 = vst [vmem:[%s168 + $0x70] sm:$0xff] %v1668
      %1685 = vst [vmem:[%s168 + $0x78] sm:$0xff] %v1669
      %v1686 = vld [vmem:[%s3] ss:$8 sm:$0x3]
      %v1687 = vadd.f32 %v1654, %v1656
      %v1688 = vadd.f32 %v1687, %v1658
      %v1689 = vadd.f32 %v1688, %v1660
      %v1690 = vadd.f32 %v1689, %v1662
      %v1691 = vadd.f32 %v1690, %v1664
      %v1692 = vadd.f32 %v1691, %v1666
      %v1693 = vadd.f32 %v1692, %v1668
      %v1694 = vrot.slane %v1693, 4
      %v1695 = vadd.f32 %v1693, %v1694
      %v1696 = vrot.slane %v1695, 2
      %v1697 = vadd.f32 %v1695, %v1696
      %v1698 = vrot.slane %v1697, 1
      %v1699 = vadd.f32 %v1697, %v1698
      %v1700 = vadd.f32 %v1655, %v1657
      %v1701 = vadd.f32 %v1700, %v1659
      %v1702 = vadd.f32 %v1701, %v1661
      %v1703 = vadd.f32 %v1702, %v1663
      %v1704 = vadd.f32 %v1703, %v1665
      %v1705 = vadd.f32 %v1704, %v1667
      %v1706 = vadd.f32 %v1705, %v1669
      %v1707 = vrot.slane %v1706, 4
      %v1708 = vadd.f32 %v1706, %v1707
      %v1709 = vrot.slane %v1708, 2
      %v1710 = vadd.f32 %v1708, %v1709
      %v1711 = vrot.slane %v1710, 1
      %v1712 = vadd.f32 %v1710, %v1711
      %v1715 = vcombine.low %v1699, %v1712
      %v1717 = vunpack.c.l.s4 1966171168
      %v1718 = vunpack.c.0.s8 %v1717
      %v1719 = vlaneseq
      %v1720 = vshrl.u32 %v1719, 7
      %v1721 = vsub.s32 %v1718, %v1720
      %v1722 = vrot.slane %v1715, %v1721
      %v1724 = vunpack.c.l.s4 1966171168
      %v1725 = vunpack.c.0.s8 %v1724
      %v1726 = vlaneseq
      %v1727 = vshrl.u32 %v1726, 7
      %v1728 = vsub.s32 %v1725, %v1727
      %v1729 = vrot.slane %v1722, %v1728
      %v1731 = vadd.f32 %v1686, %v1729
      %v1732 = vlaneseq
      %vm1733 = vcmp.ge.s32.totalorder %v1732, 0
      %vm1734 = vcmp.lt.s32.totalorder %v1732, 256
      %vm1735 = vmand %vm1733, %vm1734
      %1736 = vst.msk [vmem:[%s3] ss:$8 sm:$0x3] %vm1735, %v1731
      %1737 = vst.msk [vmem:[%s3] ss:$8 sm:$0x0] %vm1735, %v1731
      %s1738 = scalar_lea.vmem %s3, 1
      %v1739 = vld [vmem:[%s1738] ss:$8 sm:$0x3]
      %v1740 = vmul.f32 %v1654, %v1654
      %v1741 = vmul.f32 %v1655, %v1655
      %v1742 = vmul.f32 %v1656, %v1656
      %v1743 = vmul.f32 %v1657, %v1657
      %v1744 = vmul.f32 %v1658, %v1658
      %v1745 = vmul.f32 %v1659, %v1659
      %v1746 = vmul.f32 %v1660, %v1660
      %v1747 = vmul.f32 %v1661, %v1661
      %v1748 = vmul.f32 %v1662, %v1662
      %v1749 = vmul.f32 %v1663, %v1663
      %v1750 = vmul.f32 %v1664, %v1664
      %v1751 = vmul.f32 %v1665, %v1665
      %v1752 = vmul.f32 %v1666, %v1666
      %v1753 = vmul.f32 %v1667, %v1667
      %v1754 = vmul.f32 %v1668, %v1668
      %v1755 = vmul.f32 %v1669, %v1669
      %v1756 = vadd.f32 %v1740, %v1742
      %v1757 = vadd.f32 %v1756, %v1744
      %v1758 = vadd.f32 %v1757, %v1746
      %v1759 = vadd.f32 %v1758, %v1748
      %v1760 = vadd.f32 %v1759, %v1750
      %v1761 = vadd.f32 %v1760, %v1752
      %v1762 = vadd.f32 %v1761, %v1754
      %v1763 = vrot.slane %v1762, 4
      %v1764 = vadd.f32 %v1762, %v1763
      %v1765 = vrot.slane %v1764, 2
      %v1766 = vadd.f32 %v1764, %v1765
      %v1767 = vrot.slane %v1766, 1
      %v1768 = vadd.f32 %v1766, %v1767
      %v1769 = vadd.f32 %v1741, %v1743
      %v1770 = vadd.f32 %v1769, %v1745
      %v1771 = vadd.f32 %v1770, %v1747
      %v1772 = vadd.f32 %v1771, %v1749
      %v1773 = vadd.f32 %v1772, %v1751
      %v1774 = vadd.f32 %v1773, %v1753
      %v1775 = vadd.f32 %v1774, %v1755
      %v1776 = vrot.slane %v1775, 4
      %v1777 = vadd.f32 %v1775, %v1776
      %v1778 = vrot.slane %v1777, 2
      %v1779 = vadd.f32 %v1777, %v1778
      %v1780 = vrot.slane %v1779, 1
      %v1781 = vadd.f32 %v1779, %v1780
      %v1784 = vcombine.low %v1768, %v1781
      %v1786 = vunpack.c.l.s4 1966171168
      %v1787 = vunpack.c.0.s8 %v1786
      %v1788 = vlaneseq
      %v1789 = vshrl.u32 %v1788, 7
      %v1790 = vsub.s32 %v1787, %v1789
      %v1791 = vrot.slane %v1784, %v1790
      %v1793 = vunpack.c.l.s4 1966171168
      %v1794 = vunpack.c.0.s8 %v1793
      %v1795 = vlaneseq
      %v1796 = vshrl.u32 %v1795, 7
      %v1797 = vsub.s32 %v1794, %v1796
      %v1798 = vrot.slane %v1791, %v1797
      %v1800 = vadd.f32 %v1739, %v1798
      %1801 = vst.msk [vmem:[%s1738] ss:$8 sm:$0x3] %vm1735, %v1800
      %1802 = vst.msk [vmem:[%s1738] ss:$8 sm:$0x0] %vm1735, %v1800
      %p1803 = scmp.lt.s32.totalorder %s15, 1
      %s1804 = scalar_select %p1803, %s15, 1
      %s1805 = smul.addr %s1804, 16
      %s1806 = smul.addr %s1805, 8
      %s1807 = scalar_lea.vmem %s2, %s1806
      // Predicated region
      $region33: #{_compute_block_impl.3} parent=27 // pred_check
        %p1808 = pneg %p80
      $region34: #{_compute_block_impl.3} parent=27 // pred_check_branch
        %1810 = sbr.rel (%p1808) target = $region36
      $region35: #{_compute_block_impl.3} parent=27 // pred_region
        _
      $region36: #{_compute_block_impl.3} parent=27 // pred_fallthru
        _
      // Predicated region
      $region37: #{_compute_block_impl.3} parent=27 // pred_check
        %p1811 = pneg %p101
      $region38: #{_compute_block_impl.3} parent=27 // pred_check_branch
        %1813 = sbr.rel (%p1811) target = $region40
      $region39: #{_compute_block_impl.3} parent=27 // pred_region
        _
      $region40: #{_compute_block_impl.3} parent=27 // pred_fallthru
        _
      // Predicated region
      $region41: #{_compute_block_impl.3} parent=27 // pred_check
        %p1814 = pneg %p101
      $region42: #{_compute_block_impl.3} parent=27 // pred_check_branch
        %1816 = sbr.rel (%p1814) target = $region44
      $region43: #{_compute_block_impl.3} parent=27 // pred_region
        _
      $region44: #{_compute_block_impl.3} parent=27 // pred_fallthru
        _
    $region28: #{_compute_block_impl.3} parent=5 // pred_fallthru
      _
    %p1817 = scmp.le.s32.totalorder 2, %s10
    // Predicated region
    $region45: #{_compute_block_impl.3} parent=5 // pred_check
      %p1818 = pneg %p1817
    $region46: #{_compute_block_impl.3} parent=5 // pred_check_branch
      %1820 = sbr.rel (%p1818) target = $region48
    $region47: #{_compute_block_impl.3} parent=5 // pred_region
      %s1821 = ssub.s32 %s10, 2
      // Predicated region
      $region49: #{_compute_block_impl.3} parent=47 // pred_check
        %p1822 = pneg %p86
      $region50: #{_compute_block_impl.3} parent=47 // pred_check_branch
        %1824 = sbr.rel (%p1822) target = $region52
      $region51: #{_compute_block_impl.3} parent=47 // pred_region
        %p1825 = scmp.lt.s32.totalorder %s16, 1
        %s1826 = scalar_select %p1825, %s16, 1
        %s1827 = smul.addr %s1826, 16
        %s1828 = smul.addr %s1827, 8
        %s1829 = scalar_lea.vmem %s2, %s1828
      $region52: #{_compute_block_impl.3} parent=47 // pred_fallthru
        _
    $region48: #{_compute_block_impl.3} parent=5 // pred_fallthru
      _
  $region6: #{_compute_block_impl.3} parent=0 // loop_footer
    %s14 = sadd.s32 1, %s10
  $region7: #{_compute_block_impl.3} parent=0 // loop_footer_branch
    %9 = sbr.rel target = $region3
  $region8: #{_compute_block_impl.3} parent=0 // loop_exit
    _

// kernel: _compute_block_impl.4
$region0: #{_compute_block_impl.4}
  #allocation0 [shape = 'u32[]', space=smem, size = 0x4, offset = 0x4, fixed_abs, tag = 'smem constant byte address 0x4 - core index']
  #allocation1 [shape = 'u32[144,128]{1,0:T(1,128)}', space=vmem, size = 0x12000, scoped, tag = 'internal scratch']
  #allocation2 [shape = 'f32[10,10,128]{2,1,0:T(8,128)}', space=vmem, size = 0x14000, scoped, tag = 'scratch operand']
  %s0 = inlined_call_operand.vmem [shape: f32[2,64,256], index: 0, kind: input, shape index: {}]
  %s1 = inlined_call_operand.vmem [shape: f32[9,128,128], index: 1, kind: input, shape index: {}]
  %s2 = inlined_call_operand.vmem [shape: f32[8,128], index: 2, kind: input, shape index: {}]
  %s3 = inlined_call_operand.vmem [shape: f32[8,256], index: 3, kind: input, shape index: {}]
  %s4 = inlined_call_operand.vmem [shape: f32[2,64,128], index: 4, kind: output, shape index: {0}]
  %s5 = inlined_call_operand.vmem [shape: f32[8,128], index: 5, kind: output, shape index: {1}]
  %6 = xla_tuple %s4, %s5
  %s7 = sld [smem:[#allocation0]]
  $region61: #{_compute_block_impl.4} parent=0
    _
  %s9 = ssub.s32 1, %s7
  %s10 = scalar_select 0, %s9, %s7
  loop: start=0, step=1, limit=4
  $region2: #{_compute_block_impl.4} parent=0 // loop_pre_header
    _
  $region3: #{_compute_block_impl.4} parent=0 // loop_header
    %s12 = sphi 0, %s16
    %p13 = scmp.ge.s32.totalorder %s12, 4
    %s22 = sphi 0, %s24
    %s25 = sphi 0, %s22
    %s26 = sphi 0, %s25
    %s42 = sphi 0, %s26
    %s46 = sphi 0, %s46
    %s48 = sphi 0, %s46
    %s49 = sphi 0, %s48
    %s63 = sphi 0, %s49
    %s67 = sphi 0, %s67
    %s69 = sphi 0, %s67
    %s70 = sphi 0, %s69
    %s84 = sphi 0, %s70
    %s88 = sphi 0, %s88
    %s90 = sphi 0, %s88
    %s91 = sphi 0, %s90
    %s105 = sphi 0, %s91
    %s111 = sphi 0, %s113
    %s114 = sphi 0, %s111
    %s115 = sphi 0, %s114
    %s131 = sphi 0, %s115
    %s135 = sphi 0, %s135
    %s137 = sphi 0, %s135
    %s138 = sphi 0, %s137
    %s152 = sphi 0, %s138
  $region4: #{_compute_block_impl.4} parent=0 // loop_header_branch
    %15 = sbr.rel (%p13) target = $region8
  $region5: #{_compute_block_impl.4} parent=0 // loop_body
    %s17 = ssub.s32 %s12, 1
    %s18 = ssub.s32 %s12, 2
    %s19 = sadd.s32 %s12, 1
    %s20 = ssub.s32 %s12, %s19
    %p21 = scmp.eq.s32.totalorder %s20, 0
    %s23 = sadd.s32 %s22, 1
    %s24 = scalar_select %p21, %s22, %s23
    %p27 = pneg %p21
    %p28 = scmp.eq.s32.totalorder %s12, 1
    %p29 = por %p27, %p28
    %p30 = scmp.ne.s32.totalorder %s22, %s25
    %p31 = scmp.eq.s32.totalorder %s12, 0
    %p32 = por %p30, %p31
    %p33 = scmp.ne.s32.totalorder %s22, %s25
    %p34 = scmp.eq.s32.totalorder %s17, 1
    %p35 = por %p33, %p34
    %p36 = scmp.ne.s32.totalorder %s25, %s26
    %p37 = scmp.eq.s32.totalorder %s17, 0
    %p38 = por %p36, %p37
    %p39 = scmp.ne.s32.totalorder %s25, %s26
    %p40 = scmp.eq.s32.totalorder %s18, 1
    %p41 = por %p39, %p40
    %p43 = scmp.ne.s32.totalorder %s26, %s42
    %p44 = scmp.eq.s32.totalorder %s18, 0
    %p45 = por %p43, %p44
    %s47 = sadd.s32 %s46, 1
    %p50 = scmp.eq.s32.totalorder %s12, 1
    %p51 = scmp.ne.s32.totalorder %s46, %s48
    %p52 = scmp.eq.s32.totalorder %s12, 0
    %p53 = por %p51, %p52
    %p54 = scmp.ne.s32.totalorder %s46, %s48
    %p55 = scmp.eq.s32.totalorder %s17, 1
    %p56 = por %p54, %p55
    %p57 = scmp.ne.s32.totalorder %s48, %s49
    %p58 = scmp.eq.s32.totalorder %s17, 0
    %p59 = por %p57, %p58
    %p60 = scmp.ne.s32.totalorder %s48, %s49
    %p61 = scmp.eq.s32.totalorder %s18, 1
    %p62 = por %p60, %p61
    %p64 = scmp.ne.s32.totalorder %s49, %s63
    %p65 = scmp.eq.s32.totalorder %s18, 0
    %p66 = por %p64, %p65
    %s68 = sadd.s32 %s67, 1
    %p71 = scmp.eq.s32.totalorder %s12, 1
    %p72 = scmp.ne.s32.totalorder %s67, %s69
    %p73 = scmp.eq.s32.totalorder %s12, 0
    %p74 = por %p72, %p73
    %p75 = scmp.ne.s32.totalorder %s67, %s69
    %p76 = scmp.eq.s32.totalorder %s17, 1
    %p77 = por %p75, %p76
    %p78 = scmp.ne.s32.totalorder %s69, %s70
    %p79 = scmp.eq.s32.totalorder %s17, 0
    %p80 = por %p78, %p79
    %p81 = scmp.ne.s32.totalorder %s69, %s70
    %p82 = scmp.eq.s32.totalorder %s18, 1
    %p83 = por %p81, %p82
    %p85 = scmp.ne.s32.totalorder %s70, %s84
    %p86 = scmp.eq.s32.totalorder %s18, 0
    %p87 = por %p85, %p86
    %s89 = sadd.s32 %s88, 1
    %p92 = scmp.eq.s32.totalorder %s12, 1
    %p93 = scmp.ne.s32.totalorder %s88, %s90
    %p94 = scmp.eq.s32.totalorder %s12, 0
    %p95 = por %p93, %p94
    %p96 = scmp.ne.s32.totalorder %s88, %s90
    %p97 = scmp.eq.s32.totalorder %s17, 1
    %p98 = por %p96, %p97
    %p99 = scmp.ne.s32.totalorder %s90, %s91
    %p100 = scmp.eq.s32.totalorder %s17, 0
    %p101 = por %p99, %p100
    %p102 = scmp.ne.s32.totalorder %s90, %s91
    %p103 = scmp.eq.s32.totalorder %s18, 1
    %p104 = por %p102, %p103
    %p106 = scmp.ne.s32.totalorder %s91, %s105
    %p107 = scmp.eq.s32.totalorder %s18, 0
    %p108 = por %p106, %p107
    %s109 = ssub.s32 %s12, %s19
    %p110 = scmp.eq.s32.totalorder %s109, 0
    %s112 = sadd.s32 %s111, 1
    %s113 = scalar_select %p110, %s111, %s112
    %p116 = pneg %p110
    %p117 = scmp.eq.s32.totalorder %s12, 1
    %p118 = por %p116, %p117
    %p119 = scmp.ne.s32.totalorder %s111, %s114
    %p120 = scmp.eq.s32.totalorder %s12, 0
    %p121 = por %p119, %p120
    %p122 = scmp.ne.s32.totalorder %s111, %s114
    %p123 = scmp.eq.s32.totalorder %s17, 1
    %p124 = por %p122, %p123
    %p125 = scmp.ne.s32.totalorder %s114, %s115
    %p126 = scmp.eq.s32.totalorder %s17, 0
    %p127 = por %p125, %p126
    %p128 = scmp.ne.s32.totalorder %s114, %s115
    %p129 = scmp.eq.s32.totalorder %s18, 1
    %p130 = por %p128, %p129
    %p132 = scmp.ne.s32.totalorder %s115, %s131
    %p133 = scmp.eq.s32.totalorder %s18, 0
    %p134 = por %p132, %p133
    %s136 = sadd.s32 %s135, 1
    %p139 = scmp.eq.s32.totalorder %s12, 1
    %p140 = scmp.ne.s32.totalorder %s135, %s137
    %p141 = scmp.eq.s32.totalorder %s12, 0
    %p142 = por %p140, %p141
    %p143 = scmp.ne.s32.totalorder %s135, %s137
    %p144 = scmp.eq.s32.totalorder %s17, 1
    %p145 = por %p143, %p144
    %p146 = scmp.ne.s32.totalorder %s137, %s138
    %p147 = scmp.eq.s32.totalorder %s17, 0
    %p148 = por %p146, %p147
    %p149 = scmp.ne.s32.totalorder %s137, %s138
    %p150 = scmp.eq.s32.totalorder %s18, 1
    %p151 = por %p149, %p150
    %p153 = scmp.ne.s32.totalorder %s138, %s152
    %p154 = scmp.eq.s32.totalorder %s18, 0
    %p155 = por %p153, %p154
    %p156 = scmp.le.s32.totalorder 1, %s12
    %p157 = scmp.lt.s32.totalorder %s12, 3
    %p158 = pnand %p156, %p157
    %p159 = pneg %p158
    // Predicated region
    $region9: #{_compute_block_impl.4} parent=5 // pred_check
      _
    $region10: #{_compute_block_impl.4} parent=5 // pred_check_branch
      %161 = sbr.rel (%p158) target = $region12
    $region11: #{_compute_block_impl.4} parent=5 // pred_region
      %s162 = ssub.s32 %s12, 1
      // Predicated region
      $region13: #{_compute_block_impl.4} parent=11 // pred_check
        %p163 = pneg %p59
      $region14: #{_compute_block_impl.4} parent=11 // pred_check_branch
        %165 = sbr.rel (%p163) target = $region16
      $region15: #{_compute_block_impl.4} parent=11 // pred_region
        _
      $region16: #{_compute_block_impl.4} parent=11 // pred_fallthru
        _
      // Predicated region
      $region17: #{_compute_block_impl.4} parent=11 // pred_check
        %p166 = pneg %p80
      $region18: #{_compute_block_impl.4} parent=11 // pred_check_branch
        %168 = sbr.rel (%p166) target = $region20
      $region19: #{_compute_block_impl.4} parent=11 // pred_region
        _
      $region20: #{_compute_block_impl.4} parent=11 // pred_fallthru
        _
      // Predicated region
      $region21: #{_compute_block_impl.4} parent=11 // pred_check
        %p169 = pneg %p101
      $region22: #{_compute_block_impl.4} parent=11 // pred_check_branch
        %171 = sbr.rel (%p169) target = $region24
      $region23: #{_compute_block_impl.4} parent=11 // pred_region
        _
      $region24: #{_compute_block_impl.4} parent=11 // pred_fallthru
        _
    $region12: #{_compute_block_impl.4} parent=5 // pred_fallthru
      _
    %p172 = scmp.lt.s32.totalorder %s12, 2
    // Predicated region
    $region25: #{_compute_block_impl.4} parent=5 // pred_check
      %p173 = pneg %p172
    $region26: #{_compute_block_impl.4} parent=5 // pred_check_branch
      %175 = sbr.rel (%p173) target = $region28
    $region27: #{_compute_block_impl.4} parent=5 // pred_region
      // Predicated region
      $region29: #{_compute_block_impl.4} parent=27 // pred_check
        %p176 = pneg %p32
      $region30: #{_compute_block_impl.4} parent=27 // pred_check_branch
        %178 = sbr.rel (%p176) target = $region32
      $region31: #{_compute_block_impl.4} parent=27 // pred_region
        %p179 = scmp.lt.s32.totalorder %s12, 1
        %s180 = scalar_select %p179, %s12, 1
        %s181 = smul.addr %s180, 16
        %s182 = smul.addr %s181, 8
        %s183 = scalar_lea.vmem %s0, %s182
      $region32: #{_compute_block_impl.4} parent=27 // pred_fallthru
        _
    $region28: #{_compute_block_impl.4} parent=5 // pred_fallthru
      _
    %p184 = scmp.le.s32.totalorder 1, %s12
    %p185 = scmp.lt.s32.totalorder %s12, 3
    %p186 = pnand %p184, %p185
    %p187 = pneg %p186
    // Predicated region
    $region33: #{_compute_block_impl.4} parent=5 // pred_check
      _
    $region34: #{_compute_block_impl.4} parent=5 // pred_check_branch
      %189 = sbr.rel (%p186) target = $region36
    $region35: #{_compute_block_impl.4} parent=5 // pred_region
      %s190 = ssub.s32 %s12, 1
      %p191 = scmp.lt.s32.totalorder %s17, 1
      %s192 = scalar_select %p191, %s17, 1
      %s193 = smul.addr %s192, 16
      %s194 = smul.addr %s193, 8
      %s195 = scalar_lea.vmem %s0, %s194
      %p196 = pneg %p38
      %p197 = pneg %p35
      %p198 = pneg %p59
      %p199 = pneg %p56
      %p200 = pneg %p80
      %p201 = pneg %p77
      %p202 = pneg %p101
      %p203 = pneg %p98
      %p204 = pneg %p127
      %p205 = pneg %p124
      %p206 = scmp.lt.s32.totalorder %s17, 1
      %s207 = scalar_select %p206, %s17, 1
      %s208 = smul.addr %s207, 8
      %s209 = smul.addr %s208, 8
      %s210 = scalar_lea.vmem %s4, %s209
      %p211 = pneg %p148
      %p212 = pneg %p145
      %p213 = scmp.lt.s32.totalorder %s17, 1
      %s214 = scalar_select %p213, %s17, 1
      %s215 = smul.addr %s214, 16
      %s216 = smul.addr %s215, 8
      %s217 = scalar_lea.vmem %s0, %s216
      %p218 = scmp.lt.s32.totalorder %s17, 1
      %s219 = scalar_select %p218, %s17, 1
      %s220 = smul.addr %s219, 8
      %s221 = smul.addr %s220, 8
      %s222 = scalar_lea.vmem %s4, %s221
      %p223 = scmp.eq.s32.totalorder %s17, 0
      // Predicated region
      $region37: #{_compute_block_impl.4} parent=35 // pred_check
        %p224 = pneg %p223
      $region38: #{_compute_block_impl.4} parent=35 // pred_check_branch
        %226 = sbr.rel (%p224) target = $region40
      $region39: #{_compute_block_impl.4} parent=35 // pred_region
        %227 = vst [vmem:[%s5] sm:$0xff] 0.0
      $region40: #{_compute_block_impl.4} parent=35 // pred_fallthru
        _
      %v228 = vld [vmem:[%s217] sm:$0xff]
      %v229 = vld [vmem:[%s217 + $0x10] sm:$0xff]
      %v230 = vld [vmem:[%s217 + $0x20] sm:$0xff]
      %v231 = vld [vmem:[%s217 + $0x30] sm:$0xff]
      %v232 = vld [vmem:[%s217 + $0x40] sm:$0xff]
      %v233 = vld [vmem:[%s217 + $0x50] sm:$0xff]
      %v234 = vld [vmem:[%s217 + $0x60] sm:$0xff]
      %v235 = vld [vmem:[%s217 + $0x70] sm:$0xff]
      %v236 = vld [vmem:[%s3] ss:$0 sm:$0xff]
      %v237 = vmul.f32 %v236, 0.0078125
      %v238 = vld [vmem:[%s3 + $0x1] ss:$0 sm:$0xff]
      %v239 = vmul.f32 %v238, 0.0078125
      %v240 = vmul.f32 %v237, %v237
      %v241 = vsub.f32 %v239, %v240
      %v242 = vmax.f32 %v241, 0.0
      %v243 = vadd.f32 %v242, 1e-05
      %v244 = vrsqrt.pop %v243
      %v245 = vld [vmem:[%s2] sm:$0x1]
      %v246 = vmul.f32 %v244, %v245
      %v247 = vsub.f32 %v228, %v237
      %v248 = vsub.f32 %v229, %v237
      %v249 = vsub.f32 %v230, %v237
      %v250 = vsub.f32 %v231, %v237
      %v251 = vsub.f32 %v232, %v237
      %v252 = vsub.f32 %v233, %v237
      %v253 = vsub.f32 %v234, %v237
      %v254 = vsub.f32 %v235, %v237
      %v255 = vlaneseq
      %v256 = vshrl.u32 %v255, 7
      %v257 = vsub.s32 0, %v256
      %v258 = vrot.slane %v246, %v257
      %v259 = vmul.f32 %v247, %v258
      %v260 = vmul.f32 %v248, %v258
      %v261 = vmul.f32 %v249, %v258
      %v262 = vmul.f32 %v250, %v258
      %v263 = vmul.f32 %v251, %v258
      %v264 = vmul.f32 %v252, %v258
      %v265 = vmul.f32 %v253, %v258
      %v266 = vmul.f32 %v254, %v258
      %v267 = vld [vmem:[%s2 + $0x1] sm:$0x1]
      %v268 = vlaneseq
      %v269 = vshrl.u32 %v268, 7
      %v270 = vsub.s32 0, %v269
      %v271 = vrot.slane %v267, %v270
      %v272 = vadd.f32 %v259, %v271
      %v273 = vadd.f32 %v260, %v271
      %v274 = vadd.f32 %v261, %v271
      %v275 = vadd.f32 %v262, %v271
      %v276 = vadd.f32 %v263, %v271
      %v277 = vadd.f32 %v264, %v271
      %v278 = vadd.f32 %v265, %v271
      %v279 = vadd.f32 %v266, %v271
      %v280 = vmax.f32 %v272, 0.0
      %v281 = vmax.f32 %v273, 0.0
      %v282 = vmax.f32 %v274, 0.0
      %v283 = vmax.f32 %v275, 0.0
      %v284 = vmax.f32 %v276, 0.0
      %v285 = vmax.f32 %v277, 0.0
      %v286 = vmax.f32 %v278, 0.0
      %v287 = vmax.f32 %v279, 0.0
      %288 = vst [vmem:[#allocation2] sm:$0xff] 0.0
      %289 = vst [vmem:[#allocation2 + $0x8] sm:$0x3] 0.0
      %290 = vst [vmem:[#allocation2 + $0x10] sm:$0xff] 0.0
      %291 = vst [vmem:[#allocation2 + $0x18] sm:$0x3] 0.0
      %292 = vst [vmem:[#allocation2 + $0x20] sm:$0xff] 0.0
      %293 = vst [vmem:[#allocation2 + $0x28] sm:$0x3] 0.0
      %294 = vst [vmem:[#allocation2 + $0x30] sm:$0xff] 0.0
      %295 = vst [vmem:[#allocation2 + $0x38] sm:$0x3] 0.0
      %296 = vst [vmem:[#allocation2 + $0x40] sm:$0xff] 0.0
      %297 = vst [vmem:[#allocation2 + $0x48] sm:$0x3] 0.0
      %298 = vst [vmem:[#allocation2 + $0x50] sm:$0xff] 0.0
      %299 = vst [vmem:[#allocation2 + $0x58] sm:$0x3] 0.0
      %300 = vst [vmem:[#allocation2 + $0x60] sm:$0xff] 0.0
      %301 = vst [vmem:[#allocation2 + $0x68] sm:$0x3] 0.0
      %302 = vst [vmem:[#allocation2 + $0x70] sm:$0xff] 0.0
      %303 = vst [vmem:[#allocation2 + $0x78] sm:$0x3] 0.0
      %304 = vst [vmem:[#allocation2 + $0x80] sm:$0xff] 0.0
      %305 = vst [vmem:[#allocation2 + $0x88] sm:$0x3] 0.0
      %306 = vst [vmem:[#allocation2 + $0x90] sm:$0xff] 0.0
      %307 = vst [vmem:[#allocation2 + $0x98] sm:$0x3] 0.0
      %s308 = scalar_lea.vmem [#allocation2], 16
      %309 = vst [vmem:[%s308 + $0x1] sm:$0xff] %v280
      %310 = vst [vmem:[%s308 + $0x11] sm:$0xff] %v281
      %311 = vst [vmem:[%s308 + $0x21] sm:$0xff] %v282
      %312 = vst [vmem:[%s308 + $0x31] sm:$0xff] %v283
      %313 = vst [vmem:[%s308 + $0x41] sm:$0xff] %v284
      %314 = vst [vmem:[%s308 + $0x51] sm:$0xff] %v285
      %315 = vst [vmem:[%s308 + $0x61] sm:$0xff] %v286
      %316 = vst [vmem:[%s308 + $0x71] sm:$0xff] %v287
      %v317 = vld [vmem:[#allocation2] sm:$0xff]
      %v318 = vld [vmem:[#allocation2 + $0x10] sm:$0xff]
      %v319 = vld [vmem:[#allocation2 + $0x20] sm:$0xff]
      %v320 = vld [vmem:[#allocation2 + $0x30] sm:$0xff]
      %v321 = vld [vmem:[#allocation2 + $0x40] sm:$0xff]
      %v322 = vld [vmem:[#allocation2 + $0x50] sm:$0xff]
      %v323 = vld [vmem:[#allocation2 + $0x60] sm:$0xff]
      %v324 = vld [vmem:[#allocation2 + $0x70] sm:$0xff]
      %v325 = vld [vmem:[%s1] sm:$0xff]
      %v326 = vld [vmem:[%s1 + $0x8] sm:$0xff]
      %v327 = vld [vmem:[%s1 + $0x10] sm:$0xff]
      %v328 = vld [vmem:[%s1 + $0x18] sm:$0xff]
      %v329 = vld [vmem:[%s1 + $0x20] sm:$0xff]
      %v330 = vld [vmem:[%s1 + $0x28] sm:$0xff]
      %v331 = vld [vmem:[%s1 + $0x30] sm:$0xff]
      %v332 = vld [vmem:[%s1 + $0x38] sm:$0xff]
      %v333 = vld [vmem:[%s1 + $0x40] sm:$0xff]
      %v334 = vld [vmem:[%s1 + $0x48] sm:$0xff]
      %v335 = vld [vmem:[%s1 + $0x50] sm:$0xff]
      %v336 = vld [vmem:[%s1 + $0x58] sm:$0xff]
      %v337 = vld [vmem:[%s1 + $0x60] sm:$0xff]
      %v338 = vld [vmem:[%s1 + $0x68] sm:$0xff]
      %v339 = vld [vmem:[%s1 + $0x70] sm:$0xff]
      %v340 = vld [vmem:[%s1 + $0x78] sm:$0xff]
      %v341 = vld [vmem:[#allocation2 + $0x1] sm:$0xff]
      %v342 = vld [vmem:[#allocation2 + $0x11] sm:$0xff]
      %v343 = vld [vmem:[#allocation2 + $0x21] sm:$0xff]
      %v344 = vld [vmem:[#allocation2 + $0x31] sm:$0xff]
      %v345 = vld [vmem:[#allocation2 + $0x41] sm:$0xff]
      %v346 = vld [vmem:[#allocation2 + $0x51] sm:$0xff]
      %v347 = vld [vmem:[#allocation2 + $0x61] sm:$0xff]
      %v348 = vld [vmem:[#allocation2 + $0x71] sm:$0xff]
      %s349 = scalar_lea.vmem %s1, 128
      %v350 = vld [vmem:[%s349] sm:$0xff]
      %v351 = vld [vmem:[%s349 + $0x8] sm:$0xff]
      %v352 = vld [vmem:[%s349 + $0x10] sm:$0xff]
      %v353 = vld [vmem:[%s349 + $0x18] sm:$0xff]
      %v354 = vld [vmem:[%s349 + $0x20] sm:$0xff]
      %v355 = vld [vmem:[%s349 + $0x28] sm:$0xff]
      %v356 = vld [vmem:[%s349 + $0x30] sm:$0xff]
      %v357 = vld [vmem:[%s349 + $0x38] sm:$0xff]
      %v358 = vld [vmem:[%s349 + $0x40] sm:$0xff]
      %v359 = vld [vmem:[%s349 + $0x48] sm:$0xff]
      %v360 = vld [vmem:[%s349 + $0x50] sm:$0xff]
      %v361 = vld [vmem:[%s349 + $0x58] sm:$0xff]
      %v362 = vld [vmem:[%s349 + $0x60] sm:$0xff]
      %v363 = vld [vmem:[%s349 + $0x68] sm:$0xff]
      %v364 = vld [vmem:[%s349 + $0x70] sm:$0xff]
      %v365 = vld [vmem:[%s349 + $0x78] sm:$0xff]
      %366 = vmatprep.subr.mxu0 0.0
      %367 = vmatpush1.msra.mxu0 %v365
      %368 = vmatprep.subr.mxu0 0.0
      %369 = vmatpush1.msra.mxu0 %v364
      %370 = vmatprep.subr.mxu0 0.0
      %371 = vmatpush1.msra.mxu0 %v363
      %372 = vmatprep.subr.mxu0 0.0
      %373 = vmatpush1.msra.mxu0 %v362
      %374 = vmatprep.subr.mxu0 0.0
      %375 = vmatpush1.msra.mxu0 %v361
      %376 = vmatprep.subr.mxu0 0.0
      %377 = vmatpush1.msra.mxu0 %v360
      %378 = vmatprep.subr.mxu0 0.0
      %379 = vmatpush1.msra.mxu0 %v359
      %380 = vmatprep.subr.mxu0 0.0
      %381 = vmatpush1.msra.mxu0 %v358
      %382 = vmatprep.subr.mxu0 0.0
      %383 = vmatpush1.msra.mxu0 %v357
      %384 = vmatprep.subr.mxu0 0.0
      %385 = vmatpush1.msra.mxu0 %v356
      %386 = vmatprep.subr.mxu0 0.0
      %387 = vmatpush1.msra.mxu0 %v355
      %388 = vmatprep.subr.mxu0 0.0
      %389 = vmatpush1.msra.mxu0 %v354
      %390 = vmatprep.subr.mxu0 0.0
      %391 = vmatpush1.msra.mxu0 %v353
      %392 = vmatprep.subr.mxu0 0.0
      %393 = vmatpush1.msra.mxu0 %v352
      %394 = vmatprep.subr.mxu0 0.0
      %395 = vmatpush1.msra.mxu0 %v351
      %396 = vmatprep.subr.mxu0 0.0
      %397 = vmatpush1.msra.mxu0 %v350
      %398 = vmatprep.subr.mxu0 0.0
      %399 = vmatpush2.msra.mxu0 0.0
      %400 = vmatprep.subr.mxu0 0.0
      %401 = vmatpush2.msra.mxu0 0.0
      %402 = vmatprep.subr.mxu0 0.0
      %403 = vmatpush2.msra.mxu0 0.0
      %404 = vmatprep.subr.mxu0 0.0
      %405 = vmatpush2.msra.mxu0 0.0
      %406 = vmatprep.subr.mxu0 0.0
      %407 = vmatpush2.msra.mxu0 0.0
      %408 = vmatprep.subr.mxu0 0.0
      %409 = vmatpush2.msra.mxu0 0.0
      %410 = vmatprep.subr.mxu0 0.0
      %411 = vmatpush2.msra.mxu0 0.0
      %412 = vmatprep.subr.mxu0 0.0
      %413 = vmatpush2.msra.mxu0 0.0
      %414 = vmatprep.subr.mxu0 0.0
      %415 = vmatpush2.msra.mxu0 0.0
      %416 = vmatprep.subr.mxu0 0.0
      %417 = vmatpush2.msra.mxu0 0.0
      %418 = vmatprep.subr.mxu0 0.0
      %419 = vmatpush2.msra.mxu0 0.0
      %420 = vmatprep.subr.mxu0 0.0
      %421 = vmatpush2.msra.mxu0 0.0
      %422 = vmatprep.subr.mxu0 0.0
      %423 = vmatpush2.msra.mxu0 0.0
      %424 = vmatprep.subr.mxu0 0.0
      %425 = vmatpush2.msra.mxu0 0.0
      %426 = vmatprep.subr.mxu0 0.0
      %427 = vmatpush2.msra.mxu0 0.0
      %428 = vmatprep.subr.mxu0 0.0
      %429 = vmatpush2.msra.mxu0 0.0
      %430 = vmatprep.mubr.f32.mxu0 0.0
      %431 = vmatmul.mubr.f32.gmra.mxu0 %v341
      %v432 = vpop.f32.mrf.mxu0
      %v433 = vadd.f32 0.0, %v432
      %v434 = vpop.f32.mrf.mxu0
      %435 = vmatprep.mubr.f32.mxu0 0.0
      %436 = vmatmul.mubr.f32.gmra.mxu0 %v342
      %v437 = vpop.f32.mrf.mxu0
      %v438 = vadd.f32 0.0, %v437
      %v439 = vpop.f32.mrf.mxu0
      %440 = vmatprep.mubr.f32.mxu0 0.0
      %441 = vmatmul.mubr.f32.gmra.mxu0 %v343
      %v442 = vpop.f32.mrf.mxu0
      %v443 = vadd.f32 0.0, %v442
      %v444 = vpop.f32.mrf.mxu0
      %445 = vmatprep.mubr.f32.mxu0 0.0
      %446 = vmatmul.mubr.f32.gmra.mxu0 %v344
      %v447 = vpop.f32.mrf.mxu0
      %v448 = vadd.f32 0.0, %v447
      %v449 = vpop.f32.mrf.mxu0
      %450 = vmatprep.mubr.f32.mxu0 0.0
      %451 = vmatmul.mubr.f32.gmra.mxu0 %v345
      %v452 = vpop.f32.mrf.mxu0
      %v453 = vadd.f32 0.0, %v452
      %v454 = vpop.f32.mrf.mxu0
      %455 = vmatprep.mubr.f32.mxu0 0.0
      %456 = vmatmul.mubr.f32.gmra.mxu0 %v346
      %v457 = vpop.f32.mrf.mxu0
      %v458 = vadd.f32 0.0, %v457
      %v459 = vpop.f32.mrf.mxu0
      %460 = vmatprep.mubr.f32.mxu0 0.0
      %461 = vmatmul.mubr.f32.gmra.mxu0 %v347
      %v462 = vpop.f32.mrf.mxu0
      %v463 = vadd.f32 0.0, %v462
      %v464 = vpop.f32.mrf.mxu0
      %465 = vmatprep.mubr.f32.mxu0 0.0
      %466 = vmatmul.mubr.f32.gmra.mxu0 %v348
      %v467 = vpop.f32.mrf.mxu0
      %v468 = vadd.f32 0.0, %v467
      %v469 = vpop.f32.mrf.mxu0
      %470 = vdwg.mxu0
      %471 = vmatprep.subr.mxu0 0.0
      %472 = vmatpush1.msra.mxu0 %v340
      %473 = vmatprep.subr.mxu0 0.0
      %474 = vmatpush1.msra.mxu0 %v339
      %475 = vmatprep.subr.mxu0 0.0
      %476 = vmatpush1.msra.mxu0 %v338
      %477 = vmatprep.subr.mxu0 0.0
      %478 = vmatpush1.msra.mxu0 %v337
      %479 = vmatprep.subr.mxu0 0.0
      %480 = vmatpush1.msra.mxu0 %v336
      %481 = vmatprep.subr.mxu0 0.0
      %482 = vmatpush1.msra.mxu0 %v335
      %483 = vmatprep.subr.mxu0 0.0
      %484 = vmatpush1.msra.mxu0 %v334
      %485 = vmatprep.subr.mxu0 0.0
      %486 = vmatpush1.msra.mxu0 %v333
      %487 = vmatprep.subr.mxu0 0.0
      %488 = vmatpush1.msra.mxu0 %v332
      %489 = vmatprep.subr.mxu0 0.0
      %490 = vmatpush1.msra.mxu0 %v331
      %491 = vmatprep.subr.mxu0 0.0
      %492 = vmatpush1.msra.mxu0 %v330
      %493 = vmatprep.subr.mxu0 0.0
      %494 = vmatpush1.msra.mxu0 %v329
      %495 = vmatprep.subr.mxu0 0.0
      %496 = vmatpush1.msra.mxu0 %v328
      %497 = vmatprep.subr.mxu0 0.0
      %498 = vmatpush1.msra.mxu0 %v327
      %499 = vmatprep.subr.mxu0 0.0
      %500 = vmatpush1.msra.mxu0 %v326
      %501 = vmatprep.subr.mxu0 0.0
      %502 = vmatpush1.msra.mxu0 %v325
      %503 = vmatprep.subr.mxu0 0.0
      %504 = vmatpush2.msra.mxu0 0.0
      %505 = vmatprep.subr.mxu0 0.0
      %506 = vmatpush2.msra.mxu0 0.0
      %507 = vmatprep.subr.mxu0 0.0
      %508 = vmatpush2.msra.mxu0 0.0
      %509 = vmatprep.subr.mxu0 0.0
      %510 = vmatpush2.msra.mxu0 0.0
      %511 = vmatprep.subr.mxu0 0.0
      %512 = vmatpush2.msra.mxu0 0.0
      %513 = vmatprep.subr.mxu0 0.0
      %514 = vmatpush2.msra.mxu0 0.0
      %515 = vmatprep.subr.mxu0 0.0
      %516 = vmatpush2.msra.mxu0 0.0
      %517 = vmatprep.subr.mxu0 0.0
      %518 = vmatpush2.msra.mxu0 0.0
      %519 = vmatprep.subr.mxu0 0.0
      %520 = vmatpush2.msra.mxu0 0.0
      %521 = vmatprep.subr.mxu0 0.0
      %522 = vmatpush2.msra.mxu0 0.0
      %523 = vmatprep.subr.mxu0 0.0
      %524 = vmatpush2.msra.mxu0 0.0
      %525 = vmatprep.subr.mxu0 0.0
      %526 = vmatpush2.msra.mxu0 0.0
      %527 = vmatprep.subr.mxu0 0.0
      %528 = vmatpush2.msra.mxu0 0.0
      %529 = vmatprep.subr.mxu0 0.0
      %530 = vmatpush2.msra.mxu0 0.0
      %531 = vmatprep.subr.mxu0 0.0
      %532 = vmatpush2.msra.mxu0 0.0
      %533 = vmatprep.subr.mxu0 0.0
      %534 = vmatpush2.msra.mxu0 0.0
      %535 = vmatprep.mubr.f32.mxu0 0.0
      %536 = vmatmul.mubr.f32.gmra.mxu0 %v317
      %v537 = vpop.f32.mrf.mxu0
      %v538 = vadd.f32 %v433, %v537
      %v539 = vpop.f32.mrf.mxu0
      %540 = vmatprep.mubr.f32.mxu0 0.0
      %541 = vmatmul.mubr.f32.gmra.mxu0 %v318
      %v542 = vpop.f32.mrf.mxu0
      %v543 = vadd.f32 %v438, %v542
      %v544 = vpop.f32.mrf.mxu0
      %545 = vmatprep.mubr.f32.mxu0 0.0
      %546 = vmatmul.mubr.f32.gmra.mxu0 %v319
      %v547 = vpop.f32.mrf.mxu0
      %v548 = vadd.f32 %v443, %v547
      %v549 = vpop.f32.mrf.mxu0
      %550 = vmatprep.mubr.f32.mxu0 0.0
      %551 = vmatmul.mubr.f32.gmra.mxu0 %v320
      %v552 = vpop.f32.mrf.mxu0
      %v553 = vadd.f32 %v448, %v552
      %v554 = vpop.f32.mrf.mxu0
      %555 = vmatprep.mubr.f32.mxu0 0.0
      %556 = vmatmul.mubr.f32.gmra.mxu0 %v321
      %v557 = vpop.f32.mrf.mxu0
      %v558 = vadd.f32 %v453, %v557
      %v559 = vpop.f32.mrf.mxu0
      %560 = vmatprep.mubr.f32.mxu0 0.0
      %561 = vmatmul.mubr.f32.gmra.mxu0 %v322
      %v562 = vpop.f32.mrf.mxu0
      %v563 = vadd.f32 %v458, %v562
      %v564 = vpop.f32.mrf.mxu0
      %565 = vmatprep.mubr.f32.mxu0 0.0
      %566 = vmatmul.mubr.f32.gmra.mxu0 %v323
      %v567 = vpop.f32.mrf.mxu0
      %v568 = vadd.f32 %v463, %v567
      %v569 = vpop.f32.mrf.mxu0
      %570 = vmatprep.mubr.f32.mxu0 0.0
      %571 = vmatmul.mubr.f32.gmra.mxu0 %v324
      %v572 = vpop.f32.mrf.mxu0
      %v573 = vadd.f32 %v468, %v572
      %v574 = vpop.f32.mrf.mxu0
      %575 = vdwg.mxu0
      %v576 = vld [vmem:[#allocation2 + $0x2] sm:$0xff]
      %v577 = vld [vmem:[#allocation2 + $0x12] sm:$0xff]
      %v578 = vld [vmem:[#allocation2 + $0x22] sm:$0xff]
      %v579 = vld [vmem:[#allocation2 + $0x32] sm:$0xff]
      %v580 = vld [vmem:[#allocation2 + $0x42] sm:$0xff]
      %v581 = vld [vmem:[#allocation2 + $0x52] sm:$0xff]
      %v582 = vld [vmem:[#allocation2 + $0x62] sm:$0xff]
      %v583 = vld [vmem:[#allocation2 + $0x72] sm:$0xff]
      %s584 = scalar_lea.vmem %s1, 256
      %v585 = vld [vmem:[%s584] sm:$0xff]
      %v586 = vld [vmem:[%s584 + $0x8] sm:$0xff]
      %v587 = vld [vmem:[%s584 + $0x10] sm:$0xff]
      %v588 = vld [vmem:[%s584 + $0x18] sm:$0xff]
      %v589 = vld [vmem:[%s584 + $0x20] sm:$0xff]
      %v590 = vld [vmem:[%s584 + $0x28] sm:$0xff]
      %v591 = vld [vmem:[%s584 + $0x30] sm:$0xff]
      %v592 = vld [vmem:[%s584 + $0x38] sm:$0xff]
      %v593 = vld [vmem:[%s584 + $0x40] sm:$0xff]
      %v594 = vld [vmem:[%s584 + $0x48] sm:$0xff]
      %v595 = vld [vmem:[%s584 + $0x50] sm:$0xff]
      %v596 = vld [vmem:[%s584 + $0x58] sm:$0xff]
      %v597 = vld [vmem:[%s584 + $0x60] sm:$0xff]
      %v598 = vld [vmem:[%s584 + $0x68] sm:$0xff]
      %v599 = vld [vmem:[%s584 + $0x70] sm:$0xff]
      %v600 = vld [vmem:[%s584 + $0x78] sm:$0xff]
      %601 = vmatprep.subr.mxu0 0.0
      %602 = vmatpush1.msra.mxu0 %v600
      %603 = vmatprep.subr.mxu0 0.0
      %604 = vmatpush1.msra.mxu0 %v599
      %605 = vmatprep.subr.mxu0 0.0
      %606 = vmatpush1.msra.mxu0 %v598
      %607 = vmatprep.subr.mxu0 0.0
      %608 = vmatpush1.msra.mxu0 %v597
      %609 = vmatprep.subr.mxu0 0.0
      %610 = vmatpush1.msra.mxu0 %v596
      %611 = vmatprep.subr.mxu0 0.0
      %612 = vmatpush1.msra.mxu0 %v595
      %613 = vmatprep.subr.mxu0 0.0
      %614 = vmatpush1.msra.mxu0 %v594
      %615 = vmatprep.subr.mxu0 0.0
      %616 = vmatpush1.msra.mxu0 %v593
      %617 = vmatprep.subr.mxu0 0.0
      %618 = vmatpush1.msra.mxu0 %v592
      %619 = vmatprep.subr.mxu0 0.0
      %620 = vmatpush1.msra.mxu0 %v591
      %621 = vmatprep.subr.mxu0 0.0
      %622 = vmatpush1.msra.mxu0 %v590
      %623 = vmatprep.subr.mxu0 0.0
      %624 = vmatpush1.msra.mxu0 %v589
      %625 = vmatprep.subr.mxu0 0.0
      %626 = vmatpush1.msra.mxu0 %v588
      %627 = vmatprep.subr.mxu0 0.0
      %628 = vmatpush1.msra.mxu0 %v587
      %629 = vmatprep.subr.mxu0 0.0
      %630 = vmatpush1.msra.mxu0 %v586
      %631 = vmatprep.subr.mxu0 0.0
      %632 = vmatpush1.msra.mxu0 %v585
      %633 = vmatprep.subr.mxu0 0.0
      %634 = vmatpush2.msra.mxu0 0.0
      %635 = vmatprep.subr.mxu0 0.0
      %636 = vmatpush2.msra.mxu0 0.0
      %637 = vmatprep.subr.mxu0 0.0
      %638 = vmatpush2.msra.mxu0 0.0
      %639 = vmatprep.subr.mxu0 0.0
      %640 = vmatpush2.msra.mxu0 0.0
      %641 = vmatprep.subr.mxu0 0.0
      %642 = vmatpush2.msra.mxu0 0.0
      %643 = vmatprep.subr.mxu0 0.0
      %644 = vmatpush2.msra.mxu0 0.0
      %645 = vmatprep.subr.mxu0 0.0
      %646 = vmatpush2.msra.mxu0 0.0
      %647 = vmatprep.subr.mxu0 0.0
      %648 = vmatpush2.msra.mxu0 0.0
      %649 = vmatprep.subr.mxu0 0.0
      %650 = vmatpush2.msra.mxu0 0.0
      %651 = vmatprep.subr.mxu0 0.0
      %652 = vmatpush2.msra.mxu0 0.0
      %653 = vmatprep.subr.mxu0 0.0
      %654 = vmatpush2.msra.mxu0 0.0
      %655 = vmatprep.subr.mxu0 0.0
      %656 = vmatpush2.msra.mxu0 0.0
      %657 = vmatprep.subr.mxu0 0.0
      %658 = vmatpush2.msra.mxu0 0.0
      %659 = vmatprep.subr.mxu0 0.0
      %660 = vmatpush2.msra.mxu0 0.0
      %661 = vmatprep.subr.mxu0 0.0
      %662 = vmatpush2.msra.mxu0 0.0
      %663 = vmatprep.subr.mxu0 0.0
      %664 = vmatpush2.msra.mxu0 0.0
      %665 = vmatprep.mubr.f32.mxu0 0.0
      %666 = vmatmul.mubr.f32.gmra.mxu0 %v576
      %v667 = vpop.f32.mrf.mxu0
      %v668 = vadd.f32 0.0, %v667
      %v669 = vpop.f32.mrf.mxu0
      %670 = vmatprep.mubr.f32.mxu0 0.0
      %671 = vmatmul.mubr.f32.gmra.mxu0 %v577
      %v672 = vpop.f32.mrf.mxu0
      %v673 = vadd.f32 0.0, %v672
      %v674 = vpop.f32.mrf.mxu0
      %675 = vmatprep.mubr.f32.mxu0 0.0
      %676 = vmatmul.mubr.f32.gmra.mxu0 %v578
      %v677 = vpop.f32.mrf.mxu0
      %v678 = vadd.f32 0.0, %v677
      %v679 = vpop.f32.mrf.mxu0
      %680 = vmatprep.mubr.f32.mxu0 0.0
      %681 = vmatmul.mubr.f32.gmra.mxu0 %v579
      %v682 = vpop.f32.mrf.mxu0
      %v683 = vadd.f32 0.0, %v682
      %v684 = vpop.f32.mrf.mxu0
      %685 = vmatprep.mubr.f32.mxu0 0.0
      %686 = vmatmul.mubr.f32.gmra.mxu0 %v580
      %v687 = vpop.f32.mrf.mxu0
      %v688 = vadd.f32 0.0, %v687
      %v689 = vpop.f32.mrf.mxu0
      %690 = vmatprep.mubr.f32.mxu0 0.0
      %691 = vmatmul.mubr.f32.gmra.mxu0 %v581
      %v692 = vpop.f32.mrf.mxu0
      %v693 = vadd.f32 0.0, %v692
      %v694 = vpop.f32.mrf.mxu0
      %695 = vmatprep.mubr.f32.mxu0 0.0
      %696 = vmatmul.mubr.f32.gmra.mxu0 %v582
      %v697 = vpop.f32.mrf.mxu0
      %v698 = vadd.f32 0.0, %v697
      %v699 = vpop.f32.mrf.mxu0
      %700 = vmatprep.mubr.f32.mxu0 0.0
      %701 = vmatmul.mubr.f32.gmra.mxu0 %v583
      %v702 = vpop.f32.mrf.mxu0
      %v703 = vadd.f32 0.0, %v702
      %v704 = vpop.f32.mrf.mxu0
      %705 = vdwg.mxu0
      %v706 = vadd.f32 %v538, %v668
      %v707 = vadd.f32 %v543, %v673
      %v708 = vadd.f32 %v548, %v678
      %v709 = vadd.f32 %v553, %v683
      %v710 = vadd.f32 %v558, %v688
      %v711 = vadd.f32 %v563, %v693
      %v712 = vadd.f32 %v568, %v698
      %v713 = vadd.f32 %v573, %v703
      %v714 = vld [vmem:[%s308] sm:$0xff]
      %v715 = vld [vmem:[%s308 + $0x10] sm:$0xff]
      %v716 = vld [vmem:[%s308 + $0x20] sm:$0xff]
      %v717 = vld [vmem:[%s308 + $0x30] sm:$0xff]
      %v718 = vld [vmem:[%s308 + $0x40] sm:$0xff]
      %v719 = vld [vmem:[%s308 + $0x50] sm:$0xff]
      %v720 = vld [vmem:[%s308 + $0x60] sm:$0xff]
      %v721 = vld [vmem:[%s308 + $0x70] sm:$0xff]
      %s722 = scalar_lea.vmem %s1, 384
      %v723 = vld [vmem:[%s722] sm:$0xff]
      %v724 = vld [vmem:[%s722 + $0x8] sm:$0xff]
      %v725 = vld [vmem:[%s722 + $0x10] sm:$0xff]
      %v726 = vld [vmem:[%s722 + $0x18] sm:$0xff]
      %v727 = vld [vmem:[%s722 + $0x20] sm:$0xff]
      %v728 = vld [vmem:[%s722 + $0x28] sm:$0xff]
      %v729 = vld [vmem:[%s722 + $0x30] sm:$0xff]
      %v730 = vld [vmem:[%s722 + $0x38] sm:$0xff]
      %v731 = vld [vmem:[%s722 + $0x40] sm:$0xff]
      %v732 = vld [vmem:[%s722 + $0x48] sm:$0xff]
      %v733 = vld [vmem:[%s722 + $0x50] sm:$0xff]
      %v734 = vld [vmem:[%s722 + $0x58] sm:$0xff]
      %v735 = vld [vmem:[%s722 + $0x60] sm:$0xff]
      %v736 = vld [vmem:[%s722 + $0x68] sm:$0xff]
      %v737 = vld [vmem:[%s722 + $0x70] sm:$0xff]
      %v738 = vld [vmem:[%s722 + $0x78] sm:$0xff]
      %739 = vmatprep.subr.mxu0 0.0
      %740 = vmatpush1.msra.mxu0 %v738
      %741 = vmatprep.subr.mxu0 0.0
      %742 = vmatpush1.msra.mxu0 %v737
      %743 = vmatprep.subr.mxu0 0.0
      %744 = vmatpush1.msra.mxu0 %v736
      %745 = vmatprep.subr.mxu0 0.0
      %746 = vmatpush1.msra.mxu0 %v735
      %747 = vmatprep.subr.mxu0 0.0
      %748 = vmatpush1.msra.mxu0 %v734
      %749 = vmatprep.subr.mxu0 0.0
      %750 = vmatpush1.msra.mxu0 %v733
      %751 = vmatprep.subr.mxu0 0.0
      %752 = vmatpush1.msra.mxu0 %v732
      %753 = vmatprep.subr.mxu0 0.0
      %754 = vmatpush1.msra.mxu0 %v731
      %755 = vmatprep.subr.mxu0 0.0
      %756 = vmatpush1.msra.mxu0 %v730
      %757 = vmatprep.subr.mxu0 0.0
      %758 = vmatpush1.msra.mxu0 %v729
      %759 = vmatprep.subr.mxu0 0.0
      %760 = vmatpush1.msra.mxu0 %v728
      %761 = vmatprep.subr.mxu0 0.0
      %762 = vmatpush1.msra.mxu0 %v727
      %763 = vmatprep.subr.mxu0 0.0
      %764 = vmatpush1.msra.mxu0 %v726
      %765 = vmatprep.subr.mxu0 0.0
      %766 = vmatpush1.msra.mxu0 %v725
      %767 = vmatprep.subr.mxu0 0.0
      %768 = vmatpush1.msra.mxu0 %v724
      %769 = vmatprep.subr.mxu0 0.0
      %770 = vmatpush1.msra.mxu0 %v723
      %771 = vmatprep.subr.mxu0 0.0
      %772 = vmatpush2.msra.mxu0 0.0
      %773 = vmatprep.subr.mxu0 0.0
      %774 = vmatpush2.msra.mxu0 0.0
      %775 = vmatprep.subr.mxu0 0.0
      %776 = vmatpush2.msra.mxu0 0.0
      %777 = vmatprep.subr.mxu0 0.0
      %778 = vmatpush2.msra.mxu0 0.0
      %779 = vmatprep.subr.mxu0 0.0
      %780 = vmatpush2.msra.mxu0 0.0
      %781 = vmatprep.subr.mxu0 0.0
      %782 = vmatpush2.msra.mxu0 0.0
      %783 = vmatprep.subr.mxu0 0.0
      %784 = vmatpush2.msra.mxu0 0.0
      %785 = vmatprep.subr.mxu0 0.0
      %786 = vmatpush2.msra.mxu0 0.0
      %787 = vmatprep.subr.mxu0 0.0
      %788 = vmatpush2.msra.mxu0 0.0
      %789 = vmatprep.subr.mxu0 0.0
      %790 = vmatpush2.msra.mxu0 0.0
      %791 = vmatprep.subr.mxu0 0.0
      %792 = vmatpush2.msra.mxu0 0.0
      %793 = vmatprep.subr.mxu0 0.0
      %794 = vmatpush2.msra.mxu0 0.0
      %795 = vmatprep.subr.mxu0 0.0
      %796 = vmatpush2.msra.mxu0 0.0
      %797 = vmatprep.subr.mxu0 0.0
      %798 = vmatpush2.msra.mxu0 0.0
      %799 = vmatprep.subr.mxu0 0.0
      %800 = vmatpush2.msra.mxu0 0.0
      %801 = vmatprep.subr.mxu0 0.0
      %802 = vmatpush2.msra.mxu0 0.0
      %803 = vmatprep.mubr.f32.mxu0 0.0
      %804 = vmatmul.mubr.f32.gmra.mxu0 %v714
      %v805 = vpop.f32.mrf.mxu0
      %v806 = vadd.f32 0.0, %v805
      %v807 = vpop.f32.mrf.mxu0
      %808 = vmatprep.mubr.f32.mxu0 0.0
      %809 = vmatmul.mubr.f32.gmra.mxu0 %v715
      %v810 = vpop.f32.mrf.mxu0
      %v811 = vadd.f32 0.0, %v810
      %v812 = vpop.f32.mrf.mxu0
      %813 = vmatprep.mubr.f32.mxu0 0.0
      %814 = vmatmul.mubr.f32.gmra.mxu0 %v716
      %v815 = vpop.f32.mrf.mxu0
      %v816 = vadd.f32 0.0, %v815
      %v817 = vpop.f32.mrf.mxu0
      %818 = vmatprep.mubr.f32.mxu0 0.0
      %819 = vmatmul.mubr.f32.gmra.mxu0 %v717
      %v820 = vpop.f32.mrf.mxu0
      %v821 = vadd.f32 0.0, %v820
      %v822 = vpop.f32.mrf.mxu0
      %823 = vmatprep.mubr.f32.mxu0 0.0
      %824 = vmatmul.mubr.f32.gmra.mxu0 %v718
      %v825 = vpop.f32.mrf.mxu0
      %v826 = vadd.f32 0.0, %v825
      %v827 = vpop.f32.mrf.mxu0
      %828 = vmatprep.mubr.f32.mxu0 0.0
      %829 = vmatmul.mubr.f32.gmra.mxu0 %v719
      %v830 = vpop.f32.mrf.mxu0
      %v831 = vadd.f32 0.0, %v830
      %v832 = vpop.f32.mrf.mxu0
      %833 = vmatprep.mubr.f32.mxu0 0.0
      %834 = vmatmul.mubr.f32.gmra.mxu0 %v720
      %v835 = vpop.f32.mrf.mxu0
      %v836 = vadd.f32 0.0, %v835
      %v837 = vpop.f32.mrf.mxu0
      %838 = vmatprep.mubr.f32.mxu0 0.0
      %839 = vmatmul.mubr.f32.gmra.mxu0 %v721
      %v840 = vpop.f32.mrf.mxu0
      %v841 = vadd.f32 0.0, %v840
      %v842 = vpop.f32.mrf.mxu0
      %843 = vdwg.mxu0
      %v844 = vadd.f32 %v706, %v806
      %v845 = vadd.f32 %v707, %v811
      %v846 = vadd.f32 %v708, %v816
      %v847 = vadd.f32 %v709, %v821
      %v848 = vadd.f32 %v710, %v826
      %v849 = vadd.f32 %v711, %v831
      %v850 = vadd.f32 %v712, %v836
      %v851 = vadd.f32 %v713, %v841
      %v852 = vld [vmem:[%s308 + $0x1] sm:$0xff]
      %v853 = vld [vmem:[%s308 + $0x11] sm:$0xff]
      %v854 = vld [vmem:[%s308 + $0x21] sm:$0xff]
      %v855 = vld [vmem:[%s308 + $0x31] sm:$0xff]
      %v856 = vld [vmem:[%s308 + $0x41] sm:$0xff]
      %v857 = vld [vmem:[%s308 + $0x51] sm:$0xff]
      %v858 = vld [vmem:[%s308 + $0x61] sm:$0xff]
      %v859 = vld [vmem:[%s308 + $0x71] sm:$0xff]
      %s860 = scalar_lea.vmem %s1, 512
      %v861 = vld [vmem:[%s860] sm:$0xff]
      %v862 = vld [vmem:[%s860 + $0x8] sm:$0xff]
      %v863 = vld [vmem:[%s860 + $0x10] sm:$0xff]
      %v864 = vld [vmem:[%s860 + $0x18] sm:$0xff]
      %v865 = vld [vmem:[%s860 + $0x20] sm:$0xff]
      %v866 = vld [vmem:[%s860 + $0x28] sm:$0xff]
      %v867 = vld [vmem:[%s860 + $0x30] sm:$0xff]
      %v868 = vld [vmem:[%s860 + $0x38] sm:$0xff]
      %v869 = vld [vmem:[%s860 + $0x40] sm:$0xff]
      %v870 = vld [vmem:[%s860 + $0x48] sm:$0xff]
      %v871 = vld [vmem:[%s860 + $0x50] sm:$0xff]
      %v872 = vld [vmem:[%s860 + $0x58] sm:$0xff]
      %v873 = vld [vmem:[%s860 + $0x60] sm:$0xff]
      %v874 = vld [vmem:[%s860 + $0x68] sm:$0xff]
      %v875 = vld [vmem:[%s860 + $0x70] sm:$0xff]
      %v876 = vld [vmem:[%s860 + $0x78] sm:$0xff]
      %877 = vmatprep.subr.mxu0 0.0
      %878 = vmatpush1.msra.mxu0 %v876
      %879 = vmatprep.subr.mxu0 0.0
      %880 = vmatpush1.msra.mxu0 %v875
      %881 = vmatprep.subr.mxu0 0.0
      %882 = vmatpush1.msra.mxu0 %v874
      %883 = vmatprep.subr.mxu0 0.0
      %884 = vmatpush1.msra.mxu0 %v873
      %885 = vmatprep.subr.mxu0 0.0
      %886 = vmatpush1.msra.mxu0 %v872
      %887 = vmatprep.subr.mxu0 0.0
      %888 = vmatpush1.msra.mxu0 %v871
      %889 = vmatprep.subr.mxu0 0.0
      %890 = vmatpush1.msra.mxu0 %v870
      %891 = vmatprep.subr.mxu0 0.0
      %892 = vmatpush1.msra.mxu0 %v869
      %893 = vmatprep.subr.mxu0 0.0
      %894 = vmatpush1.msra.mxu0 %v868
      %895 = vmatprep.subr.mxu0 0.0
      %896 = vmatpush1.msra.mxu0 %v867
      %897 = vmatprep.subr.mxu0 0.0
      %898 = vmatpush1.msra.mxu0 %v866
      %899 = vmatprep.subr.mxu0 0.0
      %900 = vmatpush1.msra.mxu0 %v865
      %901 = vmatprep.subr.mxu0 0.0
      %902 = vmatpush1.msra.mxu0 %v864
      %903 = vmatprep.subr.mxu0 0.0
      %904 = vmatpush1.msra.mxu0 %v863
      %905 = vmatprep.subr.mxu0 0.0
      %906 = vmatpush1.msra.mxu0 %v862
      %907 = vmatprep.subr.mxu0 0.0
      %908 = vmatpush1.msra.mxu0 %v861
      %909 = vmatprep.subr.mxu0 0.0
      %910 = vmatpush2.msra.mxu0 0.0
      %911 = vmatprep.subr.mxu0 0.0
      %912 = vmatpush2.msra.mxu0 0.0
      %913 = vmatprep.subr.mxu0 0.0
      %914 = vmatpush2.msra.mxu0 0.0
      %915 = vmatprep.subr.mxu0 0.0
      %916 = vmatpush2.msra.mxu0 0.0
      %917 = vmatprep.subr.mxu0 0.0
      %918 = vmatpush2.msra.mxu0 0.0
      %919 = vmatprep.subr.mxu0 0.0
      %920 = vmatpush2.msra.mxu0 0.0
      %921 = vmatprep.subr.mxu0 0.0
      %922 = vmatpush2.msra.mxu0 0.0
      %923 = vmatprep.subr.mxu0 0.0
      %924 = vmatpush2.msra.mxu0 0.0
      %925 = vmatprep.subr.mxu0 0.0
      %926 = vmatpush2.msra.mxu0 0.0
      %927 = vmatprep.subr.mxu0 0.0
      %928 = vmatpush2.msra.mxu0 0.0
      %929 = vmatprep.subr.mxu0 0.0
      %930 = vmatpush2.msra.mxu0 0.0
      %931 = vmatprep.subr.mxu0 0.0
      %932 = vmatpush2.msra.mxu0 0.0
      %933 = vmatprep.subr.mxu0 0.0
      %934 = vmatpush2.msra.mxu0 0.0
      %935 = vmatprep.subr.mxu0 0.0
      %936 = vmatpush2.msra.mxu0 0.0
      %937 = vmatprep.subr.mxu0 0.0
      %938 = vmatpush2.msra.mxu0 0.0
      %939 = vmatprep.subr.mxu0 0.0
      %940 = vmatpush2.msra.mxu0 0.0
      %941 = vmatprep.mubr.f32.mxu0 0.0
      %942 = vmatmul.mubr.f32.gmra.mxu0 %v852
      %v943 = vpop.f32.mrf.mxu0
      %v944 = vadd.f32 0.0, %v943
      %v945 = vpop.f32.mrf.mxu0
      %946 = vmatprep.mubr.f32.mxu0 0.0
      %947 = vmatmul.mubr.f32.gmra.mxu0 %v853
      %v948 = vpop.f32.mrf.mxu0
      %v949 = vadd.f32 0.0, %v948
      %v950 = vpop.f32.mrf.mxu0
      %951 = vmatprep.mubr.f32.mxu0 0.0
      %952 = vmatmul.mubr.f32.gmra.mxu0 %v854
      %v953 = vpop.f32.mrf.mxu0
      %v954 = vadd.f32 0.0, %v953
      %v955 = vpop.f32.mrf.mxu0
      %956 = vmatprep.mubr.f32.mxu0 0.0
      %957 = vmatmul.mubr.f32.gmra.mxu0 %v855
      %v958 = vpop.f32.mrf.mxu0
      %v959 = vadd.f32 0.0, %v958
      %v960 = vpop.f32.mrf.mxu0
      %961 = vmatprep.mubr.f32.mxu0 0.0
      %962 = vmatmul.mubr.f32.gmra.mxu0 %v856
      %v963 = vpop.f32.mrf.mxu0
      %v964 = vadd.f32 0.0, %v963
      %v965 = vpop.f32.mrf.mxu0
      %966 = vmatprep.mubr.f32.mxu0 0.0
      %967 = vmatmul.mubr.f32.gmra.mxu0 %v857
      %v968 = vpop.f32.mrf.mxu0
      %v969 = vadd.f32 0.0, %v968
      %v970 = vpop.f32.mrf.mxu0
      %971 = vmatprep.mubr.f32.mxu0 0.0
      %972 = vmatmul.mubr.f32.gmra.mxu0 %v858
      %v973 = vpop.f32.mrf.mxu0
      %v974 = vadd.f32 0.0, %v973
      %v975 = vpop.f32.mrf.mxu0
      %976 = vmatprep.mubr.f32.mxu0 0.0
      %977 = vmatmul.mubr.f32.gmra.mxu0 %v859
      %v978 = vpop.f32.mrf.mxu0
      %v979 = vadd.f32 0.0, %v978
      %v980 = vpop.f32.mrf.mxu0
      %981 = vdwg.mxu0
      %v982 = vadd.f32 %v844, %v944
      %v983 = vadd.f32 %v845, %v949
      %v984 = vadd.f32 %v846, %v954
      %v985 = vadd.f32 %v847, %v959
      %v986 = vadd.f32 %v848, %v964
      %v987 = vadd.f32 %v849, %v969
      %v988 = vadd.f32 %v850, %v974
      %v989 = vadd.f32 %v851, %v979
      %v990 = vld [vmem:[%s308 + $0x2] sm:$0xff]
      %v991 = vld [vmem:[%s308 + $0x12] sm:$0xff]
      %v992 = vld [vmem:[%s308 + $0x22] sm:$0xff]
      %v993 = vld [vmem:[%s308 + $0x32] sm:$0xff]
      %v994 = vld [vmem:[%s308 + $0x42] sm:$0xff]
      %v995 = vld [vmem:[%s308 + $0x52] sm:$0xff]
      %v996 = vld [vmem:[%s308 + $0x62] sm:$0xff]
      %v997 = vld [vmem:[%s308 + $0x72] sm:$0xff]
      %s998 = scalar_lea.vmem %s1, 640
      %v999 = vld [vmem:[%s998] sm:$0xff]
      %v1000 = vld [vmem:[%s998 + $0x8] sm:$0xff]
      %v1001 = vld [vmem:[%s998 + $0x10] sm:$0xff]
      %v1002 = vld [vmem:[%s998 + $0x18] sm:$0xff]
      %v1003 = vld [vmem:[%s998 + $0x20] sm:$0xff]
      %v1004 = vld [vmem:[%s998 + $0x28] sm:$0xff]
      %v1005 = vld [vmem:[%s998 + $0x30] sm:$0xff]
      %v1006 = vld [vmem:[%s998 + $0x38] sm:$0xff]
      %v1007 = vld [vmem:[%s998 + $0x40] sm:$0xff]
      %v1008 = vld [vmem:[%s998 + $0x48] sm:$0xff]
      %v1009 = vld [vmem:[%s998 + $0x50] sm:$0xff]
      %v1010 = vld [vmem:[%s998 + $0x58] sm:$0xff]
      %v1011 = vld [vmem:[%s998 + $0x60] sm:$0xff]
      %v1012 = vld [vmem:[%s998 + $0x68] sm:$0xff]
      %v1013 = vld [vmem:[%s998 + $0x70] sm:$0xff]
      %v1014 = vld [vmem:[%s998 + $0x78] sm:$0xff]
      %1015 = vmatprep.subr.mxu0 0.0
      %1016 = vmatpush1.msra.mxu0 %v1014
      %1017 = vmatprep.subr.mxu0 0.0
      %1018 = vmatpush1.msra.mxu0 %v1013
      %1019 = vmatprep.subr.mxu0 0.0
      %1020 = vmatpush1.msra.mxu0 %v1012
      %1021 = vmatprep.subr.mxu0 0.0
      %1022 = vmatpush1.msra.mxu0 %v1011
      %1023 = vmatprep.subr.mxu0 0.0
      %1024 = vmatpush1.msra.mxu0 %v1010
      %1025 = vmatprep.subr.mxu0 0.0
      %1026 = vmatpush1.msra.mxu0 %v1009
      %1027 = vmatprep.subr.mxu0 0.0
      %1028 = vmatpush1.msra.mxu0 %v1008
      %1029 = vmatprep.subr.mxu0 0.0
      %1030 = vmatpush1.msra.mxu0 %v1007
      %1031 = vmatprep.subr.mxu0 0.0
      %1032 = vmatpush1.msra.mxu0 %v1006
      %1033 = vmatprep.subr.mxu0 0.0
      %1034 = vmatpush1.msra.mxu0 %v1005
      %1035 = vmatprep.subr.mxu0 0.0
      %1036 = vmatpush1.msra.mxu0 %v1004
      %1037 = vmatprep.subr.mxu0 0.0
      %1038 = vmatpush1.msra.mxu0 %v1003
      %1039 = vmatprep.subr.mxu0 0.0
      %1040 = vmatpush1.msra.mxu0 %v1002
      %1041 = vmatprep.subr.mxu0 0.0
      %1042 = vmatpush1.msra.mxu0 %v1001
      %1043 = vmatprep.subr.mxu0 0.0
      %1044 = vmatpush1.msra.mxu0 %v1000
      %1045 = vmatprep.subr.mxu0 0.0
      %1046 = vmatpush1.msra.mxu0 %v999
      %1047 = vmatprep.subr.mxu0 0.0
      %1048 = vmatpush2.msra.mxu0 0.0
      %1049 = vmatprep.subr.mxu0 0.0
      %1050 = vmatpush2.msra.mxu0 0.0
      %1051 = vmatprep.subr.mxu0 0.0
      %1052 = vmatpush2.msra.mxu0 0.0
      %1053 = vmatprep.subr.mxu0 0.0
      %1054 = vmatpush2.msra.mxu0 0.0
      %1055 = vmatprep.subr.mxu0 0.0
      %1056 = vmatpush2.msra.mxu0 0.0
      %1057 = vmatprep.subr.mxu0 0.0
      %1058 = vmatpush2.msra.mxu0 0.0
      %1059 = vmatprep.subr.mxu0 0.0
      %1060 = vmatpush2.msra.mxu0 0.0
      %1061 = vmatprep.subr.mxu0 0.0
      %1062 = vmatpush2.msra.mxu0 0.0
      %1063 = vmatprep.subr.mxu0 0.0
      %1064 = vmatpush2.msra.mxu0 0.0
      %1065 = vmatprep.subr.mxu0 0.0
      %1066 = vmatpush2.msra.mxu0 0.0
      %1067 = vmatprep.subr.mxu0 0.0
      %1068 = vmatpush2.msra.mxu0 0.0
      %1069 = vmatprep.subr.mxu0 0.0
      %1070 = vmatpush2.msra.mxu0 0.0
      %1071 = vmatprep.subr.mxu0 0.0
      %1072 = vmatpush2.msra.mxu0 0.0
      %1073 = vmatprep.subr.mxu0 0.0
      %1074 = vmatpush2.msra.mxu0 0.0
      %1075 = vmatprep.subr.mxu0 0.0
      %1076 = vmatpush2.msra.mxu0 0.0
      %1077 = vmatprep.subr.mxu0 0.0
      %1078 = vmatpush2.msra.mxu0 0.0
      %1079 = vmatprep.mubr.f32.mxu0 0.0
      %1080 = vmatmul.mubr.f32.gmra.mxu0 %v990
      %v1081 = vpop.f32.mrf.mxu0
      %v1082 = vadd.f32 0.0, %v1081
      %v1083 = vpop.f32.mrf.mxu0
      %1084 = vmatprep.mubr.f32.mxu0 0.0
      %1085 = vmatmul.mubr.f32.gmra.mxu0 %v991
      %v1086 = vpop.f32.mrf.mxu0
      %v1087 = vadd.f32 0.0, %v1086
      %v1088 = vpop.f32.mrf.mxu0
      %1089 = vmatprep.mubr.f32.mxu0 0.0
      %1090 = vmatmul.mubr.f32.gmra.mxu0 %v992
      %v1091 = vpop.f32.mrf.mxu0
      %v1092 = vadd.f32 0.0, %v1091
      %v1093 = vpop.f32.mrf.mxu0
      %1094 = vmatprep.mubr.f32.mxu0 0.0
      %1095 = vmatmul.mubr.f32.gmra.mxu0 %v993
      %v1096 = vpop.f32.mrf.mxu0
      %v1097 = vadd.f32 0.0, %v1096
      %v1098 = vpop.f32.mrf.mxu0
      %1099 = vmatprep.mubr.f32.mxu0 0.0
      %1100 = vmatmul.mubr.f32.gmra.mxu0 %v994
      %v1101 = vpop.f32.mrf.mxu0
      %v1102 = vadd.f32 0.0, %v1101
      %v1103 = vpop.f32.mrf.mxu0
      %1104 = vmatprep.mubr.f32.mxu0 0.0
      %1105 = vmatmul.mubr.f32.gmra.mxu0 %v995
      %v1106 = vpop.f32.mrf.mxu0
      %v1107 = vadd.f32 0.0, %v1106
      %v1108 = vpop.f32.mrf.mxu0
      %1109 = vmatprep.mubr.f32.mxu0 0.0
      %1110 = vmatmul.mubr.f32.gmra.mxu0 %v996
      %v1111 = vpop.f32.mrf.mxu0
      %v1112 = vadd.f32 0.0, %v1111
      %v1113 = vpop.f32.mrf.mxu0
      %1114 = vmatprep.mubr.f32.mxu0 0.0
      %1115 = vmatmul.mubr.f32.gmra.mxu0 %v997
      %v1116 = vpop.f32.mrf.mxu0
      %v1117 = vadd.f32 0.0, %v1116
      %v1118 = vpop.f32.mrf.mxu0
      %1119 = vdwg.mxu0
      %v1120 = vadd.f32 %v982, %v1082
      %v1121 = vadd.f32 %v983, %v1087
      %v1122 = vadd.f32 %v984, %v1092
      %v1123 = vadd.f32 %v985, %v1097
      %v1124 = vadd.f32 %v986, %v1102
      %v1125 = vadd.f32 %v987, %v1107
      %v1126 = vadd.f32 %v988, %v1112
      %v1127 = vadd.f32 %v989, %v1117
      %s1128 = scalar_lea.vmem [#allocation2], 32
      %v1129 = vld [vmem:[%s1128] sm:$0xff]
      %v1130 = vld [vmem:[%s1128 + $0x10] sm:$0xff]
      %v1131 = vld [vmem:[%s1128 + $0x20] sm:$0xff]
      %v1132 = vld [vmem:[%s1128 + $0x30] sm:$0xff]
      %v1133 = vld [vmem:[%s1128 + $0x40] sm:$0xff]
      %v1134 = vld [vmem:[%s1128 + $0x50] sm:$0xff]
      %v1135 = vld [vmem:[%s1128 + $0x60] sm:$0xff]
      %v1136 = vld [vmem:[%s1128 + $0x70] sm:$0xff]
      %s1137 = scalar_lea.vmem %s1, 768
      %v1138 = vld [vmem:[%s1137] sm:$0xff]
      %v1139 = vld [vmem:[%s1137 + $0x8] sm:$0xff]
      %v1140 = vld [vmem:[%s1137 + $0x10] sm:$0xff]
      %v1141 = vld [vmem:[%s1137 + $0x18] sm:$0xff]
      %v1142 = vld [vmem:[%s1137 + $0x20] sm:$0xff]
      %v1143 = vld [vmem:[%s1137 + $0x28] sm:$0xff]
      %v1144 = vld [vmem:[%s1137 + $0x30] sm:$0xff]
      %v1145 = vld [vmem:[%s1137 + $0x38] sm:$0xff]
      %v1146 = vld [vmem:[%s1137 + $0x40] sm:$0xff]
      %v1147 = vld [vmem:[%s1137 + $0x48] sm:$0xff]
      %v1148 = vld [vmem:[%s1137 + $0x50] sm:$0xff]
      %v1149 = vld [vmem:[%s1137 + $0x58] sm:$0xff]
      %v1150 = vld [vmem:[%s1137 + $0x60] sm:$0xff]
      %v1151 = vld [vmem:[%s1137 + $0x68] sm:$0xff]
      %v1152 = vld [vmem:[%s1137 + $0x70] sm:$0xff]
      %v1153 = vld [vmem:[%s1137 + $0x78] sm:$0xff]
      %1154 = vmatprep.subr.mxu0 0.0
      %1155 = vmatpush1.msra.mxu0 %v1153
      %1156 = vmatprep.subr.mxu0 0.0
      %1157 = vmatpush1.msra.mxu0 %v1152
      %1158 = vmatprep.subr.mxu0 0.0
      %1159 = vmatpush1.msra.mxu0 %v1151
      %1160 = vmatprep.subr.mxu0 0.0
      %1161 = vmatpush1.msra.mxu0 %v1150
      %1162 = vmatprep.subr.mxu0 0.0
      %1163 = vmatpush1.msra.mxu0 %v1149
      %1164 = vmatprep.subr.mxu0 0.0
      %1165 = vmatpush1.msra.mxu0 %v1148
      %1166 = vmatprep.subr.mxu0 0.0
      %1167 = vmatpush1.msra.mxu0 %v1147
      %1168 = vmatprep.subr.mxu0 0.0
      %1169 = vmatpush1.msra.mxu0 %v1146
      %1170 = vmatprep.subr.mxu0 0.0
      %1171 = vmatpush1.msra.mxu0 %v1145
      %1172 = vmatprep.subr.mxu0 0.0
      %1173 = vmatpush1.msra.mxu0 %v1144
      %1174 = vmatprep.subr.mxu0 0.0
      %1175 = vmatpush1.msra.mxu0 %v1143
      %1176 = vmatprep.subr.mxu0 0.0
      %1177 = vmatpush1.msra.mxu0 %v1142
      %1178 = vmatprep.subr.mxu0 0.0
      %1179 = vmatpush1.msra.mxu0 %v1141
      %1180 = vmatprep.subr.mxu0 0.0
      %1181 = vmatpush1.msra.mxu0 %v1140
      %1182 = vmatprep.subr.mxu0 0.0
      %1183 = vmatpush1.msra.mxu0 %v1139
      %1184 = vmatprep.subr.mxu0 0.0
      %1185 = vmatpush1.msra.mxu0 %v1138
      %1186 = vmatprep.subr.mxu0 0.0
      %1187 = vmatpush2.msra.mxu0 0.0
      %1188 = vmatprep.subr.mxu0 0.0
      %1189 = vmatpush2.msra.mxu0 0.0
      %1190 = vmatprep.subr.mxu0 0.0
      %1191 = vmatpush2.msra.mxu0 0.0
      %1192 = vmatprep.subr.mxu0 0.0
      %1193 = vmatpush2.msra.mxu0 0.0
      %1194 = vmatprep.subr.mxu0 0.0
      %1195 = vmatpush2.msra.mxu0 0.0
      %1196 = vmatprep.subr.mxu0 0.0
      %1197 = vmatpush2.msra.mxu0 0.0
      %1198 = vmatprep.subr.mxu0 0.0
      %1199 = vmatpush2.msra.mxu0 0.0
      %1200 = vmatprep.subr.mxu0 0.0
      %1201 = vmatpush2.msra.mxu0 0.0
      %1202 = vmatprep.subr.mxu0 0.0
      %1203 = vmatpush2.msra.mxu0 0.0
      %1204 = vmatprep.subr.mxu0 0.0
      %1205 = vmatpush2.msra.mxu0 0.0
      %1206 = vmatprep.subr.mxu0 0.0
      %1207 = vmatpush2.msra.mxu0 0.0
      %1208 = vmatprep.subr.mxu0 0.0
      %1209 = vmatpush2.msra.mxu0 0.0
      %1210 = vmatprep.subr.mxu0 0.0
      %1211 = vmatpush2.msra.mxu0 0.0
      %1212 = vmatprep.subr.mxu0 0.0
      %1213 = vmatpush2.msra.mxu0 0.0
      %1214 = vmatprep.subr.mxu0 0.0
      %1215 = vmatpush2.msra.mxu0 0.0
      %1216 = vmatprep.subr.mxu0 0.0
      %1217 = vmatpush2.msra.mxu0 0.0
      %1218 = vmatprep.mubr.f32.mxu0 0.0
      %1219 = vmatmul.mubr.f32.gmra.mxu0 %v1129
      %v1220 = vpop.f32.mrf.mxu0
      %v1221 = vadd.f32 0.0, %v1220
      %v1222 = vpop.f32.mrf.mxu0
      %1223 = vmatprep.mubr.f32.mxu0 0.0
      %1224 = vmatmul.mubr.f32.gmra.mxu0 %v1130
      %v1225 = vpop.f32.mrf.mxu0
      %v1226 = vadd.f32 0.0, %v1225
      %v1227 = vpop.f32.mrf.mxu0
      %1228 = vmatprep.mubr.f32.mxu0 0.0
      %1229 = vmatmul.mubr.f32.gmra.mxu0 %v1131
      %v1230 = vpop.f32.mrf.mxu0
      %v1231 = vadd.f32 0.0, %v1230
      %v1232 = vpop.f32.mrf.mxu0
      %1233 = vmatprep.mubr.f32.mxu0 0.0
      %1234 = vmatmul.mubr.f32.gmra.mxu0 %v1132
      %v1235 = vpop.f32.mrf.mxu0
      %v1236 = vadd.f32 0.0, %v1235
      %v1237 = vpop.f32.mrf.mxu0
      %1238 = vmatprep.mubr.f32.mxu0 0.0
      %1239 = vmatmul.mubr.f32.gmra.mxu0 %v1133
      %v1240 = vpop.f32.mrf.mxu0
      %v1241 = vadd.f32 0.0, %v1240
      %v1242 = vpop.f32.mrf.mxu0
      %1243 = vmatprep.mubr.f32.mxu0 0.0
      %1244 = vmatmul.mubr.f32.gmra.mxu0 %v1134
      %v1245 = vpop.f32.mrf.mxu0
      %v1246 = vadd.f32 0.0, %v1245
      %v1247 = vpop.f32.mrf.mxu0
      %1248 = vmatprep.mubr.f32.mxu0 0.0
      %1249 = vmatmul.mubr.f32.gmra.mxu0 %v1135
      %v1250 = vpop.f32.mrf.mxu0
      %v1251 = vadd.f32 0.0, %v1250
      %v1252 = vpop.f32.mrf.mxu0
      %1253 = vmatprep.mubr.f32.mxu0 0.0
      %1254 = vmatmul.mubr.f32.gmra.mxu0 %v1136
      %v1255 = vpop.f32.mrf.mxu0
      %v1256 = vadd.f32 0.0, %v1255
      %v1257 = vpop.f32.mrf.mxu0
      %1258 = vdwg.mxu0
      %v1259 = vadd.f32 %v1120, %v1221
      %v1260 = vadd.f32 %v1121, %v1226
      %v1261 = vadd.f32 %v1122, %v1231
      %v1262 = vadd.f32 %v1123, %v1236
      %v1263 = vadd.f32 %v1124, %v1241
      %v1264 = vadd.f32 %v1125, %v1246
      %v1265 = vadd.f32 %v1126, %v1251
      %v1266 = vadd.f32 %v1127, %v1256
      %v1267 = vld [vmem:[%s1128 + $0x1] sm:$0xff]
      %v1268 = vld [vmem:[%s1128 + $0x11] sm:$0xff]
      %v1269 = vld [vmem:[%s1128 + $0x21] sm:$0xff]
      %v1270 = vld [vmem:[%s1128 + $0x31] sm:$0xff]
      %v1271 = vld [vmem:[%s1128 + $0x41] sm:$0xff]
      %v1272 = vld [vmem:[%s1128 + $0x51] sm:$0xff]
      %v1273 = vld [vmem:[%s1128 + $0x61] sm:$0xff]
      %v1274 = vld [vmem:[%s1128 + $0x71] sm:$0xff]
      %s1275 = scalar_lea.vmem %s1, 896
      %v1276 = vld [vmem:[%s1275] sm:$0xff]
      %v1277 = vld [vmem:[%s1275 + $0x8] sm:$0xff]
      %v1278 = vld [vmem:[%s1275 + $0x10] sm:$0xff]
      %v1279 = vld [vmem:[%s1275 + $0x18] sm:$0xff]
      %v1280 = vld [vmem:[%s1275 + $0x20] sm:$0xff]
      %v1281 = vld [vmem:[%s1275 + $0x28] sm:$0xff]
      %v1282 = vld [vmem:[%s1275 + $0x30] sm:$0xff]
      %v1283 = vld [vmem:[%s1275 + $0x38] sm:$0xff]
      %v1284 = vld [vmem:[%s1275 + $0x40] sm:$0xff]
      %v1285 = vld [vmem:[%s1275 + $0x48] sm:$0xff]
      %v1286 = vld [vmem:[%s1275 + $0x50] sm:$0xff]
      %v1287 = vld [vmem:[%s1275 + $0x58] sm:$0xff]
      %v1288 = vld [vmem:[%s1275 + $0x60] sm:$0xff]
      %v1289 = vld [vmem:[%s1275 + $0x68] sm:$0xff]
      %v1290 = vld [vmem:[%s1275 + $0x70] sm:$0xff]
      %v1291 = vld [vmem:[%s1275 + $0x78] sm:$0xff]
      %1292 = vmatprep.subr.mxu0 0.0
      %1293 = vmatpush1.msra.mxu0 %v1291
      %1294 = vmatprep.subr.mxu0 0.0
      %1295 = vmatpush1.msra.mxu0 %v1290
      %1296 = vmatprep.subr.mxu0 0.0
      %1297 = vmatpush1.msra.mxu0 %v1289
      %1298 = vmatprep.subr.mxu0 0.0
      %1299 = vmatpush1.msra.mxu0 %v1288
      %1300 = vmatprep.subr.mxu0 0.0
      %1301 = vmatpush1.msra.mxu0 %v1287
      %1302 = vmatprep.subr.mxu0 0.0
      %1303 = vmatpush1.msra.mxu0 %v1286
      %1304 = vmatprep.subr.mxu0 0.0
      %1305 = vmatpush1.msra.mxu0 %v1285
      %1306 = vmatprep.subr.mxu0 0.0
      %1307 = vmatpush1.msra.mxu0 %v1284
      %1308 = vmatprep.subr.mxu0 0.0
      %1309 = vmatpush1.msra.mxu0 %v1283
      %1310 = vmatprep.subr.mxu0 0.0
      %1311 = vmatpush1.msra.mxu0 %v1282
      %1312 = vmatprep.subr.mxu0 0.0
      %1313 = vmatpush1.msra.mxu0 %v1281
      %1314 = vmatprep.subr.mxu0 0.0
      %1315 = vmatpush1.msra.mxu0 %v1280
      %1316 = vmatprep.subr.mxu0 0.0
      %1317 = vmatpush1.msra.mxu0 %v1279
      %1318 = vmatprep.subr.mxu0 0.0
      %1319 = vmatpush1.msra.mxu0 %v1278
      %1320 = vmatprep.subr.mxu0 0.0
      %1321 = vmatpush1.msra.mxu0 %v1277
      %1322 = vmatprep.subr.mxu0 0.0
      %1323 = vmatpush1.msra.mxu0 %v1276
      %1324 = vmatprep.subr.mxu0 0.0
      %1325 = vmatpush2.msra.mxu0 0.0
      %1326 = vmatprep.subr.mxu0 0.0
      %1327 = vmatpush2.msra.mxu0 0.0
      %1328 = vmatprep.subr.mxu0 0.0
      %1329 = vmatpush2.msra.mxu0 0.0
      %1330 = vmatprep.subr.mxu0 0.0
      %1331 = vmatpush2.msra.mxu0 0.0
      %1332 = vmatprep.subr.mxu0 0.0
      %1333 = vmatpush2.msra.mxu0 0.0
      %1334 = vmatprep.subr.mxu0 0.0
      %1335 = vmatpush2.msra.mxu0 0.0
      %1336 = vmatprep.subr.mxu0 0.0
      %1337 = vmatpush2.msra.mxu0 0.0
      %1338 = vmatprep.subr.mxu0 0.0
      %1339 = vmatpush2.msra.mxu0 0.0
      %1340 = vmatprep.subr.mxu0 0.0
      %1341 = vmatpush2.msra.mxu0 0.0
      %1342 = vmatprep.subr.mxu0 0.0
      %1343 = vmatpush2.msra.mxu0 0.0
      %1344 = vmatprep.subr.mxu0 0.0
      %1345 = vmatpush2.msra.mxu0 0.0
      %1346 = vmatprep.subr.mxu0 0.0
      %1347 = vmatpush2.msra.mxu0 0.0
      %1348 = vmatprep.subr.mxu0 0.0
      %1349 = vmatpush2.msra.mxu0 0.0
      %1350 = vmatprep.subr.mxu0 0.0
      %1351 = vmatpush2.msra.mxu0 0.0
      %1352 = vmatprep.subr.mxu0 0.0
      %1353 = vmatpush2.msra.mxu0 0.0
      %1354 = vmatprep.subr.mxu0 0.0
      %1355 = vmatpush2.msra.mxu0 0.0
      %1356 = vmatprep.mubr.f32.mxu0 0.0
      %1357 = vmatmul.mubr.f32.gmra.mxu0 %v1267
      %v1358 = vpop.f32.mrf.mxu0
      %v1359 = vadd.f32 0.0, %v1358
      %v1360 = vpop.f32.mrf.mxu0
      %1361 = vmatprep.mubr.f32.mxu0 0.0
      %1362 = vmatmul.mubr.f32.gmra.mxu0 %v1268
      %v1363 = vpop.f32.mrf.mxu0
      %v1364 = vadd.f32 0.0, %v1363
      %v1365 = vpop.f32.mrf.mxu0
      %1366 = vmatprep.mubr.f32.mxu0 0.0
      %1367 = vmatmul.mubr.f32.gmra.mxu0 %v1269
      %v1368 = vpop.f32.mrf.mxu0
      %v1369 = vadd.f32 0.0, %v1368
      %v1370 = vpop.f32.mrf.mxu0
      %1371 = vmatprep.mubr.f32.mxu0 0.0
      %1372 = vmatmul.mubr.f32.gmra.mxu0 %v1270
      %v1373 = vpop.f32.mrf.mxu0
      %v1374 = vadd.f32 0.0, %v1373
      %v1375 = vpop.f32.mrf.mxu0
      %1376 = vmatprep.mubr.f32.mxu0 0.0
      %1377 = vmatmul.mubr.f32.gmra.mxu0 %v1271
      %v1378 = vpop.f32.mrf.mxu0
      %v1379 = vadd.f32 0.0, %v1378
      %v1380 = vpop.f32.mrf.mxu0
      %1381 = vmatprep.mubr.f32.mxu0 0.0
      %1382 = vmatmul.mubr.f32.gmra.mxu0 %v1272
      %v1383 = vpop.f32.mrf.mxu0
      %v1384 = vadd.f32 0.0, %v1383
      %v1385 = vpop.f32.mrf.mxu0
      %1386 = vmatprep.mubr.f32.mxu0 0.0
      %1387 = vmatmul.mubr.f32.gmra.mxu0 %v1273
      %v1388 = vpop.f32.mrf.mxu0
      %v1389 = vadd.f32 0.0, %v1388
      %v1390 = vpop.f32.mrf.mxu0
      %1391 = vmatprep.mubr.f32.mxu0 0.0
      %1392 = vmatmul.mubr.f32.gmra.mxu0 %v1274
      %v1393 = vpop.f32.mrf.mxu0
      %v1394 = vadd.f32 0.0, %v1393
      %v1395 = vpop.f32.mrf.mxu0
      %1396 = vdwg.mxu0
      %v1397 = vadd.f32 %v1259, %v1359
      %v1398 = vadd.f32 %v1260, %v1364
      %v1399 = vadd.f32 %v1261, %v1369
      %v1400 = vadd.f32 %v1262, %v1374
      %v1401 = vadd.f32 %v1263, %v1379
      %v1402 = vadd.f32 %v1264, %v1384
      %v1403 = vadd.f32 %v1265, %v1389
      %v1404 = vadd.f32 %v1266, %v1394
      %v1405 = vld [vmem:[%s1128 + $0x2] sm:$0xff]
      %v1406 = vld [vmem:[%s1128 + $0x12] sm:$0xff]
      %v1407 = vld [vmem:[%s1128 + $0x22] sm:$0xff]
      %v1408 = vld [vmem:[%s1128 + $0x32] sm:$0xff]
      %v1409 = vld [vmem:[%s1128 + $0x42] sm:$0xff]
      %v1410 = vld [vmem:[%s1128 + $0x52] sm:$0xff]
      %v1411 = vld [vmem:[%s1128 + $0x62] sm:$0xff]
      %v1412 = vld [vmem:[%s1128 + $0x72] sm:$0xff]
      %s1413 = scalar_lea.vmem %s1, 1024
      %v1414 = vld [vmem:[%s1413] sm:$0xff]
      %v1415 = vld [vmem:[%s1413 + $0x8] sm:$0xff]
      %v1416 = vld [vmem:[%s1413 + $0x10] sm:$0xff]
      %v1417 = vld [vmem:[%s1413 + $0x18] sm:$0xff]
      %v1418 = vld [vmem:[%s1413 + $0x20] sm:$0xff]
      %v1419 = vld [vmem:[%s1413 + $0x28] sm:$0xff]
      %v1420 = vld [vmem:[%s1413 + $0x30] sm:$0xff]
      %v1421 = vld [vmem:[%s1413 + $0x38] sm:$0xff]
      %v1422 = vld [vmem:[%s1413 + $0x40] sm:$0xff]
      %v1423 = vld [vmem:[%s1413 + $0x48] sm:$0xff]
      %v1424 = vld [vmem:[%s1413 + $0x50] sm:$0xff]
      %v1425 = vld [vmem:[%s1413 + $0x58] sm:$0xff]
      %v1426 = vld [vmem:[%s1413 + $0x60] sm:$0xff]
      %v1427 = vld [vmem:[%s1413 + $0x68] sm:$0xff]
      %v1428 = vld [vmem:[%s1413 + $0x70] sm:$0xff]
      %v1429 = vld [vmem:[%s1413 + $0x78] sm:$0xff]
      %1430 = vmatprep.subr.mxu0 0.0
      %1431 = vmatpush1.msra.mxu0 %v1429
      %1432 = vmatprep.subr.mxu0 0.0
      %1433 = vmatpush1.msra.mxu0 %v1428
      %1434 = vmatprep.subr.mxu0 0.0
      %1435 = vmatpush1.msra.mxu0 %v1427
      %1436 = vmatprep.subr.mxu0 0.0
      %1437 = vmatpush1.msra.mxu0 %v1426
      %1438 = vmatprep.subr.mxu0 0.0
      %1439 = vmatpush1.msra.mxu0 %v1425
      %1440 = vmatprep.subr.mxu0 0.0
      %1441 = vmatpush1.msra.mxu0 %v1424
      %1442 = vmatprep.subr.mxu0 0.0
      %1443 = vmatpush1.msra.mxu0 %v1423
      %1444 = vmatprep.subr.mxu0 0.0
      %1445 = vmatpush1.msra.mxu0 %v1422
      %1446 = vmatprep.subr.mxu0 0.0
      %1447 = vmatpush1.msra.mxu0 %v1421
      %1448 = vmatprep.subr.mxu0 0.0
      %1449 = vmatpush1.msra.mxu0 %v1420
      %1450 = vmatprep.subr.mxu0 0.0
      %1451 = vmatpush1.msra.mxu0 %v1419
      %1452 = vmatprep.subr.mxu0 0.0
      %1453 = vmatpush1.msra.mxu0 %v1418
      %1454 = vmatprep.subr.mxu0 0.0
      %1455 = vmatpush1.msra.mxu0 %v1417
      %1456 = vmatprep.subr.mxu0 0.0
      %1457 = vmatpush1.msra.mxu0 %v1416
      %1458 = vmatprep.subr.mxu0 0.0
      %1459 = vmatpush1.msra.mxu0 %v1415
      %1460 = vmatprep.subr.mxu0 0.0
      %1461 = vmatpush1.msra.mxu0 %v1414
      %1462 = vmatprep.subr.mxu0 0.0
      %1463 = vmatpush2.msra.mxu0 0.0
      %1464 = vmatprep.subr.mxu0 0.0
      %1465 = vmatpush2.msra.mxu0 0.0
      %1466 = vmatprep.subr.mxu0 0.0
      %1467 = vmatpush2.msra.mxu0 0.0
      %1468 = vmatprep.subr.mxu0 0.0
      %1469 = vmatpush2.msra.mxu0 0.0
      %1470 = vmatprep.subr.mxu0 0.0
      %1471 = vmatpush2.msra.mxu0 0.0
      %1472 = vmatprep.subr.mxu0 0.0
      %1473 = vmatpush2.msra.mxu0 0.0
      %1474 = vmatprep.subr.mxu0 0.0
      %1475 = vmatpush2.msra.mxu0 0.0
      %1476 = vmatprep.subr.mxu0 0.0
      %1477 = vmatpush2.msra.mxu0 0.0
      %1478 = vmatprep.subr.mxu0 0.0
      %1479 = vmatpush2.msra.mxu0 0.0
      %1480 = vmatprep.subr.mxu0 0.0
      %1481 = vmatpush2.msra.mxu0 0.0
      %1482 = vmatprep.subr.mxu0 0.0
      %1483 = vmatpush2.msra.mxu0 0.0
      %1484 = vmatprep.subr.mxu0 0.0
      %1485 = vmatpush2.msra.mxu0 0.0
      %1486 = vmatprep.subr.mxu0 0.0
      %1487 = vmatpush2.msra.mxu0 0.0
      %1488 = vmatprep.subr.mxu0 0.0
      %1489 = vmatpush2.msra.mxu0 0.0
      %1490 = vmatprep.subr.mxu0 0.0
      %1491 = vmatpush2.msra.mxu0 0.0
      %1492 = vmatprep.subr.mxu0 0.0
      %1493 = vmatpush2.msra.mxu0 0.0
      %1494 = vmatprep.mubr.f32.mxu0 0.0
      %1495 = vmatmul.mubr.f32.gmra.mxu0 %v1405
      %v1496 = vpop.f32.mrf.mxu0
      %v1497 = vadd.f32 0.0, %v1496
      %v1498 = vpop.f32.mrf.mxu0
      %1499 = vmatprep.mubr.f32.mxu0 0.0
      %1500 = vmatmul.mubr.f32.gmra.mxu0 %v1406
      %v1501 = vpop.f32.mrf.mxu0
      %v1502 = vadd.f32 0.0, %v1501
      %v1503 = vpop.f32.mrf.mxu0
      %1504 = vmatprep.mubr.f32.mxu0 0.0
      %1505 = vmatmul.mubr.f32.gmra.mxu0 %v1407
      %v1506 = vpop.f32.mrf.mxu0
      %v1507 = vadd.f32 0.0, %v1506
      %v1508 = vpop.f32.mrf.mxu0
      %1509 = vmatprep.mubr.f32.mxu0 0.0
      %1510 = vmatmul.mubr.f32.gmra.mxu0 %v1408
      %v1511 = vpop.f32.mrf.mxu0
      %v1512 = vadd.f32 0.0, %v1511
      %v1513 = vpop.f32.mrf.mxu0
      %1514 = vmatprep.mubr.f32.mxu0 0.0
      %1515 = vmatmul.mubr.f32.gmra.mxu0 %v1409
      %v1516 = vpop.f32.mrf.mxu0
      %v1517 = vadd.f32 0.0, %v1516
      %v1518 = vpop.f32.mrf.mxu0
      %1519 = vmatprep.mubr.f32.mxu0 0.0
      %1520 = vmatmul.mubr.f32.gmra.mxu0 %v1410
      %v1521 = vpop.f32.mrf.mxu0
      %v1522 = vadd.f32 0.0, %v1521
      %v1523 = vpop.f32.mrf.mxu0
      %1524 = vmatprep.mubr.f32.mxu0 0.0
      %1525 = vmatmul.mubr.f32.gmra.mxu0 %v1411
      %v1526 = vpop.f32.mrf.mxu0
      %v1527 = vadd.f32 0.0, %v1526
      %v1528 = vpop.f32.mrf.mxu0
      %1529 = vmatprep.mubr.f32.mxu0 0.0
      %1530 = vmatmul.mubr.f32.gmra.mxu0 %v1412
      %v1531 = vpop.f32.mrf.mxu0
      %v1532 = vadd.f32 0.0, %v1531
      %v1533 = vpop.f32.mrf.mxu0
      %1534 = vdwg.mxu0
      %v1535 = vadd.f32 %v1397, %v1497
      %v1536 = vadd.f32 %v1398, %v1502
      %v1537 = vadd.f32 %v1399, %v1507
      %v1538 = vadd.f32 %v1400, %v1512
      %v1539 = vadd.f32 %v1401, %v1517
      %v1540 = vadd.f32 %v1402, %v1522
      %v1541 = vadd.f32 %v1403, %v1527
      %v1542 = vadd.f32 %v1404, %v1532
      %1543 = vst [vmem:[%s222] sm:$0xff] %v1535
      %1544 = vst [vmem:[%s222 + $0x8] sm:$0xff] %v1536
      %1545 = vst [vmem:[%s222 + $0x10] sm:$0xff] %v1537
      %1546 = vst [vmem:[%s222 + $0x18] sm:$0xff] %v1538
      %1547 = vst [vmem:[%s222 + $0x20] sm:$0xff] %v1539
      %1548 = vst [vmem:[%s222 + $0x28] sm:$0xff] %v1540
      %1549 = vst [vmem:[%s222 + $0x30] sm:$0xff] %v1541
      %1550 = vst [vmem:[%s222 + $0x38] sm:$0xff] %v1542
      %v1551 = vld [vmem:[%s5] sm:$0x1]
      %v1552 = vadd.f32 %v1535, %v1536
      %v1553 = vadd.f32 %v1552, %v1537
      %v1554 = vadd.f32 %v1553, %v1538
      %v1555 = vadd.f32 %v1554, %v1539
      %v1556 = vadd.f32 %v1555, %v1540
      %v1557 = vadd.f32 %v1556, %v1541
      %v1558 = vadd.f32 %v1557, %v1542
      %v1559 = vrot.slane %v1558, 4
      %v1560 = vadd.f32 %v1558, %v1559
      %v1561 = vrot.slane %v1560, 2
      %v1562 = vadd.f32 %v1560, %v1561
      %v1563 = vrot.slane %v1562, 1
      %v1564 = vadd.f32 %v1562, %v1563
      %v1565 = vadd.f32 %v1551, %v1564
      %1566 = vst [vmem:[%s5] sm:$0x1] %v1565
      %v1567 = vld [vmem:[%s5 + $0x1] sm:$0x1]
      %v1568 = vmul.f32 %v1535, %v1535
      %v1569 = vmul.f32 %v1536, %v1536
      %v1570 = vmul.f32 %v1537, %v1537
      %v1571 = vmul.f32 %v1538, %v1538
      %v1572 = vmul.f32 %v1539, %v1539
      %v1573 = vmul.f32 %v1540, %v1540
      %v1574 = vmul.f32 %v1541, %v1541
      %v1575 = vmul.f32 %v1542, %v1542
      %v1576 = vadd.f32 %v1568, %v1569
      %v1577 = vadd.f32 %v1576, %v1570
      %v1578 = vadd.f32 %v1577, %v1571
      %v1579 = vadd.f32 %v1578, %v1572
      %v1580 = vadd.f32 %v1579, %v1573
      %v1581 = vadd.f32 %v1580, %v1574
      %v1582 = vadd.f32 %v1581, %v1575
      %v1583 = vrot.slane %v1582, 4
      %v1584 = vadd.f32 %v1582, %v1583
      %v1585 = vrot.slane %v1584, 2
      %v1586 = vadd.f32 %v1584, %v1585
      %v1587 = vrot.slane %v1586, 1
      %v1588 = vadd.f32 %v1586, %v1587
      %v1589 = vadd.f32 %v1567, %v1588
      %1590 = vst [vmem:[%s5 + $0x1] sm:$0x1] %v1589
      %p1591 = scmp.lt.s32.totalorder %s17, 1
      %s1592 = scalar_select %p1591, %s17, 1
      %s1593 = smul.addr %s1592, 8
      %s1594 = smul.addr %s1593, 8
      %s1595 = scalar_lea.vmem %s4, %s1594
      // Predicated region
      $region41: #{_compute_block_impl.4} parent=35 // pred_check
        %p1596 = pneg %p124
      $region42: #{_compute_block_impl.4} parent=35 // pred_check_branch
        %1598 = sbr.rel (%p1596) target = $region44
      $region43: #{_compute_block_impl.4} parent=35 // pred_region
        _
      $region44: #{_compute_block_impl.4} parent=35 // pred_fallthru
        _
      // Predicated region
      $region45: #{_compute_block_impl.4} parent=35 // pred_check
        %p1599 = pneg %p145
      $region46: #{_compute_block_impl.4} parent=35 // pred_check_branch
        %1601 = sbr.rel (%p1599) target = $region48
      $region47: #{_compute_block_impl.4} parent=35 // pred_region
        _
      $region48: #{_compute_block_impl.4} parent=35 // pred_fallthru
        _
      // Predicated region
      $region49: #{_compute_block_impl.4} parent=35 // pred_check
        %p1602 = pneg %p145
      $region50: #{_compute_block_impl.4} parent=35 // pred_check_branch
        %1604 = sbr.rel (%p1602) target = $region52
      $region51: #{_compute_block_impl.4} parent=35 // pred_region
        _
      $region52: #{_compute_block_impl.4} parent=35 // pred_fallthru
        _
    $region36: #{_compute_block_impl.4} parent=5 // pred_fallthru
      _
    %p1605 = scmp.le.s32.totalorder 2, %s12
    // Predicated region
    $region53: #{_compute_block_impl.4} parent=5 // pred_check
      %p1606 = pneg %p1605
    $region54: #{_compute_block_impl.4} parent=5 // pred_check_branch
      %1608 = sbr.rel (%p1606) target = $region56
    $region55: #{_compute_block_impl.4} parent=5 // pred_region
      %s1609 = ssub.s32 %s12, 2
      // Predicated region
      $region57: #{_compute_block_impl.4} parent=55 // pred_check
        %p1610 = pneg %p130
      $region58: #{_compute_block_impl.4} parent=55 // pred_check_branch
        %1612 = sbr.rel (%p1610) target = $region60
      $region59: #{_compute_block_impl.4} parent=55 // pred_region
        %p1613 = scmp.lt.s32.totalorder %s18, 1
        %s1614 = scalar_select %p1613, %s18, 1
        %s1615 = smul.addr %s1614, 8
        %s1616 = smul.addr %s1615, 8
        %s1617 = scalar_lea.vmem %s4, %s1616
      $region60: #{_compute_block_impl.4} parent=55 // pred_fallthru
        _
    $region56: #{_compute_block_impl.4} parent=5 // pred_fallthru
      _
  $region6: #{_compute_block_impl.4} parent=0 // loop_footer
    %s16 = sadd.s32 1, %s12
  $region7: #{_compute_block_impl.4} parent=0 // loop_footer_branch
    %11 = sbr.rel target = $region3
  $region8: #{_compute_block_impl.4} parent=0 // loop_exit
    _

</llo_original>
